<compile_context>
chip_gen: v5e
topology: v5e:2x2
jax: 0.10.0
libtpu: 0.0.40
codegen_flags: <defaults>
</compile_context>

<pallas_src>
import functools
import math

import jax
import jax.numpy as jnp
from jax import lax
from jax.experimental import pallas as pl
from jax.experimental.pallas import tpu as pltpu

_LOG2E = 1.44269504089
_VMEM_LIMIT = 48 * 1024 * 1024   # below v7x's 64 MiB physical, above defaults


def _tile(dim, target):
    """Largest usable tile: full dim if small, otherwise the target cap."""
    t = dim if dim <= target else target
    # TODO(synk): ragged dims (not divisible by the tile) would need edge
    # masking (-inf for padded kv columns); not required for these shapes.
    assert dim % t == 0, f"dim {dim} not divisible by tile {t}"
    return t


# ----------------------------- tiled matmul ---------------------------------

def _matmul_kernel(x_ref, w_ref, o_ref, acc_ref):
    @pl.when(pl.program_id(2) == 0)
    def _():
        acc_ref[...] = jnp.zeros_like(acc_ref)

    acc_ref[...] += jnp.dot(x_ref[...], w_ref[...],
                            preferred_element_type=jnp.float32)

    @pl.when(pl.program_id(2) == pl.num_programs(2) - 1)
    def _():
        o_ref[...] = acc_ref[...].astype(o_ref.dtype)


def linear(x, w, out_dtype=None, tm=512, tn=512, tk=1024):
    """x: (M, K) @ w: (K, N) -> (M, N), fp32 accumulator, epilogue dtype cast."""
    M, K = x.shape
    K2, N = w.shape
    assert K == K2
    out_dtype = out_dtype or x.dtype
    tm, tn, tk = _tile(M, tm), _tile(N, tn), _tile(K, tk)
    return pl.pallas_call(
        _matmul_kernel,
        out_shape=jax.ShapeDtypeStruct((M, N), out_dtype),
        grid_spec=pltpu.PrefetchScalarGridSpec(
            num_scalar_prefetch=0,
            grid=(M // tm, N // tn, K // tk),
            in_specs=[pl.BlockSpec((tm, tk), lambda i, j, k: (i, k)),
                      pl.BlockSpec((tk, tn), lambda i, j, k: (k, j))],
            out_specs=pl.BlockSpec((tm, tn), lambda i, j, k: (i, j)),
            scratch_shapes=[pltpu.VMEM((tm, tn), jnp.float32)]),
        compiler_params=pltpu.CompilerParams(
            dimension_semantics=("parallel", "parallel", "arbitrary"),
            vmem_limit_bytes=_VMEM_LIMIT),
    )(x, w)


# ------------------------ standalone RoPE pass (Q|K slab) -------------------

def _rope_kernel(x_ref, cos_ref, sin_ref, o_ref):
    # Non-interleaved RoPE with pre-negated sin:
    #   rotate_half(x) * sin == roll(x, D/2) * sin_signed   (no iota/where).
    x = x_ref[0]                                           # (TS, D) bf16
    rot = pltpu.roll(x, shift=x.shape[-1] // 2, axis=1)    # XLU lane rotate
    o_ref[0] = x * cos_ref[...] + rot * sin_ref[...]


def rope_qk(qkv, cos, sin_signed, *, num_rope_heads, head_dim, ts=256):
    """Apply RoPE to the first `num_rope_heads` head-slices of qkv.

    qkv: (B, S, (H+2*KV)*D) bf16 -- only the Q|K columns are read/written.
    cos / sin_signed: (S, D) bf16, sin first half pre-negated.
    Returns the RoPE'd (B, S, (H+KV)*D) slab; V stays in the original qkv.
    """
    B, S, _ = qkv.shape
    D = head_dim
    ts = _tile(S, ts)
    return pl.pallas_call(
        _rope_kernel,
        out_shape=jax.ShapeDtypeStruct((B, S, num_rope_heads * D), qkv.dtype),
        grid_spec=pltpu.PrefetchScalarGridSpec(
            num_scalar_prefetch=0,
            grid=(B, S // ts, num_rope_heads),       # head axis innermost:
            in_specs=[                               # cos/sin blocks re-used
                pl.BlockSpec((1, ts, D), lambda b, si, h: (b, si, h)),
                pl.BlockSpec((ts, D), lambda b, si, h: (si, 0)),
                pl.BlockSpec((ts, D), lambda b, si, h: (si, 0))],
            out_specs=pl.BlockSpec((1, ts, D), lambda b, si, h: (b, si, h))),
        compiler_params=pltpu.CompilerParams(
            dimension_semantics=("parallel", "parallel", "parallel"),
            vmem_limit_bytes=_VMEM_LIMIT),
    )(qkv, cos, sin_signed)


# ------------------------ GQA-packed flash attention ------------------------

def _flash_kernel(q_ref, k_ref, v_ref, o_ref, q_sc, m_sc, l_sc, acc_sc, *,
                  scale, groups, head_dim):
    kv = pl.program_id(2)
    D = head_dim

    @pl.when(kv == 0)
    def _():
        m_sc[...] = jnp.full_like(m_sc, -jnp.inf)
        l_sc[...] = jnp.zeros_like(l_sc)
        acc_sc[...] = jnp.zeros_like(acc_sc)
        # q is already RoPE'd; scale*log2(e) applied once per q tile and cached
        # in VMEM for all kv steps (fp32 multiply, stored bf16).
        q = q_ref[0].astype(jnp.float32)                       # (TQ, groups*D)
        for g in range(groups):
            q_sc[g] = (q[:, g * D:(g + 1) * D] *
                       (scale * _LOG2E)).astype(q_sc.dtype)

    k_t = k_ref[0]                                             # (TKV, D) roped
    v_t = v_ref[0]                                             # (TKV, D)

    # One K/V tile is reused by all `groups` query heads of this kv-head.
    for g in range(groups):
        s = lax.dot_general(q_sc[g], k_t, (((1,), (1,)), ((), ())),
                            preferred_element_type=jnp.float32)   # (TQ, TKV)
        m_prev = m_sc[g]
        m_new = jnp.maximum(m_prev, s.max(axis=-1, keepdims=True))
        p = jnp.exp2(s - m_new)
        alpha = jnp.exp2(m_prev - m_new)
        l_sc[g] = l_sc[g] * alpha + p.sum(axis=-1, keepdims=True)
        acc_sc[g] = acc_sc[g] * alpha + jnp.dot(
            p.astype(v_t.dtype), v_t, preferred_element_type=jnp.float32)
        m_sc[g] = m_new

    @pl.when(kv == pl.num_programs(2) - 1)
    def _():
        for g in range(groups):
            inv_l = pl.reciprocal(l_sc[g], approx=True)
            o_ref[0, :, g * D:(g + 1) * D] = (acc_sc[g] * inv_l).astype(o_ref.dtype)


def flash_attention(qk_roped, qkv, scale, *, num_heads, num_kv_heads, head_dim,
                    out_dtype, tq=512, tkv=512):
    """Non-causal, unmasked GQA flash attention.

    qk_roped: (B, S, (H+KV)*D) bf16 -- RoPE'd Q then K, head-contiguous.
    qkv:      (B, S, (H+2KV)*D) bf16 -- V read from its tail columns.
    Output:   (B, S, H*D) `out_dtype`, written directly in the o_proj layout.
    """
    B, S, _ = qkv.shape
    H, KV, D = num_heads, num_kv_heads, head_dim
    assert H % KV == 0
    groups = H // KV
    tq = _tile(S, tq)
    tkv = _tile(S, tkv)
    grid = (B * KV, S // tq, S // tkv)
    kernel = functools.partial(_flash_kernel, scale=scale, groups=groups,
                               head_dim=D)

    # Last-dim block indices: Q heads of kv-head `kvh` are the contiguous
    # columns [kvh*groups*D, (kvh+1)*groups*D); K is at head H+kvh of the
    # roped slab; V is at head H+KV+kvh of the original fused QKV buffer.
    q_spec = pl.BlockSpec((1, tq, groups * D),
                          lambda bk, qi, ki: (bk // KV, qi, bk % KV))
    k_spec = pl.BlockSpec((1, tkv, D),
                          lambda bk, qi, ki: (bk // KV, ki, H + (bk % KV)))
    # TODO(synk): on v7x, if profiling shows exposed K/V DMA, add
    # pipeline_mode=pl.Buffered(3) to k_spec/v_spec.
    v_spec = pl.BlockSpec((1, tkv, D),
                          lambda bk, qi, ki: (bk // KV, ki, H + KV + (bk % KV)))
    o_spec = pl.BlockSpec((1, tq, groups * D),
                          lambda bk, qi, ki: (bk // KV, qi, bk % KV))

    return pl.pallas_call(
        kernel,
        out_shape=jax.ShapeDtypeStruct((B, S, H * D), out_dtype),
        grid_spec=pltpu.PrefetchScalarGridSpec(
            num_scalar_prefetch=0,
            grid=grid,
            in_specs=[q_spec, k_spec, v_spec],
            out_specs=o_spec,
            scratch_shapes=[pltpu.VMEM((groups, tq, D), qkv.dtype),     # q*scale
                            pltpu.VMEM((groups, tq, 1), jnp.float32),   # m
                            pltpu.VMEM((groups, tq, 1), jnp.float32),   # l
                            pltpu.VMEM((groups, tq, D), jnp.float32)]), # acc
        compiler_params=pltpu.CompilerParams(
            dimension_semantics=("parallel", "parallel", "arbitrary"),
            vmem_limit_bytes=_VMEM_LIMIT),
    )(qk_roped, qk_roped, qkv)


# ----------------------------- Module forward -------------------------------

def attention_forward(hidden_states, cos, sin, w_qkv, wo,
                      num_heads, num_kv_heads, head_dim,
                      *, flash_tq=512, flash_tkv=512):
    """Forward of the PyTorch `Attention` module.

    hidden_states: (B, S, hidden) fp32.
    cos, sin:      (S, D) RoPE tables (HF cat(freqs, freqs) convention; the
                   batch dim of position_embeddings is a pure broadcast).
    w_qkv:         (hidden, (H+2KV)*D) bf16 -- pre-concatenated, pre-cast
                   q/k/v projection weights (cached outside the hot path).
    wo:            (H*D, hidden) bf16 output projection weight.
    """
    # TODO(synk): attention_mask / past_key_value / cache_position are not
    # consumed (non-causal, unmasked, no KV cache) -- matches the reference
    # ninetoothed attention kernel's behaviour.
    B, S, hid = hidden_states.shape
    H, KV, D = num_heads, num_kv_heads, head_dim
    scaling = 1.0 / math.sqrt(D)                      # self.scaling
    # TODO(synk): PyTorch runs attention in float16; bf16 is the TPU-native
    # low-precision dtype, so bf16 is used for the whole attention path.
    attn_dtype = jnp.bfloat16

    # Fused QKV projection in bf16 (x read once; fp32 accumulate in-kernel).
    x2d = hidden_states.reshape(B * S, hid).astype(attn_dtype)
    qkv = linear(x2d, w_qkv, out_dtype=attn_dtype)    # (B*S, (H+2KV)*D)
    qkv = qkv.reshape(B, S, (H + 2 * KV) * D)         # free reshape, no copy

    # RoPE once over the contiguous Q|K slab (V untouched).  sin first half is
    # pre-negated so the kernel only does roll + 2 mul + add, all bf16.
    cos_b = cos.astype(attn_dtype)
    sin_signed = jnp.concatenate([-sin[:, :D // 2], sin[:, D // 2:]],
                                 axis=-1).astype(attn_dtype)
    qk_roped = rope_qk(qkv, cos_b, sin_signed,
                       num_rope_heads=H + KV, head_dim=D)

    # GQA flash attention straight from the (B, S, heads*D) layouts; bf16 out.
    o = flash_attention(qk_roped, qkv, scaling,
                        num_heads=H, num_kv_heads=KV, head_dim=D,
                        out_dtype=attn_dtype, tq=flash_tq, tkv=flash_tkv)

    # Output projection in bf16; cast back to the residual dtype in-kernel.
    attn_output = linear(o.reshape(B * S, H * D), wo,
                         out_dtype=hidden_states.dtype)
    return attn_output.reshape(B, S, hid), None


# --------------------------------- main --------------------------------------

if __name__ == "__main__":
    B, S = 2, 256
    num_heads, num_kv_heads, head_dim = 4, 2, 128
    hidden = num_heads * head_dim                     # 512

    key = jax.random.PRNGKey(0)
    k1, k2, k3, k4, k5 = jax.random.split(key, 5)
    std = 1.0 / math.sqrt(hidden)
    # Weights stored as (in, out); Llama-style projections have no bias.
    wq = jax.random.uniform(k1, (hidden, num_heads * head_dim), jnp.float32, -std, std)
    wk = jax.random.uniform(k2, (hidden, num_kv_heads * head_dim), jnp.float32, -std, std)
    wv = jax.random.uniform(k3, (hidden, num_kv_heads * head_dim), jnp.float32, -std, std)
    wo = jax.random.uniform(k4, (num_heads * head_dim, hidden), jnp.float32, -std, std)

    hidden_states = jax.random.normal(k5, (B, S, hidden), jnp.float32)

    # One-time parameter prep (cached across forwards in a real model):
    w_qkv = jnp.concatenate([wq, wk, wv], axis=1).astype(jnp.bfloat16)
    wo_b = wo.astype(jnp.bfloat16)

    # RoPE tables (HF convention: cat(freqs, freqs)); batch-invariant -> (S, D).
    inv_freq = 1.0 / (10000.0 ** (jnp.arange(0, head_dim, 2, dtype=jnp.float32) / head_dim))
    pos = jnp.arange(S, dtype=jnp.float32)
    freqs = pos[:, None] * inv_freq[None, :]
    emb = jnp.concatenate([freqs, freqs], axis=-1)    # (S, D)
    cos = jnp.cos(emb)
    sin = jnp.sin(emb)

    # Small flash tiles here so the test exercises the multi-q-tile /
    # multi-kv-step online-softmax path; defaults stay at 512 for real shapes.
    out, _ = attention_forward(hidden_states, cos, sin, w_qkv, wo_b,
                               num_heads, num_kv_heads, head_dim,
                               flash_tq=128, flash_tkv=128)
    out = jax.block_until_ready(out)

    assert out.shape == (B, S, hidden)
    assert bool(jnp.all(jnp.isfinite(out)))
    print("KERNEL_OK")
</pallas_src>

<mosaic_0001>
module attributes {stable_mosaic.version = 11 : i64} {
  func.func @_matmul_kernel(%arg0: i32, %arg1: i32, %arg2: i32, %arg3: memref<512x512xbf16, #tpu.memory_space<vmem>>, %arg4: memref<512x512xbf16, #tpu.memory_space<vmem>>, %arg5: memref<512x512xbf16, #tpu.memory_space<vmem>>, %arg6: memref<512x512xf32, #tpu.memory_space<vmem>>) attributes {dimension_semantics = [#tpu.dimension_semantics<parallel>, #tpu.dimension_semantics<parallel>, #tpu.dimension_semantics<arbitrary>], iteration_bounds = array<i64: 1, 2, 1>, scalar_prefetch = 0 : i64, scratch_operands = 1 : i64, tpu.core_type = #tpu.core_type<tc>, window_params = [{transform_indices = @transform_0, window_bounds = array<i64: 512, 512>}, {transform_indices = @transform_1, window_bounds = array<i64: 512, 512>}, {transform_indices = @transform_2, window_bounds = array<i64: 512, 512>}]} {
    %c0_i32 = arith.constant 0 : i32
    %0 = arith.cmpi eq, %arg2, %c0_i32 : i32
    %1 = arith.extui %0 : i1 to i32
    %c0_i32_0 = arith.constant 0 : i32
    %2 = arith.cmpi ne, %1, %c0_i32_0 : i32
    scf.if %2 {
      %cst_10 = arith.constant 0.000000e+00 : f32
      %12 = vector.broadcast %cst_10 : f32 to vector<512x512xf32>
      %c0_11 = arith.constant 0 : index
      %c0_12 = arith.constant 0 : index
      %13 = vector.load %arg6[%c0_11, %c0_12] : memref<512x512xf32, #tpu.memory_space<vmem>>, vector<512x512xf32>
      tpu.vector_store %arg6[%c0_11, %c0_12], %12 {strides = array<i32>} : memref<512x512xf32, #tpu.memory_space<vmem>>, vector<512x512xf32>,
    } else {
    }
    %c0 = arith.constant 0 : index
    %c0_1 = arith.constant 0 : index
    %3 = vector.load %arg6[%c0, %c0_1] : memref<512x512xf32, #tpu.memory_space<vmem>>, vector<512x512xf32>
    %c0_2 = arith.constant 0 : index
    %c0_3 = arith.constant 0 : index
    %4 = vector.load %arg3[%c0_2, %c0_3] : memref<512x512xbf16, #tpu.memory_space<vmem>>, vector<512x512xbf16>
    %c0_4 = arith.constant 0 : index
    %c0_5 = arith.constant 0 : index
    %5 = vector.load %arg4[%c0_4, %c0_5] : memref<512x512xbf16, #tpu.memory_space<vmem>>, vector<512x512xbf16>
    %cst = arith.constant dense<0.000000e+00> : vector<512x512xf32>
    %6 = tpu.matmul %4, %5, %cst {dimension_numbers = #tpu.dot_dimension_numbers<[1], [0], [0], [1], [0, 0, 1, 1], [], []>} : vector<512x512xbf16>, vector<512x512xbf16>, vector<512x512xf32> -> vector<512x512xf32>
    %7 = arith.addf %3, %6 : vector<512x512xf32>
    %c0_6 = arith.constant 0 : index
    %c0_7 = arith.constant 0 : index
    %8 = vector.load %arg6[%c0_6, %c0_7] : memref<512x512xf32, #tpu.memory_space<vmem>>, vector<512x512xf32>
    tpu.vector_store %arg6[%c0_6, %c0_7], %7 {strides = array<i32>} : memref<512x512xf32, #tpu.memory_space<vmem>>, vector<512x512xf32>,
    %c0_i32_8 = arith.constant 0 : i32
    %9 = arith.cmpi eq, %arg2, %c0_i32_8 : i32
    %10 = arith.extui %9 : i1 to i32
    %c0_i32_9 = arith.constant 0 : i32
    %11 = arith.cmpi ne, %10, %c0_i32_9 : i32
    scf.if %11 {
      %c0_10 = arith.constant 0 : index
      %c0_11 = arith.constant 0 : index
      %12 = vector.load %arg6[%c0_10, %c0_11] : memref<512x512xf32, #tpu.memory_space<vmem>>, vector<512x512xf32>
      %13 = arith.truncf %12 : vector<512x512xf32> to vector<512x512xbf16>
      %c0_12 = arith.constant 0 : index
      %c0_13 = arith.constant 0 : index
      %14 = vector.load %arg5[%c0_12, %c0_13] : memref<512x512xbf16, #tpu.memory_space<vmem>>, vector<512x512xbf16>
      tpu.vector_store %arg5[%c0_12, %c0_13], %13 {strides = array<i32>} : memref<512x512xbf16, #tpu.memory_space<vmem>>, vector<512x512xbf16>,
    } else {
    }
    return
  }
  func.func @transform_0(%arg0: i32, %arg1: i32, %arg2: i32) -> (i32, i32) {
    %c0_i32 = arith.constant 0 : i32
    return %arg0, %arg2 : i32, i32
  }
  func.func @transform_1(%arg0: i32, %arg1: i32, %arg2: i32) -> (i32, i32) {
    %c0_i32 = arith.constant 0 : i32
    return %arg2, %arg1 : i32, i32
  }
  func.func @transform_2(%arg0: i32, %arg1: i32, %arg2: i32) -> (i32, i32) {
    %c0_i32 = arith.constant 0 : i32
    return %arg0, %arg1 : i32, i32
  }
}

</mosaic_0001>

<llo_original>
// kernel: tpu_custom_call.1
$region0: #{tpu_custom_call.1}
  #allocation0 [shape = 'u32[]', space=smem, size = 0x4, offset = 0x4, fixed_abs, tag = 'smem constant byte address 0x4 - core index']
  #allocation1 [shape = 'u32[72,128]{1,0:T(1,128)}', space=vmem, size = 0x9000, scoped, tag = 'internal scratch']
  #allocation2 [shape = 'f32[512,512]{1,0:T(8,128)}', space=vmem, size = 0x100000, scoped, tag = 'scratch operand']
  %s0 = inlined_call_operand.hbm [shape: bf16[512,512], index: 0, kind: input, shape index: {}]
  %s1 = inlined_call_operand.hbm [shape: bf16[512,1024], index: 1, kind: input, shape index: {}]
  %s2 = inlined_call_operand.hbm [shape: bf16[512,1024], index: 2, kind: output, shape index: {}]
  %s3 = sld [smem:[#allocation0]]
  $region57: #{tpu_custom_call.1} parent=0
    _
  %s5 = ssub.s32 1, %s3
  %s6 = scalar_select 0, %s5, %s3
  $region1: #{tpu_custom_call.1} parent=0
    #allocation3 [shape = 'u8[524288]{0}', space=vmem, size = 0x80000, scoped, tag = 'input window, operand 0, single buffered']
    #allocation4 [shape = 's32[2]{0}', space=sflag, size = 0x8, scoped, tag = 'scoped memory for tpu_custom_call.1']
    #allocation5 [shape = 's32[2]{0}', space=sflag, size = 0x8, scoped, tag = 'scoped memory for tpu_custom_call.1']
    #allocation6 [shape = 'u8[1048576]{0}', space=vmem, size = 0x100000, scoped, tag = 'input window, operand 1']
    #allocation7 [shape = 's32[2]{0}', space=sflag, size = 0x8, scoped, tag = 'scoped memory for tpu_custom_call.1']
    #allocation8 [shape = 'u8[1048576]{0}', space=vmem, size = 0x100000, scoped, tag = 'output window, operand 0']
    %7 = vsyncpa [#allocation4], 0
    %8 = vsyncpa [#allocation7], 0
    %s9 = scalar_lea.sflag [#allocation7], 1
    %10 = vsyncpa %s9, 0
    %11 = vsyncpa [#allocation5], 0
    %s12 = scalar_lea.sflag [#allocation5], 1
    %13 = vsyncpa %s12, 0
    loop: start=0, step=1, limit=4
    $region2: #{tpu_custom_call.1} parent=1 // loop_pre_header
      _
    $region3: #{tpu_custom_call.1} parent=1 // loop_header
      %s15 = sphi 0, %s19
      %p16 = scmp.ge.s32.totalorder %s15, 4
      %s22 = sphi 0, %s41
      %s23 = sphi 0, %s37
      %s24 = sphi 0, %s33
      %s25 = sphi 0, %s22
      %s26 = sphi 0, %s23
      %s27 = sphi 0, %s24
      %s28 = sphi 0, %s25
      %s29 = sphi 0, %s26
      %s30 = sphi 0, %s27
      %s46 = sphi 0, %s48
      %s49 = sphi 0, %s46
      %s50 = sphi 0, %s49
      %s66 = sphi 0, %s50
      %s74 = sphi 0, %s76
      %s77 = sphi 0, %s74
      %s78 = sphi 0, %s77
      %s94 = sphi 0, %s78
      %s102 = sphi 0, %s104
      %s105 = sphi 0, %s102
      %s106 = sphi 0, %s105
      %s122 = sphi 0, %s106
    $region4: #{tpu_custom_call.1} parent=1 // loop_header_branch
      %18 = sbr.rel (%p16) target = $region8
    $region5: #{tpu_custom_call.1} parent=1 // loop_body
      %s20 = ssub.s32 %s15, 1
      %s21 = ssub.s32 %s15, 2
      %s31 = sadd.s32 1, %s24
      %p32 = scmp.ge.s32.totalorder %s31, 1
      %s33 = scalar_select %p32, 0, %s31
      %s34 = sadd.s32 1, %s23
      %s35 = scalar_select %p32, %s34, %s23
      %p36 = scmp.ge.s32.totalorder %s35, 2
      %s37 = scalar_select %p36, 0, %s35
      %s38 = sadd.s32 1, %s22
      %s39 = scalar_select %p36, %s38, %s22
      %p40 = scmp.ge.s32.totalorder %s39, 1
      %s41 = scalar_select %p40, 0, %s39
      %s42 = ssub.s32 %s22, %s41
      %s43 = ssub.s32 %s24, %s33
      %s44 = sor.u32 %s42, %s43
      %p45 = scmp.eq.s32.totalorder %s44, 0
      %s47 = sadd.s32 %s46, 1
      %s48 = scalar_select %p45, %s46, %s47
      %p51 = pneg %p45
      %p52 = scmp.eq.s32.totalorder %s15, 1
      %p53 = por %p51, %p52
      %p54 = scmp.ne.s32.totalorder %s46, %s49
      %p55 = scmp.eq.s32.totalorder %s15, 0
      %p56 = por %p54, %p55
      %p57 = scmp.ne.s32.totalorder %s46, %s49
      %p58 = scmp.eq.s32.totalorder %s20, 1
      %p59 = por %p57, %p58
      %p60 = scmp.ne.s32.totalorder %s49, %s50
      %p61 = scmp.eq.s32.totalorder %s20, 0
      %p62 = por %p60, %p61
      %p63 = scmp.ne.s32.totalorder %s49, %s50
      %p64 = scmp.eq.s32.totalorder %s21, 1
      %p65 = por %p63, %p64
      %p67 = scmp.ne.s32.totalorder %s50, %s66
      %p68 = scmp.eq.s32.totalorder %s21, 0
      %p69 = por %p67, %p68
      %s70 = ssub.s32 %s24, %s33
      %s71 = ssub.s32 %s23, %s37
      %s72 = sor.u32 %s70, %s71
      %p73 = scmp.eq.s32.totalorder %s72, 0
      %s75 = sadd.s32 %s74, 1
      %s76 = scalar_select %p73, %s74, %s75
      %p79 = pneg %p73
      %p80 = scmp.eq.s32.totalorder %s15, 1
      %p81 = por %p79, %p80
      %p82 = scmp.ne.s32.totalorder %s74, %s77
      %p83 = scmp.eq.s32.totalorder %s15, 0
      %p84 = por %p82, %p83
      %p85 = scmp.ne.s32.totalorder %s74, %s77
      %p86 = scmp.eq.s32.totalorder %s20, 1
      %p87 = por %p85, %p86
      %p88 = scmp.ne.s32.totalorder %s77, %s78
      %p89 = scmp.eq.s32.totalorder %s20, 0
      %p90 = por %p88, %p89
      %p91 = scmp.ne.s32.totalorder %s77, %s78
      %p92 = scmp.eq.s32.totalorder %s21, 1
      %p93 = por %p91, %p92
      %p95 = scmp.ne.s32.totalorder %s78, %s94
      %p96 = scmp.eq.s32.totalorder %s21, 0
      %p97 = por %p95, %p96
      %s98 = ssub.s32 %s22, %s41
      %s99 = ssub.s32 %s23, %s37
      %s100 = sor.u32 %s98, %s99
      %p101 = scmp.eq.s32.totalorder %s100, 0
      %s103 = sadd.s32 %s102, 1
      %s104 = scalar_select %p101, %s102, %s103
      %p107 = pneg %p101
      %p108 = scmp.eq.s32.totalorder %s15, 1
      %p109 = por %p107, %p108
      %p110 = scmp.ne.s32.totalorder %s102, %s105
      %p111 = scmp.eq.s32.totalorder %s15, 0
      %p112 = por %p110, %p111
      %p113 = scmp.ne.s32.totalorder %s102, %s105
      %p114 = scmp.eq.s32.totalorder %s20, 1
      %p115 = por %p113, %p114
      %p116 = scmp.ne.s32.totalorder %s105, %s106
      %p117 = scmp.eq.s32.totalorder %s20, 0
      %p118 = por %p116, %p117
      %p119 = scmp.ne.s32.totalorder %s105, %s106
      %p120 = scmp.eq.s32.totalorder %s21, 1
      %p121 = por %p119, %p120
      %p123 = scmp.ne.s32.totalorder %s106, %s122
      %p124 = scmp.eq.s32.totalorder %s21, 0
      %p125 = por %p123, %p124
      %p126 = scmp.le.s32.totalorder 1, %s15
      %p127 = scmp.lt.s32.totalorder %s15, 3
      %p128 = pnand %p126, %p127
      %p129 = pneg %p128
      // Predicated region
      $region9: #{tpu_custom_call.1} parent=5 // pred_check
        _
      $region10: #{tpu_custom_call.1} parent=5 // pred_check_branch
        %131 = sbr.rel (%p128) target = $region12
      $region11: #{tpu_custom_call.1} parent=5 // pred_region
        %s132 = ssub.s32 %s15, 1
        // Predicated region
        $region13: #{tpu_custom_call.1} parent=11 // pred_check
          %p133 = pneg %p62
        $region14: #{tpu_custom_call.1} parent=11 // pred_check_branch
          %135 = sbr.rel (%p133) target = $region16
        $region15: #{tpu_custom_call.1} parent=11 // pred_region
          %s136 = smul.u32 64, %s25
          %s137 = smul.u32 4, %s27
          %139 = vsyncadd [#allocation4], 0
          %s140 = smul.addr %s136, 4
          %s141 = sadd.s32 %s137, %s140
          %s142 = smul.addr %s141, 4
          %s143 = scalar_lea.hbm %s0, %s142
          %s144 = sshll.u32 %s143, 4
          %s145 = int_to_ptr.hbm [resolvable:$true] %s144
          %s146 = sshll.u32 [#allocation3], 4
          %s147 = int_to_ptr.vmem [resolvable:$true] %s146
          %152 = dma.hbm_to_vmem [thread:$0]  %s145, 16384, %s147, [#allocation4], 256, 256, 16
        $region16: #{tpu_custom_call.1} parent=11 // pred_fallthru
          _
      $region12: #{tpu_custom_call.1} parent=5 // pred_fallthru
        _
      %p153 = scmp.lt.s32.totalorder %s15, 2
      // Predicated region
      $region17: #{tpu_custom_call.1} parent=5 // pred_check
        %p154 = pneg %p153
      $region18: #{tpu_custom_call.1} parent=5 // pred_check_branch
        %156 = sbr.rel (%p154) target = $region20
      $region19: #{tpu_custom_call.1} parent=5 // pred_region
        // Predicated region
        $region21: #{tpu_custom_call.1} parent=19 // pred_check
          %p157 = pneg %p84
        $region22: #{tpu_custom_call.1} parent=19 // pred_check_branch
          %159 = sbr.rel (%p157) target = $region24
        $region23: #{tpu_custom_call.1} parent=19 // pred_region
          %s160 = sand.u32 %s74, 1
          %s161 = scalar_lea.sflag [#allocation7], %s160
          %s162 = sand.u32 %s74, 1
          %s163 = smul.addr %s162, 1024
          %s164 = scalar_lea.vmem [#allocation6], %s163
          %s165 = smul.u32 64, %s24
          %s166 = smul.u32 4, %s23
          %168 = vsyncadd %s161, 0
          %s169 = smul.addr %s165, 8
          %s170 = sadd.s32 %s166, %s169
          %s171 = smul.addr %s170, 4
          %s172 = scalar_lea.hbm %s1, %s171
          %s173 = sshll.u32 %s172, 4
          %s174 = int_to_ptr.hbm [resolvable:$true] %s173
          %s175 = sshll.u32 %s164, 4
          %s176 = int_to_ptr.vmem [resolvable:$true] %s175
          %181 = dma.hbm_to_vmem [thread:$0]  %s174, 16384, %s176, %s161, 512, 256, 16
        $region24: #{tpu_custom_call.1} parent=19 // pred_fallthru
          _
      $region20: #{tpu_custom_call.1} parent=5 // pred_fallthru
        _
      %p182 = scmp.le.s32.totalorder 1, %s15
      %p183 = scmp.lt.s32.totalorder %s15, 3
      %p184 = pnand %p182, %p183
      %p185 = pneg %p184
      // Predicated region
      $region25: #{tpu_custom_call.1} parent=5 // pred_check
        _
      $region26: #{tpu_custom_call.1} parent=5 // pred_check_branch
        %187 = sbr.rel (%p184) target = $region28
      $region27: #{tpu_custom_call.1} parent=5 // pred_region
        %s188 = ssub.s32 %s15, 1
        // Predicated region
        $region29: #{tpu_custom_call.1} parent=27 // pred_check
          %p189 = pneg %p62
        $region30: #{tpu_custom_call.1} parent=27 // pred_check_branch
          %191 = sbr.rel (%p189) target = $region32
        $region31: #{tpu_custom_call.1} parent=27 // pred_region
          %193 = dma.done [#allocation4], 16384
        $region32: #{tpu_custom_call.1} parent=27 // pred_fallthru
          _
        %s194 = sand.u32 %s77, 1
        %s195 = scalar_lea.sflag [#allocation7], %s194
        %s196 = sand.u32 %s77, 1
        %s197 = smul.addr %s196, 1024
        %s198 = scalar_lea.vmem [#allocation6], %s197
        // Predicated region
        $region33: #{tpu_custom_call.1} parent=27 // pred_check
          %p199 = pneg %p90
        $region34: #{tpu_custom_call.1} parent=27 // pred_check_branch
          %201 = sbr.rel (%p199) target = $region36
        $region35: #{tpu_custom_call.1} parent=27 // pred_region
          %203 = dma.done %s195, 16384
        $region36: #{tpu_custom_call.1} parent=27 // pred_fallthru
          _
        %p204 = pneg %p62
        %p205 = pneg %p59
        %s206 = sand.u32 %s77, 1
        %s207 = scalar_lea.sflag [#allocation7], %s206
        %s208 = sand.u32 %s77, 1
        %s209 = smul.addr %s208, 1024
        %s210 = scalar_lea.vmem [#allocation6], %s209
        %p211 = pneg %p90
        %p212 = pneg %p87
        %p213 = pneg %p118
        %p214 = pneg %p115
        %s215 = sand.u32 %s105, 1
        %s216 = scalar_lea.sflag [#allocation5], %s215
        %s217 = sand.u32 %s105, 1
        %s218 = smul.addr %s217, 1024
        %s219 = scalar_lea.vmem [#allocation8], %s218
        %s220 = smul.u32 64, %s25
        %s221 = smul.u32 4, %s27
        %s222 = smul.u32 64, %s27
        %s223 = smul.u32 4, %s26
        %s224 = smul.u32 64, %s25
        %s225 = smul.u32 4, %s26
        %p226 = scmp.eq.s32.totalorder %s27, 0
        // Predicated region
        $region37: #{tpu_custom_call.1} parent=27 // pred_check
          %p227 = pneg %p226
        $region38: #{tpu_custom_call.1} parent=27 // pred_check_branch
          %229 = sbr.rel (%p227) target = $region40
        $region39: #{tpu_custom_call.1} parent=27 // pred_region
          %230 = vst [vmem:[#allocation2] sm:$0xff] 0.0
          %231 = vst [vmem:[#allocation2 + $0x8] sm:$0xff] 0.0
          %232 = vst [vmem:[#allocation2 + $0x10] sm:$0xff] 0.0
          %233 = vst [vmem:[#allocation2 + $0x18] sm:$0xff] 0.0
          %234 = vst [vmem:[#allocation2 + $0x20] sm:$0xff] 0.0
          %235 = vst [vmem:[#allocation2 + $0x28] sm:$0xff] 0.0
          %236 = vst [vmem:[#allocation2 + $0x30] sm:$0xff] 0.0
          %237 = vst [vmem:[#allocation2 + $0x38] sm:$0xff] 0.0
          %238 = vst [vmem:[#allocation2 + $0x40] sm:$0xff] 0.0
          %239 = vst [vmem:[#allocation2 + $0x48] sm:$0xff] 0.0
          %240 = vst [vmem:[#allocation2 + $0x50] sm:$0xff] 0.0
          %241 = vst [vmem:[#allocation2 + $0x58] sm:$0xff] 0.0
          %242 = vst [vmem:[#allocation2 + $0x60] sm:$0xff] 0.0
          %243 = vst [vmem:[#allocation2 + $0x68] sm:$0xff] 0.0
          %244 = vst [vmem:[#allocation2 + $0x70] sm:$0xff] 0.0
          %245 = vst [vmem:[#allocation2 + $0x78] sm:$0xff] 0.0
          %246 = vst [vmem:[#allocation2 + $0x80] sm:$0xff] 0.0
          %247 = vst [vmem:[#allocation2 + $0x88] sm:$0xff] 0.0
          %248 = vst [vmem:[#allocation2 + $0x90] sm:$0xff] 0.0
          %249 = vst [vmem:[#allocation2 + $0x98] sm:$0xff] 0.0
          %250 = vst [vmem:[#allocation2 + $0xa0] sm:$0xff] 0.0
          %251 = vst [vmem:[#allocation2 + $0xa8] sm:$0xff] 0.0
          %252 = vst [vmem:[#allocation2 + $0xb0] sm:$0xff] 0.0
          %253 = vst [vmem:[#allocation2 + $0xb8] sm:$0xff] 0.0
          %254 = vst [vmem:[#allocation2 + $0xc0] sm:$0xff] 0.0
          %255 = vst [vmem:[#allocation2 + $0xc8] sm:$0xff] 0.0
          %256 = vst [vmem:[#allocation2 + $0xd0] sm:$0xff] 0.0
          %257 = vst [vmem:[#allocation2 + $0xd8] sm:$0xff] 0.0
          %258 = vst [vmem:[#allocation2 + $0xe0] sm:$0xff] 0.0
          %259 = vst [vmem:[#allocation2 + $0xe8] sm:$0xff] 0.0
          %260 = vst [vmem:[#allocation2 + $0xf0] sm:$0xff] 0.0
          %261 = vst [vmem:[#allocation2 + $0xf8] sm:$0xff] 0.0
          %262 = vst [vmem:[#allocation2 + $0x100] sm:$0xff] 0.0
          %263 = vst [vmem:[#allocation2 + $0x108] sm:$0xff] 0.0
          %264 = vst [vmem:[#allocation2 + $0x110] sm:$0xff] 0.0
          %265 = vst [vmem:[#allocation2 + $0x118] sm:$0xff] 0.0
          %266 = vst [vmem:[#allocation2 + $0x120] sm:$0xff] 0.0
          %267 = vst [vmem:[#allocation2 + $0x128] sm:$0xff] 0.0
          %268 = vst [vmem:[#allocation2 + $0x130] sm:$0xff] 0.0
          %269 = vst [vmem:[#allocation2 + $0x138] sm:$0xff] 0.0
          %270 = vst [vmem:[#allocation2 + $0x140] sm:$0xff] 0.0
          %271 = vst [vmem:[#allocation2 + $0x148] sm:$0xff] 0.0
          %272 = vst [vmem:[#allocation2 + $0x150] sm:$0xff] 0.0
          %273 = vst [vmem:[#allocation2 + $0x158] sm:$0xff] 0.0
          %274 = vst [vmem:[#allocation2 + $0x160] sm:$0xff] 0.0
          %275 = vst [vmem:[#allocation2 + $0x168] sm:$0xff] 0.0
          %276 = vst [vmem:[#allocation2 + $0x170] sm:$0xff] 0.0
          %277 = vst [vmem:[#allocation2 + $0x178] sm:$0xff] 0.0
          %278 = vst [vmem:[#allocation2 + $0x180] sm:$0xff] 0.0
          %279 = vst [vmem:[#allocation2 + $0x188] sm:$0xff] 0.0
          %280 = vst [vmem:[#allocation2 + $0x190] sm:$0xff] 0.0
          %281 = vst [vmem:[#allocation2 + $0x198] sm:$0xff] 0.0
          %282 = vst [vmem:[#allocation2 + $0x1a0] sm:$0xff] 0.0
          %283 = vst [vmem:[#allocation2 + $0x1a8] sm:$0xff] 0.0
          %284 = vst [vmem:[#allocation2 + $0x1b0] sm:$0xff] 0.0
          %285 = vst [vmem:[#allocation2 + $0x1b8] sm:$0xff] 0.0
          %286 = vst [vmem:[#allocation2 + $0x1c0] sm:$0xff] 0.0
          %287 = vst [vmem:[#allocation2 + $0x1c8] sm:$0xff] 0.0
          %288 = vst [vmem:[#allocation2 + $0x1d0] sm:$0xff] 0.0
          %289 = vst [vmem:[#allocation2 + $0x1d8] sm:$0xff] 0.0
          %290 = vst [vmem:[#allocation2 + $0x1e0] sm:$0xff] 0.0
          %291 = vst [vmem:[#allocation2 + $0x1e8] sm:$0xff] 0.0
          %292 = vst [vmem:[#allocation2 + $0x1f0] sm:$0xff] 0.0
          %293 = vst [vmem:[#allocation2 + $0x1f8] sm:$0xff] 0.0
          %294 = vst [vmem:[#allocation2 + $0x200] sm:$0xff] 0.0
          %295 = vst [vmem:[#allocation2 + $0x208] sm:$0xff] 0.0
          %296 = vst [vmem:[#allocation2 + $0x210] sm:$0xff] 0.0
          %297 = vst [vmem:[#allocation2 + $0x218] sm:$0xff] 0.0
          %298 = vst [vmem:[#allocation2 + $0x220] sm:$0xff] 0.0
          %299 = vst [vmem:[#allocation2 + $0x228] sm:$0xff] 0.0
          %300 = vst [vmem:[#allocation2 + $0x230] sm:$0xff] 0.0
          %301 = vst [vmem:[#allocation2 + $0x238] sm:$0xff] 0.0
          %302 = vst [vmem:[#allocation2 + $0x240] sm:$0xff] 0.0
          %303 = vst [vmem:[#allocation2 + $0x248] sm:$0xff] 0.0
          %304 = vst [vmem:[#allocation2 + $0x250] sm:$0xff] 0.0
          %305 = vst [vmem:[#allocation2 + $0x258] sm:$0xff] 0.0
          %306 = vst [vmem:[#allocation2 + $0x260] sm:$0xff] 0.0
          %307 = vst [vmem:[#allocation2 + $0x268] sm:$0xff] 0.0
          %308 = vst [vmem:[#allocation2 + $0x270] sm:$0xff] 0.0
          %309 = vst [vmem:[#allocation2 + $0x278] sm:$0xff] 0.0
          %310 = vst [vmem:[#allocation2 + $0x280] sm:$0xff] 0.0
          %311 = vst [vmem:[#allocation2 + $0x288] sm:$0xff] 0.0
          %312 = vst [vmem:[#allocation2 + $0x290] sm:$0xff] 0.0
          %313 = vst [vmem:[#allocation2 + $0x298] sm:$0xff] 0.0
          %314 = vst [vmem:[#allocation2 + $0x2a0] sm:$0xff] 0.0
          %315 = vst [vmem:[#allocation2 + $0x2a8] sm:$0xff] 0.0
          %316 = vst [vmem:[#allocation2 + $0x2b0] sm:$0xff] 0.0
          %317 = vst [vmem:[#allocation2 + $0x2b8] sm:$0xff] 0.0
          %318 = vst [vmem:[#allocation2 + $0x2c0] sm:$0xff] 0.0
          %319 = vst [vmem:[#allocation2 + $0x2c8] sm:$0xff] 0.0
          %320 = vst [vmem:[#allocation2 + $0x2d0] sm:$0xff] 0.0
          %321 = vst [vmem:[#allocation2 + $0x2d8] sm:$0xff] 0.0
          %322 = vst [vmem:[#allocation2 + $0x2e0] sm:$0xff] 0.0
          %323 = vst [vmem:[#allocation2 + $0x2e8] sm:$0xff] 0.0
          %324 = vst [vmem:[#allocation2 + $0x2f0] sm:$0xff] 0.0
          %325 = vst [vmem:[#allocation2 + $0x2f8] sm:$0xff] 0.0
          %326 = vst [vmem:[#allocation2 + $0x300] sm:$0xff] 0.0
          %327 = vst [vmem:[#allocation2 + $0x308] sm:$0xff] 0.0
          %328 = vst [vmem:[#allocation2 + $0x310] sm:$0xff] 0.0
          %329 = vst [vmem:[#allocation2 + $0x318] sm:$0xff] 0.0
          %330 = vst [vmem:[#allocation2 + $0x320] sm:$0xff] 0.0
          %331 = vst [vmem:[#allocation2 + $0x328] sm:$0xff] 0.0
          %332 = vst [vmem:[#allocation2 + $0x330] sm:$0xff] 0.0
          %333 = vst [vmem:[#allocation2 + $0x338] sm:$0xff] 0.0
          %334 = vst [vmem:[#allocation2 + $0x340] sm:$0xff] 0.0
          %335 = vst [vmem:[#allocation2 + $0x348] sm:$0xff] 0.0
          %336 = vst [vmem:[#allocation2 + $0x350] sm:$0xff] 0.0
          %337 = vst [vmem:[#allocation2 + $0x358] sm:$0xff] 0.0
          %338 = vst [vmem:[#allocation2 + $0x360] sm:$0xff] 0.0
          %339 = vst [vmem:[#allocation2 + $0x368] sm:$0xff] 0.0
          %340 = vst [vmem:[#allocation2 + $0x370] sm:$0xff] 0.0
          %341 = vst [vmem:[#allocation2 + $0x378] sm:$0xff] 0.0
          %342 = vst [vmem:[#allocation2 + $0x380] sm:$0xff] 0.0
          %343 = vst [vmem:[#allocation2 + $0x388] sm:$0xff] 0.0
          %344 = vst [vmem:[#allocation2 + $0x390] sm:$0xff] 0.0
          %345 = vst [vmem:[#allocation2 + $0x398] sm:$0xff] 0.0
          %346 = vst [vmem:[#allocation2 + $0x3a0] sm:$0xff] 0.0
          %347 = vst [vmem:[#allocation2 + $0x3a8] sm:$0xff] 0.0
          %348 = vst [vmem:[#allocation2 + $0x3b0] sm:$0xff] 0.0
          %349 = vst [vmem:[#allocation2 + $0x3b8] sm:$0xff] 0.0
          %350 = vst [vmem:[#allocation2 + $0x3c0] sm:$0xff] 0.0
          %351 = vst [vmem:[#allocation2 + $0x3c8] sm:$0xff] 0.0
          %352 = vst [vmem:[#allocation2 + $0x3d0] sm:$0xff] 0.0
          %353 = vst [vmem:[#allocation2 + $0x3d8] sm:$0xff] 0.0
          %354 = vst [vmem:[#allocation2 + $0x3e0] sm:$0xff] 0.0
          %355 = vst [vmem:[#allocation2 + $0x3e8] sm:$0xff] 0.0
          %356 = vst [vmem:[#allocation2 + $0x3f0] sm:$0xff] 0.0
          %357 = vst [vmem:[#allocation2 + $0x3f8] sm:$0xff] 0.0
          %358 = vst [vmem:[#allocation2 + $0x400] sm:$0xff] 0.0
          %359 = vst [vmem:[#allocation2 + $0x408] sm:$0xff] 0.0
          %360 = vst [vmem:[#allocation2 + $0x410] sm:$0xff] 0.0
          %361 = vst [vmem:[#allocation2 + $0x418] sm:$0xff] 0.0
          %362 = vst [vmem:[#allocation2 + $0x420] sm:$0xff] 0.0
          %363 = vst [vmem:[#allocation2 + $0x428] sm:$0xff] 0.0
          %364 = vst [vmem:[#allocation2 + $0x430] sm:$0xff] 0.0
          %365 = vst [vmem:[#allocation2 + $0x438] sm:$0xff] 0.0
          %366 = vst [vmem:[#allocation2 + $0x440] sm:$0xff] 0.0
          %367 = vst [vmem:[#allocation2 + $0x448] sm:$0xff] 0.0
          %368 = vst [vmem:[#allocation2 + $0x450] sm:$0xff] 0.0
          %369 = vst [vmem:[#allocation2 + $0x458] sm:$0xff] 0.0
          %370 = vst [vmem:[#allocation2 + $0x460] sm:$0xff] 0.0
          %371 = vst [vmem:[#allocation2 + $0x468] sm:$0xff] 0.0
          %372 = vst [vmem:[#allocation2 + $0x470] sm:$0xff] 0.0
          %373 = vst [vmem:[#allocation2 + $0x478] sm:$0xff] 0.0
          %374 = vst [vmem:[#allocation2 + $0x480] sm:$0xff] 0.0
          %375 = vst [vmem:[#allocation2 + $0x488] sm:$0xff] 0.0
          %376 = vst [vmem:[#allocation2 + $0x490] sm:$0xff] 0.0
          %377 = vst [vmem:[#allocation2 + $0x498] sm:$0xff] 0.0
          %378 = vst [vmem:[#allocation2 + $0x4a0] sm:$0xff] 0.0
          %379 = vst [vmem:[#allocation2 + $0x4a8] sm:$0xff] 0.0
          %380 = vst [vmem:[#allocation2 + $0x4b0] sm:$0xff] 0.0
          %381 = vst [vmem:[#allocation2 + $0x4b8] sm:$0xff] 0.0
          %382 = vst [vmem:[#allocation2 + $0x4c0] sm:$0xff] 0.0
          %383 = vst [vmem:[#allocation2 + $0x4c8] sm:$0xff] 0.0
          %384 = vst [vmem:[#allocation2 + $0x4d0] sm:$0xff] 0.0
          %385 = vst [vmem:[#allocation2 + $0x4d8] sm:$0xff] 0.0
          %386 = vst [vmem:[#allocation2 + $0x4e0] sm:$0xff] 0.0
          %387 = vst [vmem:[#allocation2 + $0x4e8] sm:$0xff] 0.0
          %388 = vst [vmem:[#allocation2 + $0x4f0] sm:$0xff] 0.0
          %389 = vst [vmem:[#allocation2 + $0x4f8] sm:$0xff] 0.0
          %390 = vst [vmem:[#allocation2 + $0x500] sm:$0xff] 0.0
          %391 = vst [vmem:[#allocation2 + $0x508] sm:$0xff] 0.0
          %392 = vst [vmem:[#allocation2 + $0x510] sm:$0xff] 0.0
          %393 = vst [vmem:[#allocation2 + $0x518] sm:$0xff] 0.0
          %394 = vst [vmem:[#allocation2 + $0x520] sm:$0xff] 0.0
          %395 = vst [vmem:[#allocation2 + $0x528] sm:$0xff] 0.0
          %396 = vst [vmem:[#allocation2 + $0x530] sm:$0xff] 0.0
          %397 = vst [vmem:[#allocation2 + $0x538] sm:$0xff] 0.0
          %398 = vst [vmem:[#allocation2 + $0x540] sm:$0xff] 0.0
          %399 = vst [vmem:[#allocation2 + $0x548] sm:$0xff] 0.0
          %400 = vst [vmem:[#allocation2 + $0x550] sm:$0xff] 0.0
          %401 = vst [vmem:[#allocation2 + $0x558] sm:$0xff] 0.0
          %402 = vst [vmem:[#allocation2 + $0x560] sm:$0xff] 0.0
          %403 = vst [vmem:[#allocation2 + $0x568] sm:$0xff] 0.0
          %404 = vst [vmem:[#allocation2 + $0x570] sm:$0xff] 0.0
          %405 = vst [vmem:[#allocation2 + $0x578] sm:$0xff] 0.0
          %406 = vst [vmem:[#allocation2 + $0x580] sm:$0xff] 0.0
          %407 = vst [vmem:[#allocation2 + $0x588] sm:$0xff] 0.0
          %408 = vst [vmem:[#allocation2 + $0x590] sm:$0xff] 0.0
          %409 = vst [vmem:[#allocation2 + $0x598] sm:$0xff] 0.0
          %410 = vst [vmem:[#allocation2 + $0x5a0] sm:$0xff] 0.0
          %411 = vst [vmem:[#allocation2 + $0x5a8] sm:$0xff] 0.0
          %412 = vst [vmem:[#allocation2 + $0x5b0] sm:$0xff] 0.0
          %413 = vst [vmem:[#allocation2 + $0x5b8] sm:$0xff] 0.0
          %414 = vst [vmem:[#allocation2 + $0x5c0] sm:$0xff] 0.0
          %415 = vst [vmem:[#allocation2 + $0x5c8] sm:$0xff] 0.0
          %416 = vst [vmem:[#allocation2 + $0x5d0] sm:$0xff] 0.0
          %417 = vst [vmem:[#allocation2 + $0x5d8] sm:$0xff] 0.0
          %418 = vst [vmem:[#allocation2 + $0x5e0] sm:$0xff] 0.0
          %419 = vst [vmem:[#allocation2 + $0x5e8] sm:$0xff] 0.0
          %420 = vst [vmem:[#allocation2 + $0x5f0] sm:$0xff] 0.0
          %421 = vst [vmem:[#allocation2 + $0x5f8] sm:$0xff] 0.0
          %422 = vst [vmem:[#allocation2 + $0x600] sm:$0xff] 0.0
          %423 = vst [vmem:[#allocation2 + $0x608] sm:$0xff] 0.0
          %424 = vst [vmem:[#allocation2 + $0x610] sm:$0xff] 0.0
          %425 = vst [vmem:[#allocation2 + $0x618] sm:$0xff] 0.0
          %426 = vst [vmem:[#allocation2 + $0x620] sm:$0xff] 0.0
          %427 = vst [vmem:[#allocation2 + $0x628] sm:$0xff] 0.0
          %428 = vst [vmem:[#allocation2 + $0x630] sm:$0xff] 0.0
          %429 = vst [vmem:[#allocation2 + $0x638] sm:$0xff] 0.0
          %430 = vst [vmem:[#allocation2 + $0x640] sm:$0xff] 0.0
          %431 = vst [vmem:[#allocation2 + $0x648] sm:$0xff] 0.0
          %432 = vst [vmem:[#allocation2 + $0x650] sm:$0xff] 0.0
          %433 = vst [vmem:[#allocation2 + $0x658] sm:$0xff] 0.0
          %434 = vst [vmem:[#allocation2 + $0x660] sm:$0xff] 0.0
          %435 = vst [vmem:[#allocation2 + $0x668] sm:$0xff] 0.0
          %436 = vst [vmem:[#allocation2 + $0x670] sm:$0xff] 0.0
          %437 = vst [vmem:[#allocation2 + $0x678] sm:$0xff] 0.0
          %438 = vst [vmem:[#allocation2 + $0x680] sm:$0xff] 0.0
          %439 = vst [vmem:[#allocation2 + $0x688] sm:$0xff] 0.0
          %440 = vst [vmem:[#allocation2 + $0x690] sm:$0xff] 0.0
          %441 = vst [vmem:[#allocation2 + $0x698] sm:$0xff] 0.0
          %442 = vst [vmem:[#allocation2 + $0x6a0] sm:$0xff] 0.0
          %443 = vst [vmem:[#allocation2 + $0x6a8] sm:$0xff] 0.0
          %444 = vst [vmem:[#allocation2 + $0x6b0] sm:$0xff] 0.0
          %445 = vst [vmem:[#allocation2 + $0x6b8] sm:$0xff] 0.0
          %446 = vst [vmem:[#allocation2 + $0x6c0] sm:$0xff] 0.0
          %447 = vst [vmem:[#allocation2 + $0x6c8] sm:$0xff] 0.0
          %448 = vst [vmem:[#allocation2 + $0x6d0] sm:$0xff] 0.0
          %449 = vst [vmem:[#allocation2 + $0x6d8] sm:$0xff] 0.0
          %450 = vst [vmem:[#allocation2 + $0x6e0] sm:$0xff] 0.0
          %451 = vst [vmem:[#allocation2 + $0x6e8] sm:$0xff] 0.0
          %452 = vst [vmem:[#allocation2 + $0x6f0] sm:$0xff] 0.0
          %453 = vst [vmem:[#allocation2 + $0x6f8] sm:$0xff] 0.0
          %454 = vst [vmem:[#allocation2 + $0x700] sm:$0xff] 0.0
          %455 = vst [vmem:[#allocation2 + $0x708] sm:$0xff] 0.0
          %456 = vst [vmem:[#allocation2 + $0x710] sm:$0xff] 0.0
          %457 = vst [vmem:[#allocation2 + $0x718] sm:$0xff] 0.0
          %458 = vst [vmem:[#allocation2 + $0x720] sm:$0xff] 0.0
          %459 = vst [vmem:[#allocation2 + $0x728] sm:$0xff] 0.0
          %460 = vst [vmem:[#allocation2 + $0x730] sm:$0xff] 0.0
          %461 = vst [vmem:[#allocation2 + $0x738] sm:$0xff] 0.0
          %462 = vst [vmem:[#allocation2 + $0x740] sm:$0xff] 0.0
          %463 = vst [vmem:[#allocation2 + $0x748] sm:$0xff] 0.0
          %464 = vst [vmem:[#allocation2 + $0x750] sm:$0xff] 0.0
          %465 = vst [vmem:[#allocation2 + $0x758] sm:$0xff] 0.0
          %466 = vst [vmem:[#allocation2 + $0x760] sm:$0xff] 0.0
          %467 = vst [vmem:[#allocation2 + $0x768] sm:$0xff] 0.0
          %468 = vst [vmem:[#allocation2 + $0x770] sm:$0xff] 0.0
          %469 = vst [vmem:[#allocation2 + $0x778] sm:$0xff] 0.0
          %470 = vst [vmem:[#allocation2 + $0x780] sm:$0xff] 0.0
          %471 = vst [vmem:[#allocation2 + $0x788] sm:$0xff] 0.0
          %472 = vst [vmem:[#allocation2 + $0x790] sm:$0xff] 0.0
          %473 = vst [vmem:[#allocation2 + $0x798] sm:$0xff] 0.0
          %474 = vst [vmem:[#allocation2 + $0x7a0] sm:$0xff] 0.0
          %475 = vst [vmem:[#allocation2 + $0x7a8] sm:$0xff] 0.0
          %476 = vst [vmem:[#allocation2 + $0x7b0] sm:$0xff] 0.0
          %477 = vst [vmem:[#allocation2 + $0x7b8] sm:$0xff] 0.0
          %478 = vst [vmem:[#allocation2 + $0x7c0] sm:$0xff] 0.0
          %479 = vst [vmem:[#allocation2 + $0x7c8] sm:$0xff] 0.0
          %480 = vst [vmem:[#allocation2 + $0x7d0] sm:$0xff] 0.0
          %481 = vst [vmem:[#allocation2 + $0x7d8] sm:$0xff] 0.0
          %482 = vst [vmem:[#allocation2 + $0x7e0] sm:$0xff] 0.0
          %483 = vst [vmem:[#allocation2 + $0x7e8] sm:$0xff] 0.0
          %484 = vst [vmem:[#allocation2 + $0x7f0] sm:$0xff] 0.0
          %485 = vst [vmem:[#allocation2 + $0x7f8] sm:$0xff] 0.0
        $region40: #{tpu_custom_call.1} parent=27 // pred_fallthru
          _
        %v486 = vld [vmem:[#allocation2] sm:$0xff]
        %v487 = vld [vmem:[#allocation2 + $0x8] sm:$0xff]
        %v488 = vld [vmem:[#allocation2 + $0x10] sm:$0xff]
        %v489 = vld [vmem:[#allocation2 + $0x18] sm:$0xff]
        %v490 = vld [vmem:[#allocation2 + $0x20] sm:$0xff]
        %v491 = vld [vmem:[#allocation2 + $0x28] sm:$0xff]
        %v492 = vld [vmem:[#allocation2 + $0x30] sm:$0xff]
        %v493 = vld [vmem:[#allocation2 + $0x38] sm:$0xff]
        %v494 = vld [vmem:[#allocation2 + $0x40] sm:$0xff]
        %v495 = vld [vmem:[#allocation2 + $0x48] sm:$0xff]
        %v496 = vld [vmem:[#allocation2 + $0x50] sm:$0xff]
        %v497 = vld [vmem:[#allocation2 + $0x58] sm:$0xff]
        %v498 = vld [vmem:[#allocation2 + $0x60] sm:$0xff]
        %v499 = vld [vmem:[#allocation2 + $0x68] sm:$0xff]
        %v500 = vld [vmem:[#allocation2 + $0x70] sm:$0xff]
        %v501 = vld [vmem:[#allocation2 + $0x78] sm:$0xff]
        %v502 = vld [vmem:[#allocation2 + $0x80] sm:$0xff]
        %v503 = vld [vmem:[#allocation2 + $0x88] sm:$0xff]
        %v504 = vld [vmem:[#allocation2 + $0x90] sm:$0xff]
        %v505 = vld [vmem:[#allocation2 + $0x98] sm:$0xff]
        %v506 = vld [vmem:[#allocation2 + $0xa0] sm:$0xff]
        %v507 = vld [vmem:[#allocation2 + $0xa8] sm:$0xff]
        %v508 = vld [vmem:[#allocation2 + $0xb0] sm:$0xff]
        %v509 = vld [vmem:[#allocation2 + $0xb8] sm:$0xff]
        %v510 = vld [vmem:[#allocation2 + $0xc0] sm:$0xff]
        %v511 = vld [vmem:[#allocation2 + $0xc8] sm:$0xff]
        %v512 = vld [vmem:[#allocation2 + $0xd0] sm:$0xff]
        %v513 = vld [vmem:[#allocation2 + $0xd8] sm:$0xff]
        %v514 = vld [vmem:[#allocation2 + $0xe0] sm:$0xff]
        %v515 = vld [vmem:[#allocation2 + $0xe8] sm:$0xff]
        %v516 = vld [vmem:[#allocation2 + $0xf0] sm:$0xff]
        %v517 = vld [vmem:[#allocation2 + $0xf8] sm:$0xff]
        %v518 = vld [vmem:[#allocation2 + $0x100] sm:$0xff]
        %v519 = vld [vmem:[#allocation2 + $0x108] sm:$0xff]
        %v520 = vld [vmem:[#allocation2 + $0x110] sm:$0xff]
        %v521 = vld [vmem:[#allocation2 + $0x118] sm:$0xff]
        %v522 = vld [vmem:[#allocation2 + $0x120] sm:$0xff]
        %v523 = vld [vmem:[#allocation2 + $0x128] sm:$0xff]
        %v524 = vld [vmem:[#allocation2 + $0x130] sm:$0xff]
        %v525 = vld [vmem:[#allocation2 + $0x138] sm:$0xff]
        %v526 = vld [vmem:[#allocation2 + $0x140] sm:$0xff]
        %v527 = vld [vmem:[#allocation2 + $0x148] sm:$0xff]
        %v528 = vld [vmem:[#allocation2 + $0x150] sm:$0xff]
        %v529 = vld [vmem:[#allocation2 + $0x158] sm:$0xff]
        %v530 = vld [vmem:[#allocation2 + $0x160] sm:$0xff]
        %v531 = vld [vmem:[#allocation2 + $0x168] sm:$0xff]
        %v532 = vld [vmem:[#allocation2 + $0x170] sm:$0xff]
        %v533 = vld [vmem:[#allocation2 + $0x178] sm:$0xff]
        %v534 = vld [vmem:[#allocation2 + $0x180] sm:$0xff]
        %v535 = vld [vmem:[#allocation2 + $0x188] sm:$0xff]
        %v536 = vld [vmem:[#allocation2 + $0x190] sm:$0xff]
        %v537 = vld [vmem:[#allocation2 + $0x198] sm:$0xff]
        %v538 = vld [vmem:[#allocation2 + $0x1a0] sm:$0xff]
        %v539 = vld [vmem:[#allocation2 + $0x1a8] sm:$0xff]
        %v540 = vld [vmem:[#allocation2 + $0x1b0] sm:$0xff]
        %v541 = vld [vmem:[#allocation2 + $0x1b8] sm:$0xff]
        %v542 = vld [vmem:[#allocation2 + $0x1c0] sm:$0xff]
        %v543 = vld [vmem:[#allocation2 + $0x1c8] sm:$0xff]
        %v544 = vld [vmem:[#allocation2 + $0x1d0] sm:$0xff]
        %v545 = vld [vmem:[#allocation2 + $0x1d8] sm:$0xff]
        %v546 = vld [vmem:[#allocation2 + $0x1e0] sm:$0xff]
        %v547 = vld [vmem:[#allocation2 + $0x1e8] sm:$0xff]
        %v548 = vld [vmem:[#allocation2 + $0x1f0] sm:$0xff]
        %v549 = vld [vmem:[#allocation2 + $0x1f8] sm:$0xff]
        %v550 = vld [vmem:[#allocation2 + $0x200] sm:$0xff]
        %v551 = vld [vmem:[#allocation2 + $0x208] sm:$0xff]
        %v552 = vld [vmem:[#allocation2 + $0x210] sm:$0xff]
        %v553 = vld [vmem:[#allocation2 + $0x218] sm:$0xff]
        %v554 = vld [vmem:[#allocation2 + $0x220] sm:$0xff]
        %v555 = vld [vmem:[#allocation2 + $0x228] sm:$0xff]
        %v556 = vld [vmem:[#allocation2 + $0x230] sm:$0xff]
        %v557 = vld [vmem:[#allocation2 + $0x238] sm:$0xff]
        %v558 = vld [vmem:[#allocation2 + $0x240] sm:$0xff]
        %v559 = vld [vmem:[#allocation2 + $0x248] sm:$0xff]
        %v560 = vld [vmem:[#allocation2 + $0x250] sm:$0xff]
        %v561 = vld [vmem:[#allocation2 + $0x258] sm:$0xff]
        %v562 = vld [vmem:[#allocation2 + $0x260] sm:$0xff]
        %v563 = vld [vmem:[#allocation2 + $0x268] sm:$0xff]
        %v564 = vld [vmem:[#allocation2 + $0x270] sm:$0xff]
        %v565 = vld [vmem:[#allocation2 + $0x278] sm:$0xff]
        %v566 = vld [vmem:[#allocation2 + $0x280] sm:$0xff]
        %v567 = vld [vmem:[#allocation2 + $0x288] sm:$0xff]
        %v568 = vld [vmem:[#allocation2 + $0x290] sm:$0xff]
        %v569 = vld [vmem:[#allocation2 + $0x298] sm:$0xff]
        %v570 = vld [vmem:[#allocation2 + $0x2a0] sm:$0xff]
        %v571 = vld [vmem:[#allocation2 + $0x2a8] sm:$0xff]
        %v572 = vld [vmem:[#allocation2 + $0x2b0] sm:$0xff]
        %v573 = vld [vmem:[#allocation2 + $0x2b8] sm:$0xff]
        %v574 = vld [vmem:[#allocation2 + $0x2c0] sm:$0xff]
        %v575 = vld [vmem:[#allocation2 + $0x2c8] sm:$0xff]
        %v576 = vld [vmem:[#allocation2 + $0x2d0] sm:$0xff]
        %v577 = vld [vmem:[#allocation2 + $0x2d8] sm:$0xff]
        %v578 = vld [vmem:[#allocation2 + $0x2e0] sm:$0xff]
        %v579 = vld [vmem:[#allocation2 + $0x2e8] sm:$0xff]
        %v580 = vld [vmem:[#allocation2 + $0x2f0] sm:$0xff]
        %v581 = vld [vmem:[#allocation2 + $0x2f8] sm:$0xff]
        %v582 = vld [vmem:[#allocation2 + $0x300] sm:$0xff]
        %v583 = vld [vmem:[#allocation2 + $0x308] sm:$0xff]
        %v584 = vld [vmem:[#allocation2 + $0x310] sm:$0xff]
        %v585 = vld [vmem:[#allocation2 + $0x318] sm:$0xff]
        %v586 = vld [vmem:[#allocation2 + $0x320] sm:$0xff]
        %v587 = vld [vmem:[#allocation2 + $0x328] sm:$0xff]
        %v588 = vld [vmem:[#allocation2 + $0x330] sm:$0xff]
        %v589 = vld [vmem:[#allocation2 + $0x338] sm:$0xff]
        %v590 = vld [vmem:[#allocation2 + $0x340] sm:$0xff]
        %v591 = vld [vmem:[#allocation2 + $0x348] sm:$0xff]
        %v592 = vld [vmem:[#allocation2 + $0x350] sm:$0xff]
        %v593 = vld [vmem:[#allocation2 + $0x358] sm:$0xff]
        %v594 = vld [vmem:[#allocation2 + $0x360] sm:$0xff]
        %v595 = vld [vmem:[#allocation2 + $0x368] sm:$0xff]
        %v596 = vld [vmem:[#allocation2 + $0x370] sm:$0xff]
        %v597 = vld [vmem:[#allocation2 + $0x378] sm:$0xff]
        %v598 = vld [vmem:[#allocation2 + $0x380] sm:$0xff]
        %v599 = vld [vmem:[#allocation2 + $0x388] sm:$0xff]
        %v600 = vld [vmem:[#allocation2 + $0x390] sm:$0xff]
        %v601 = vld [vmem:[#allocation2 + $0x398] sm:$0xff]
        %v602 = vld [vmem:[#allocation2 + $0x3a0] sm:$0xff]
        %v603 = vld [vmem:[#allocation2 + $0x3a8] sm:$0xff]
        %v604 = vld [vmem:[#allocation2 + $0x3b0] sm:$0xff]
        %v605 = vld [vmem:[#allocation2 + $0x3b8] sm:$0xff]
        %v606 = vld [vmem:[#allocation2 + $0x3c0] sm:$0xff]
        %v607 = vld [vmem:[#allocation2 + $0x3c8] sm:$0xff]
        %v608 = vld [vmem:[#allocation2 + $0x3d0] sm:$0xff]
        %v609 = vld [vmem:[#allocation2 + $0x3d8] sm:$0xff]
        %v610 = vld [vmem:[#allocation2 + $0x3e0] sm:$0xff]
        %v611 = vld [vmem:[#allocation2 + $0x3e8] sm:$0xff]
        %v612 = vld [vmem:[#allocation2 + $0x3f0] sm:$0xff]
        %v613 = vld [vmem:[#allocation2 + $0x3f8] sm:$0xff]
        %v614 = vld [vmem:[#allocation2 + $0x400] sm:$0xff]
        %v615 = vld [vmem:[#allocation2 + $0x408] sm:$0xff]
        %v616 = vld [vmem:[#allocation2 + $0x410] sm:$0xff]
        %v617 = vld [vmem:[#allocation2 + $0x418] sm:$0xff]
        %v618 = vld [vmem:[#allocation2 + $0x420] sm:$0xff]
        %v619 = vld [vmem:[#allocation2 + $0x428] sm:$0xff]
        %v620 = vld [vmem:[#allocation2 + $0x430] sm:$0xff]
        %v621 = vld [vmem:[#allocation2 + $0x438] sm:$0xff]
        %v622 = vld [vmem:[#allocation2 + $0x440] sm:$0xff]
        %v623 = vld [vmem:[#allocation2 + $0x448] sm:$0xff]
        %v624 = vld [vmem:[#allocation2 + $0x450] sm:$0xff]
        %v625 = vld [vmem:[#allocation2 + $0x458] sm:$0xff]
        %v626 = vld [vmem:[#allocation2 + $0x460] sm:$0xff]
        %v627 = vld [vmem:[#allocation2 + $0x468] sm:$0xff]
        %v628 = vld [vmem:[#allocation2 + $0x470] sm:$0xff]
        %v629 = vld [vmem:[#allocation2 + $0x478] sm:$0xff]
        %v630 = vld [vmem:[#allocation2 + $0x480] sm:$0xff]
        %v631 = vld [vmem:[#allocation2 + $0x488] sm:$0xff]
        %v632 = vld [vmem:[#allocation2 + $0x490] sm:$0xff]
        %v633 = vld [vmem:[#allocation2 + $0x498] sm:$0xff]
        %v634 = vld [vmem:[#allocation2 + $0x4a0] sm:$0xff]
        %v635 = vld [vmem:[#allocation2 + $0x4a8] sm:$0xff]
        %v636 = vld [vmem:[#allocation2 + $0x4b0] sm:$0xff]
        %v637 = vld [vmem:[#allocation2 + $0x4b8] sm:$0xff]
        %v638 = vld [vmem:[#allocation2 + $0x4c0] sm:$0xff]
        %v639 = vld [vmem:[#allocation2 + $0x4c8] sm:$0xff]
        %v640 = vld [vmem:[#allocation2 + $0x4d0] sm:$0xff]
        %v641 = vld [vmem:[#allocation2 + $0x4d8] sm:$0xff]
        %v642 = vld [vmem:[#allocation2 + $0x4e0] sm:$0xff]
        %v643 = vld [vmem:[#allocation2 + $0x4e8] sm:$0xff]
        %v644 = vld [vmem:[#allocation2 + $0x4f0] sm:$0xff]
        %v645 = vld [vmem:[#allocation2 + $0x4f8] sm:$0xff]
        %v646 = vld [vmem:[#allocation2 + $0x500] sm:$0xff]
        %v647 = vld [vmem:[#allocation2 + $0x508] sm:$0xff]
        %v648 = vld [vmem:[#allocation2 + $0x510] sm:$0xff]
        %v649 = vld [vmem:[#allocation2 + $0x518] sm:$0xff]
        %v650 = vld [vmem:[#allocation2 + $0x520] sm:$0xff]
        %v651 = vld [vmem:[#allocation2 + $0x528] sm:$0xff]
        %v652 = vld [vmem:[#allocation2 + $0x530] sm:$0xff]
        %v653 = vld [vmem:[#allocation2 + $0x538] sm:$0xff]
        %v654 = vld [vmem:[#allocation2 + $0x540] sm:$0xff]
        %v655 = vld [vmem:[#allocation2 + $0x548] sm:$0xff]
        %v656 = vld [vmem:[#allocation2 + $0x550] sm:$0xff]
        %v657 = vld [vmem:[#allocation2 + $0x558] sm:$0xff]
        %v658 = vld [vmem:[#allocation2 + $0x560] sm:$0xff]
        %v659 = vld [vmem:[#allocation2 + $0x568] sm:$0xff]
        %v660 = vld [vmem:[#allocation2 + $0x570] sm:$0xff]
        %v661 = vld [vmem:[#allocation2 + $0x578] sm:$0xff]
        %v662 = vld [vmem:[#allocation2 + $0x580] sm:$0xff]
        %v663 = vld [vmem:[#allocation2 + $0x588] sm:$0xff]
        %v664 = vld [vmem:[#allocation2 + $0x590] sm:$0xff]
        %v665 = vld [vmem:[#allocation2 + $0x598] sm:$0xff]
        %v666 = vld [vmem:[#allocation2 + $0x5a0] sm:$0xff]
        %v667 = vld [vmem:[#allocation2 + $0x5a8] sm:$0xff]
        %v668 = vld [vmem:[#allocation2 + $0x5b0] sm:$0xff]
        %v669 = vld [vmem:[#allocation2 + $0x5b8] sm:$0xff]
        %v670 = vld [vmem:[#allocation2 + $0x5c0] sm:$0xff]
        %v671 = vld [vmem:[#allocation2 + $0x5c8] sm:$0xff]
        %v672 = vld [vmem:[#allocation2 + $0x5d0] sm:$0xff]
        %v673 = vld [vmem:[#allocation2 + $0x5d8] sm:$0xff]
        %v674 = vld [vmem:[#allocation2 + $0x5e0] sm:$0xff]
        %v675 = vld [vmem:[#allocation2 + $0x5e8] sm:$0xff]
        %v676 = vld [vmem:[#allocation2 + $0x5f0] sm:$0xff]
        %v677 = vld [vmem:[#allocation2 + $0x5f8] sm:$0xff]
        %v678 = vld [vmem:[#allocation2 + $0x600] sm:$0xff]
        %v679 = vld [vmem:[#allocation2 + $0x608] sm:$0xff]
        %v680 = vld [vmem:[#allocation2 + $0x610] sm:$0xff]
        %v681 = vld [vmem:[#allocation2 + $0x618] sm:$0xff]
        %v682 = vld [vmem:[#allocation2 + $0x620] sm:$0xff]
        %v683 = vld [vmem:[#allocation2 + $0x628] sm:$0xff]
        %v684 = vld [vmem:[#allocation2 + $0x630] sm:$0xff]
        %v685 = vld [vmem:[#allocation2 + $0x638] sm:$0xff]
        %v686 = vld [vmem:[#allocation2 + $0x640] sm:$0xff]
        %v687 = vld [vmem:[#allocation2 + $0x648] sm:$0xff]
        %v688 = vld [vmem:[#allocation2 + $0x650] sm:$0xff]
        %v689 = vld [vmem:[#allocation2 + $0x658] sm:$0xff]
        %v690 = vld [vmem:[#allocation2 + $0x660] sm:$0xff]
        %v691 = vld [vmem:[#allocation2 + $0x668] sm:$0xff]
        %v692 = vld [vmem:[#allocation2 + $0x670] sm:$0xff]
        %v693 = vld [vmem:[#allocation2 + $0x678] sm:$0xff]
        %v694 = vld [vmem:[#allocation2 + $0x680] sm:$0xff]
        %v695 = vld [vmem:[#allocation2 + $0x688] sm:$0xff]
        %v696 = vld [vmem:[#allocation2 + $0x690] sm:$0xff]
        %v697 = vld [vmem:[#allocation2 + $0x698] sm:$0xff]
        %v698 = vld [vmem:[#allocation2 + $0x6a0] sm:$0xff]
        %v699 = vld [vmem:[#allocation2 + $0x6a8] sm:$0xff]
        %v700 = vld [vmem:[#allocation2 + $0x6b0] sm:$0xff]
        %v701 = vld [vmem:[#allocation2 + $0x6b8] sm:$0xff]
        %v702 = vld [vmem:[#allocation2 + $0x6c0] sm:$0xff]
        %v703 = vld [vmem:[#allocation2 + $0x6c8] sm:$0xff]
        %v704 = vld [vmem:[#allocation2 + $0x6d0] sm:$0xff]
        %v705 = vld [vmem:[#allocation2 + $0x6d8] sm:$0xff]
        %v706 = vld [vmem:[#allocation2 + $0x6e0] sm:$0xff]
        %v707 = vld [vmem:[#allocation2 + $0x6e8] sm:$0xff]
        %v708 = vld [vmem:[#allocation2 + $0x6f0] sm:$0xff]
        %v709 = vld [vmem:[#allocation2 + $0x6f8] sm:$0xff]
        %v710 = vld [vmem:[#allocation2 + $0x700] sm:$0xff]
        %v711 = vld [vmem:[#allocation2 + $0x708] sm:$0xff]
        %v712 = vld [vmem:[#allocation2 + $0x710] sm:$0xff]
        %v713 = vld [vmem:[#allocation2 + $0x718] sm:$0xff]
        %v714 = vld [vmem:[#allocation2 + $0x720] sm:$0xff]
        %v715 = vld [vmem:[#allocation2 + $0x728] sm:$0xff]
        %v716 = vld [vmem:[#allocation2 + $0x730] sm:$0xff]
        %v717 = vld [vmem:[#allocation2 + $0x738] sm:$0xff]
        %v718 = vld [vmem:[#allocation2 + $0x740] sm:$0xff]
        %v719 = vld [vmem:[#allocation2 + $0x748] sm:$0xff]
        %v720 = vld [vmem:[#allocation2 + $0x750] sm:$0xff]
        %v721 = vld [vmem:[#allocation2 + $0x758] sm:$0xff]
        %v722 = vld [vmem:[#allocation2 + $0x760] sm:$0xff]
        %v723 = vld [vmem:[#allocation2 + $0x768] sm:$0xff]
        %v724 = vld [vmem:[#allocation2 + $0x770] sm:$0xff]
        %v725 = vld [vmem:[#allocation2 + $0x778] sm:$0xff]
        %v726 = vld [vmem:[#allocation2 + $0x780] sm:$0xff]
        %v727 = vld [vmem:[#allocation2 + $0x788] sm:$0xff]
        %v728 = vld [vmem:[#allocation2 + $0x790] sm:$0xff]
        %v729 = vld [vmem:[#allocation2 + $0x798] sm:$0xff]
        %v730 = vld [vmem:[#allocation2 + $0x7a0] sm:$0xff]
        %v731 = vld [vmem:[#allocation2 + $0x7a8] sm:$0xff]
        %v732 = vld [vmem:[#allocation2 + $0x7b0] sm:$0xff]
        %v733 = vld [vmem:[#allocation2 + $0x7b8] sm:$0xff]
        %v734 = vld [vmem:[#allocation2 + $0x7c0] sm:$0xff]
        %v735 = vld [vmem:[#allocation2 + $0x7c8] sm:$0xff]
        %v736 = vld [vmem:[#allocation2 + $0x7d0] sm:$0xff]
        %v737 = vld [vmem:[#allocation2 + $0x7d8] sm:$0xff]
        %v738 = vld [vmem:[#allocation2 + $0x7e0] sm:$0xff]
        %v739 = vld [vmem:[#allocation2 + $0x7e8] sm:$0xff]
        %v740 = vld [vmem:[#allocation2 + $0x7f0] sm:$0xff]
        %v741 = vld [vmem:[#allocation2 + $0x7f8] sm:$0xff]
        %v742 = vld [vmem:[#allocation3] sm:$0xff]
        %v743 = vld [vmem:[#allocation3 + $0x8] sm:$0xff]
        %v744 = vld [vmem:[#allocation3 + $0x10] sm:$0xff]
        %v745 = vld [vmem:[#allocation3 + $0x18] sm:$0xff]
        %v746 = vld [vmem:[#allocation3 + $0x20] sm:$0xff]
        %v747 = vld [vmem:[#allocation3 + $0x28] sm:$0xff]
        %v748 = vld [vmem:[#allocation3 + $0x30] sm:$0xff]
        %v749 = vld [vmem:[#allocation3 + $0x38] sm:$0xff]
        %v750 = vld [vmem:[#allocation3 + $0x40] sm:$0xff]
        %v751 = vld [vmem:[#allocation3 + $0x48] sm:$0xff]
        %v752 = vld [vmem:[#allocation3 + $0x50] sm:$0xff]
        %v753 = vld [vmem:[#allocation3 + $0x58] sm:$0xff]
        %v754 = vld [vmem:[#allocation3 + $0x60] sm:$0xff]
        %v755 = vld [vmem:[#allocation3 + $0x68] sm:$0xff]
        %v756 = vld [vmem:[#allocation3 + $0x70] sm:$0xff]
        %v757 = vld [vmem:[#allocation3 + $0x78] sm:$0xff]
        %v758 = vld [vmem:[#allocation3 + $0x80] sm:$0xff]
        %v759 = vld [vmem:[#allocation3 + $0x88] sm:$0xff]
        %v760 = vld [vmem:[#allocation3 + $0x90] sm:$0xff]
        %v761 = vld [vmem:[#allocation3 + $0x98] sm:$0xff]
        %v762 = vld [vmem:[#allocation3 + $0xa0] sm:$0xff]
        %v763 = vld [vmem:[#allocation3 + $0xa8] sm:$0xff]
        %v764 = vld [vmem:[#allocation3 + $0xb0] sm:$0xff]
        %v765 = vld [vmem:[#allocation3 + $0xb8] sm:$0xff]
        %v766 = vld [vmem:[#allocation3 + $0xc0] sm:$0xff]
        %v767 = vld [vmem:[#allocation3 + $0xc8] sm:$0xff]
        %v768 = vld [vmem:[#allocation3 + $0xd0] sm:$0xff]
        %v769 = vld [vmem:[#allocation3 + $0xd8] sm:$0xff]
        %v770 = vld [vmem:[#allocation3 + $0xe0] sm:$0xff]
        %v771 = vld [vmem:[#allocation3 + $0xe8] sm:$0xff]
        %v772 = vld [vmem:[#allocation3 + $0xf0] sm:$0xff]
        %v773 = vld [vmem:[#allocation3 + $0xf8] sm:$0xff]
        %v774 = vld [vmem:[#allocation3 + $0x100] sm:$0xff]
        %v775 = vld [vmem:[#allocation3 + $0x108] sm:$0xff]
        %v776 = vld [vmem:[#allocation3 + $0x110] sm:$0xff]
        %v777 = vld [vmem:[#allocation3 + $0x118] sm:$0xff]
        %v778 = vld [vmem:[#allocation3 + $0x120] sm:$0xff]
        %v779 = vld [vmem:[#allocation3 + $0x128] sm:$0xff]
        %v780 = vld [vmem:[#allocation3 + $0x130] sm:$0xff]
        %v781 = vld [vmem:[#allocation3 + $0x138] sm:$0xff]
        %v782 = vld [vmem:[#allocation3 + $0x140] sm:$0xff]
        %v783 = vld [vmem:[#allocation3 + $0x148] sm:$0xff]
        %v784 = vld [vmem:[#allocation3 + $0x150] sm:$0xff]
        %v785 = vld [vmem:[#allocation3 + $0x158] sm:$0xff]
        %v786 = vld [vmem:[#allocation3 + $0x160] sm:$0xff]
        %v787 = vld [vmem:[#allocation3 + $0x168] sm:$0xff]
        %v788 = vld [vmem:[#allocation3 + $0x170] sm:$0xff]
        %v789 = vld [vmem:[#allocation3 + $0x178] sm:$0xff]
        %v790 = vld [vmem:[#allocation3 + $0x180] sm:$0xff]
        %v791 = vld [vmem:[#allocation3 + $0x188] sm:$0xff]
        %v792 = vld [vmem:[#allocation3 + $0x190] sm:$0xff]
        %v793 = vld [vmem:[#allocation3 + $0x198] sm:$0xff]
        %v794 = vld [vmem:[#allocation3 + $0x1a0] sm:$0xff]
        %v795 = vld [vmem:[#allocation3 + $0x1a8] sm:$0xff]
        %v796 = vld [vmem:[#allocation3 + $0x1b0] sm:$0xff]
        %v797 = vld [vmem:[#allocation3 + $0x1b8] sm:$0xff]
        %v798 = vld [vmem:[#allocation3 + $0x1c0] sm:$0xff]
        %v799 = vld [vmem:[#allocation3 + $0x1c8] sm:$0xff]
        %v800 = vld [vmem:[#allocation3 + $0x1d0] sm:$0xff]
        %v801 = vld [vmem:[#allocation3 + $0x1d8] sm:$0xff]
        %v802 = vld [vmem:[#allocation3 + $0x1e0] sm:$0xff]
        %v803 = vld [vmem:[#allocation3 + $0x1e8] sm:$0xff]
        %v804 = vld [vmem:[#allocation3 + $0x1f0] sm:$0xff]
        %v805 = vld [vmem:[#allocation3 + $0x1f8] sm:$0xff]
        %v806 = vld [vmem:[#allocation3 + $0x200] sm:$0xff]
        %v807 = vld [vmem:[#allocation3 + $0x208] sm:$0xff]
        %v808 = vld [vmem:[#allocation3 + $0x210] sm:$0xff]
        %v809 = vld [vmem:[#allocation3 + $0x218] sm:$0xff]
        %v810 = vld [vmem:[#allocation3 + $0x220] sm:$0xff]
        %v811 = vld [vmem:[#allocation3 + $0x228] sm:$0xff]
        %v812 = vld [vmem:[#allocation3 + $0x230] sm:$0xff]
        %v813 = vld [vmem:[#allocation3 + $0x238] sm:$0xff]
        %v814 = vld [vmem:[#allocation3 + $0x240] sm:$0xff]
        %v815 = vld [vmem:[#allocation3 + $0x248] sm:$0xff]
        %v816 = vld [vmem:[#allocation3 + $0x250] sm:$0xff]
        %v817 = vld [vmem:[#allocation3 + $0x258] sm:$0xff]
        %v818 = vld [vmem:[#allocation3 + $0x260] sm:$0xff]
        %v819 = vld [vmem:[#allocation3 + $0x268] sm:$0xff]
        %v820 = vld [vmem:[#allocation3 + $0x270] sm:$0xff]
        %v821 = vld [vmem:[#allocation3 + $0x278] sm:$0xff]
        %v822 = vld [vmem:[#allocation3 + $0x280] sm:$0xff]
        %v823 = vld [vmem:[#allocation3 + $0x288] sm:$0xff]
        %v824 = vld [vmem:[#allocation3 + $0x290] sm:$0xff]
        %v825 = vld [vmem:[#allocation3 + $0x298] sm:$0xff]
        %v826 = vld [vmem:[#allocation3 + $0x2a0] sm:$0xff]
        %v827 = vld [vmem:[#allocation3 + $0x2a8] sm:$0xff]
        %v828 = vld [vmem:[#allocation3 + $0x2b0] sm:$0xff]
        %v829 = vld [vmem:[#allocation3 + $0x2b8] sm:$0xff]
        %v830 = vld [vmem:[#allocation3 + $0x2c0] sm:$0xff]
        %v831 = vld [vmem:[#allocation3 + $0x2c8] sm:$0xff]
        %v832 = vld [vmem:[#allocation3 + $0x2d0] sm:$0xff]
        %v833 = vld [vmem:[#allocation3 + $0x2d8] sm:$0xff]
        %v834 = vld [vmem:[#allocation3 + $0x2e0] sm:$0xff]
        %v835 = vld [vmem:[#allocation3 + $0x2e8] sm:$0xff]
        %v836 = vld [vmem:[#allocation3 + $0x2f0] sm:$0xff]
        %v837 = vld [vmem:[#allocation3 + $0x2f8] sm:$0xff]
        %v838 = vld [vmem:[#allocation3 + $0x300] sm:$0xff]
        %v839 = vld [vmem:[#allocation3 + $0x308] sm:$0xff]
        %v840 = vld [vmem:[#allocation3 + $0x310] sm:$0xff]
        %v841 = vld [vmem:[#allocation3 + $0x318] sm:$0xff]
        %v842 = vld [vmem:[#allocation3 + $0x320] sm:$0xff]
        %v843 = vld [vmem:[#allocation3 + $0x328] sm:$0xff]
        %v844 = vld [vmem:[#allocation3 + $0x330] sm:$0xff]
        %v845 = vld [vmem:[#allocation3 + $0x338] sm:$0xff]
        %v846 = vld [vmem:[#allocation3 + $0x340] sm:$0xff]
        %v847 = vld [vmem:[#allocation3 + $0x348] sm:$0xff]
        %v848 = vld [vmem:[#allocation3 + $0x350] sm:$0xff]
        %v849 = vld [vmem:[#allocation3 + $0x358] sm:$0xff]
        %v850 = vld [vmem:[#allocation3 + $0x360] sm:$0xff]
        %v851 = vld [vmem:[#allocation3 + $0x368] sm:$0xff]
        %v852 = vld [vmem:[#allocation3 + $0x370] sm:$0xff]
        %v853 = vld [vmem:[#allocation3 + $0x378] sm:$0xff]
        %v854 = vld [vmem:[#allocation3 + $0x380] sm:$0xff]
        %v855 = vld [vmem:[#allocation3 + $0x388] sm:$0xff]
        %v856 = vld [vmem:[#allocation3 + $0x390] sm:$0xff]
        %v857 = vld [vmem:[#allocation3 + $0x398] sm:$0xff]
        %v858 = vld [vmem:[#allocation3 + $0x3a0] sm:$0xff]
        %v859 = vld [vmem:[#allocation3 + $0x3a8] sm:$0xff]
        %v860 = vld [vmem:[#allocation3 + $0x3b0] sm:$0xff]
        %v861 = vld [vmem:[#allocation3 + $0x3b8] sm:$0xff]
        %v862 = vld [vmem:[#allocation3 + $0x3c0] sm:$0xff]
        %v863 = vld [vmem:[#allocation3 + $0x3c8] sm:$0xff]
        %v864 = vld [vmem:[#allocation3 + $0x3d0] sm:$0xff]
        %v865 = vld [vmem:[#allocation3 + $0x3d8] sm:$0xff]
        %v866 = vld [vmem:[#allocation3 + $0x3e0] sm:$0xff]
        %v867 = vld [vmem:[#allocation3 + $0x3e8] sm:$0xff]
        %v868 = vld [vmem:[#allocation3 + $0x3f0] sm:$0xff]
        %v869 = vld [vmem:[#allocation3 + $0x3f8] sm:$0xff]
        %v870 = vld [vmem:[%s198] sm:$0xff]
        %v871 = vld [vmem:[%s198 + $0x8] sm:$0xff]
        %v872 = vld [vmem:[%s198 + $0x10] sm:$0xff]
        %v873 = vld [vmem:[%s198 + $0x18] sm:$0xff]
        %v874 = vld [vmem:[%s198 + $0x20] sm:$0xff]
        %v875 = vld [vmem:[%s198 + $0x28] sm:$0xff]
        %v876 = vld [vmem:[%s198 + $0x30] sm:$0xff]
        %v877 = vld [vmem:[%s198 + $0x38] sm:$0xff]
        %v878 = vld [vmem:[%s198 + $0x40] sm:$0xff]
        %v879 = vld [vmem:[%s198 + $0x48] sm:$0xff]
        %v880 = vld [vmem:[%s198 + $0x50] sm:$0xff]
        %v881 = vld [vmem:[%s198 + $0x58] sm:$0xff]
        %v882 = vld [vmem:[%s198 + $0x60] sm:$0xff]
        %v883 = vld [vmem:[%s198 + $0x68] sm:$0xff]
        %v884 = vld [vmem:[%s198 + $0x70] sm:$0xff]
        %v885 = vld [vmem:[%s198 + $0x78] sm:$0xff]
        %v886 = vld [vmem:[%s198 + $0x80] sm:$0xff]
        %v887 = vld [vmem:[%s198 + $0x88] sm:$0xff]
        %v888 = vld [vmem:[%s198 + $0x90] sm:$0xff]
        %v889 = vld [vmem:[%s198 + $0x98] sm:$0xff]
        %v890 = vld [vmem:[%s198 + $0xa0] sm:$0xff]
        %v891 = vld [vmem:[%s198 + $0xa8] sm:$0xff]
        %v892 = vld [vmem:[%s198 + $0xb0] sm:$0xff]
        %v893 = vld [vmem:[%s198 + $0xb8] sm:$0xff]
        %v894 = vld [vmem:[%s198 + $0xc0] sm:$0xff]
        %v895 = vld [vmem:[%s198 + $0xc8] sm:$0xff]
        %v896 = vld [vmem:[%s198 + $0xd0] sm:$0xff]
        %v897 = vld [vmem:[%s198 + $0xd8] sm:$0xff]
        %v898 = vld [vmem:[%s198 + $0xe0] sm:$0xff]
        %v899 = vld [vmem:[%s198 + $0xe8] sm:$0xff]
        %v900 = vld [vmem:[%s198 + $0xf0] sm:$0xff]
        %v901 = vld [vmem:[%s198 + $0xf8] sm:$0xff]
        %v902 = vld [vmem:[%s198 + $0x100] sm:$0xff]
        %v903 = vld [vmem:[%s198 + $0x108] sm:$0xff]
        %v904 = vld [vmem:[%s198 + $0x110] sm:$0xff]
        %v905 = vld [vmem:[%s198 + $0x118] sm:$0xff]
        %v906 = vld [vmem:[%s198 + $0x120] sm:$0xff]
        %v907 = vld [vmem:[%s198 + $0x128] sm:$0xff]
        %v908 = vld [vmem:[%s198 + $0x130] sm:$0xff]
        %v909 = vld [vmem:[%s198 + $0x138] sm:$0xff]
        %v910 = vld [vmem:[%s198 + $0x140] sm:$0xff]
        %v911 = vld [vmem:[%s198 + $0x148] sm:$0xff]
        %v912 = vld [vmem:[%s198 + $0x150] sm:$0xff]
        %v913 = vld [vmem:[%s198 + $0x158] sm:$0xff]
        %v914 = vld [vmem:[%s198 + $0x160] sm:$0xff]
        %v915 = vld [vmem:[%s198 + $0x168] sm:$0xff]
        %v916 = vld [vmem:[%s198 + $0x170] sm:$0xff]
        %v917 = vld [vmem:[%s198 + $0x178] sm:$0xff]
        %v918 = vld [vmem:[%s198 + $0x180] sm:$0xff]
        %v919 = vld [vmem:[%s198 + $0x188] sm:$0xff]
        %v920 = vld [vmem:[%s198 + $0x190] sm:$0xff]
        %v921 = vld [vmem:[%s198 + $0x198] sm:$0xff]
        %v922 = vld [vmem:[%s198 + $0x1a0] sm:$0xff]
        %v923 = vld [vmem:[%s198 + $0x1a8] sm:$0xff]
        %v924 = vld [vmem:[%s198 + $0x1b0] sm:$0xff]
        %v925 = vld [vmem:[%s198 + $0x1b8] sm:$0xff]
        %v926 = vld [vmem:[%s198 + $0x1c0] sm:$0xff]
        %v927 = vld [vmem:[%s198 + $0x1c8] sm:$0xff]
        %v928 = vld [vmem:[%s198 + $0x1d0] sm:$0xff]
        %v929 = vld [vmem:[%s198 + $0x1d8] sm:$0xff]
        %v930 = vld [vmem:[%s198 + $0x1e0] sm:$0xff]
        %v931 = vld [vmem:[%s198 + $0x1e8] sm:$0xff]
        %v932 = vld [vmem:[%s198 + $0x1f0] sm:$0xff]
        %v933 = vld [vmem:[%s198 + $0x1f8] sm:$0xff]
        %v934 = vld [vmem:[%s198 + $0x200] sm:$0xff]
        %v935 = vld [vmem:[%s198 + $0x208] sm:$0xff]
        %v936 = vld [vmem:[%s198 + $0x210] sm:$0xff]
        %v937 = vld [vmem:[%s198 + $0x218] sm:$0xff]
        %v938 = vld [vmem:[%s198 + $0x220] sm:$0xff]
        %v939 = vld [vmem:[%s198 + $0x228] sm:$0xff]
        %v940 = vld [vmem:[%s198 + $0x230] sm:$0xff]
        %v941 = vld [vmem:[%s198 + $0x238] sm:$0xff]
        %v942 = vld [vmem:[%s198 + $0x240] sm:$0xff]
        %v943 = vld [vmem:[%s198 + $0x248] sm:$0xff]
        %v944 = vld [vmem:[%s198 + $0x250] sm:$0xff]
        %v945 = vld [vmem:[%s198 + $0x258] sm:$0xff]
        %v946 = vld [vmem:[%s198 + $0x260] sm:$0xff]
        %v947 = vld [vmem:[%s198 + $0x268] sm:$0xff]
        %v948 = vld [vmem:[%s198 + $0x270] sm:$0xff]
        %v949 = vld [vmem:[%s198 + $0x278] sm:$0xff]
        %v950 = vld [vmem:[%s198 + $0x280] sm:$0xff]
        %v951 = vld [vmem:[%s198 + $0x288] sm:$0xff]
        %v952 = vld [vmem:[%s198 + $0x290] sm:$0xff]
        %v953 = vld [vmem:[%s198 + $0x298] sm:$0xff]
        %v954 = vld [vmem:[%s198 + $0x2a0] sm:$0xff]
        %v955 = vld [vmem:[%s198 + $0x2a8] sm:$0xff]
        %v956 = vld [vmem:[%s198 + $0x2b0] sm:$0xff]
        %v957 = vld [vmem:[%s198 + $0x2b8] sm:$0xff]
        %v958 = vld [vmem:[%s198 + $0x2c0] sm:$0xff]
        %v959 = vld [vmem:[%s198 + $0x2c8] sm:$0xff]
        %v960 = vld [vmem:[%s198 + $0x2d0] sm:$0xff]
        %v961 = vld [vmem:[%s198 + $0x2d8] sm:$0xff]
        %v962 = vld [vmem:[%s198 + $0x2e0] sm:$0xff]
        %v963 = vld [vmem:[%s198 + $0x2e8] sm:$0xff]
        %v964 = vld [vmem:[%s198 + $0x2f0] sm:$0xff]
        %v965 = vld [vmem:[%s198 + $0x2f8] sm:$0xff]
        %v966 = vld [vmem:[%s198 + $0x300] sm:$0xff]
        %v967 = vld [vmem:[%s198 + $0x308] sm:$0xff]
        %v968 = vld [vmem:[%s198 + $0x310] sm:$0xff]
        %v969 = vld [vmem:[%s198 + $0x318] sm:$0xff]
        %v970 = vld [vmem:[%s198 + $0x320] sm:$0xff]
        %v971 = vld [vmem:[%s198 + $0x328] sm:$0xff]
        %v972 = vld [vmem:[%s198 + $0x330] sm:$0xff]
        %v973 = vld [vmem:[%s198 + $0x338] sm:$0xff]
        %v974 = vld [vmem:[%s198 + $0x340] sm:$0xff]
        %v975 = vld [vmem:[%s198 + $0x348] sm:$0xff]
        %v976 = vld [vmem:[%s198 + $0x350] sm:$0xff]
        %v977 = vld [vmem:[%s198 + $0x358] sm:$0xff]
        %v978 = vld [vmem:[%s198 + $0x360] sm:$0xff]
        %v979 = vld [vmem:[%s198 + $0x368] sm:$0xff]
        %v980 = vld [vmem:[%s198 + $0x370] sm:$0xff]
        %v981 = vld [vmem:[%s198 + $0x378] sm:$0xff]
        %v982 = vld [vmem:[%s198 + $0x380] sm:$0xff]
        %v983 = vld [vmem:[%s198 + $0x388] sm:$0xff]
        %v984 = vld [vmem:[%s198 + $0x390] sm:$0xff]
        %v985 = vld [vmem:[%s198 + $0x398] sm:$0xff]
        %v986 = vld [vmem:[%s198 + $0x3a0] sm:$0xff]
        %v987 = vld [vmem:[%s198 + $0x3a8] sm:$0xff]
        %v988 = vld [vmem:[%s198 + $0x3b0] sm:$0xff]
        %v989 = vld [vmem:[%s198 + $0x3b8] sm:$0xff]
        %v990 = vld [vmem:[%s198 + $0x3c0] sm:$0xff]
        %v991 = vld [vmem:[%s198 + $0x3c8] sm:$0xff]
        %v992 = vld [vmem:[%s198 + $0x3d0] sm:$0xff]
        %v993 = vld [vmem:[%s198 + $0x3d8] sm:$0xff]
        %v994 = vld [vmem:[%s198 + $0x3e0] sm:$0xff]
        %v995 = vld [vmem:[%s198 + $0x3e8] sm:$0xff]
        %v996 = vld [vmem:[%s198 + $0x3f0] sm:$0xff]
        %v997 = vld [vmem:[%s198 + $0x3f8] sm:$0xff]
        %v1126 = vunpack.c.l.b16 %v742
        %v1127 = vunpack.c.h.b16 %v742
        %v1128 = vunpack.c.l.b16 %v743
        %v1129 = vunpack.c.h.b16 %v743
        %v1130 = vunpack.c.l.b16 %v744
        %v1131 = vunpack.c.h.b16 %v744
        %v1132 = vunpack.c.l.b16 %v745
        %v1133 = vunpack.c.h.b16 %v745
        %v1134 = vunpack.c.l.b16 %v746
        %v1135 = vunpack.c.h.b16 %v746
        %v1136 = vunpack.c.l.b16 %v747
        %v1137 = vunpack.c.h.b16 %v747
        %v1138 = vunpack.c.l.b16 %v748
        %v1139 = vunpack.c.h.b16 %v748
        %v1140 = vunpack.c.l.b16 %v749
        %v1141 = vunpack.c.h.b16 %v749
        %v1142 = vunpack.c.l.b16 %v750
        %v1143 = vunpack.c.h.b16 %v750
        %v1144 = vunpack.c.l.b16 %v751
        %v1145 = vunpack.c.h.b16 %v751
        %v1146 = vunpack.c.l.b16 %v752
        %v1147 = vunpack.c.h.b16 %v752
        %v1148 = vunpack.c.l.b16 %v753
        %v1149 = vunpack.c.h.b16 %v753
        %v1150 = vunpack.c.l.b16 %v754
        %v1151 = vunpack.c.h.b16 %v754
        %v1152 = vunpack.c.l.b16 %v755
        %v1153 = vunpack.c.h.b16 %v755
        %v1154 = vunpack.c.l.b16 %v756
        %v1155 = vunpack.c.h.b16 %v756
        %v1156 = vunpack.c.l.b16 %v757
        %v1157 = vunpack.c.h.b16 %v757
        %v1158 = vunpack.c.l.b16 %v758
        %v1159 = vunpack.c.h.b16 %v758
        %v1160 = vunpack.c.l.b16 %v759
        %v1161 = vunpack.c.h.b16 %v759
        %v1162 = vunpack.c.l.b16 %v760
        %v1163 = vunpack.c.h.b16 %v760
        %v1164 = vunpack.c.l.b16 %v761
        %v1165 = vunpack.c.h.b16 %v761
        %v1166 = vunpack.c.l.b16 %v762
        %v1167 = vunpack.c.h.b16 %v762
        %v1168 = vunpack.c.l.b16 %v763
        %v1169 = vunpack.c.h.b16 %v763
        %v1170 = vunpack.c.l.b16 %v764
        %v1171 = vunpack.c.h.b16 %v764
        %v1172 = vunpack.c.l.b16 %v765
        %v1173 = vunpack.c.h.b16 %v765
        %v1174 = vunpack.c.l.b16 %v766
        %v1175 = vunpack.c.h.b16 %v766
        %v1176 = vunpack.c.l.b16 %v767
        %v1177 = vunpack.c.h.b16 %v767
        %v1178 = vunpack.c.l.b16 %v768
        %v1179 = vunpack.c.h.b16 %v768
        %v1180 = vunpack.c.l.b16 %v769
        %v1181 = vunpack.c.h.b16 %v769
        %v1182 = vunpack.c.l.b16 %v770
        %v1183 = vunpack.c.h.b16 %v770
        %v1184 = vunpack.c.l.b16 %v771
        %v1185 = vunpack.c.h.b16 %v771
        %v1186 = vunpack.c.l.b16 %v772
        %v1187 = vunpack.c.h.b16 %v772
        %v1188 = vunpack.c.l.b16 %v773
        %v1189 = vunpack.c.h.b16 %v773
        %v1190 = vunpack.c.l.b16 %v774
        %v1191 = vunpack.c.h.b16 %v774
        %v1192 = vunpack.c.l.b16 %v775
        %v1193 = vunpack.c.h.b16 %v775
        %v1194 = vunpack.c.l.b16 %v776
        %v1195 = vunpack.c.h.b16 %v776
        %v1196 = vunpack.c.l.b16 %v777
        %v1197 = vunpack.c.h.b16 %v777
        %v1198 = vunpack.c.l.b16 %v778
        %v1199 = vunpack.c.h.b16 %v778
        %v1200 = vunpack.c.l.b16 %v779
        %v1201 = vunpack.c.h.b16 %v779
        %v1202 = vunpack.c.l.b16 %v780
        %v1203 = vunpack.c.h.b16 %v780
        %v1204 = vunpack.c.l.b16 %v781
        %v1205 = vunpack.c.h.b16 %v781
        %v1206 = vunpack.c.l.b16 %v782
        %v1207 = vunpack.c.h.b16 %v782
        %v1208 = vunpack.c.l.b16 %v783
        %v1209 = vunpack.c.h.b16 %v783
        %v1210 = vunpack.c.l.b16 %v784
        %v1211 = vunpack.c.h.b16 %v784
        %v1212 = vunpack.c.l.b16 %v785
        %v1213 = vunpack.c.h.b16 %v785
        %v1214 = vunpack.c.l.b16 %v786
        %v1215 = vunpack.c.h.b16 %v786
        %v1216 = vunpack.c.l.b16 %v787
        %v1217 = vunpack.c.h.b16 %v787
        %v1218 = vunpack.c.l.b16 %v788
        %v1219 = vunpack.c.h.b16 %v788
        %v1220 = vunpack.c.l.b16 %v789
        %v1221 = vunpack.c.h.b16 %v789
        %v1222 = vunpack.c.l.b16 %v790
        %v1223 = vunpack.c.h.b16 %v790
        %v1224 = vunpack.c.l.b16 %v791
        %v1225 = vunpack.c.h.b16 %v791
        %v1226 = vunpack.c.l.b16 %v792
        %v1227 = vunpack.c.h.b16 %v792
        %v1228 = vunpack.c.l.b16 %v793
        %v1229 = vunpack.c.h.b16 %v793
        %v1230 = vunpack.c.l.b16 %v794
        %v1231 = vunpack.c.h.b16 %v794
        %v1232 = vunpack.c.l.b16 %v795
        %v1233 = vunpack.c.h.b16 %v795
        %v1234 = vunpack.c.l.b16 %v796
        %v1235 = vunpack.c.h.b16 %v796
        %v1236 = vunpack.c.l.b16 %v797
        %v1237 = vunpack.c.h.b16 %v797
        %v1238 = vunpack.c.l.b16 %v798
        %v1239 = vunpack.c.h.b16 %v798
        %v1240 = vunpack.c.l.b16 %v799
        %v1241 = vunpack.c.h.b16 %v799
        %v1242 = vunpack.c.l.b16 %v800
        %v1243 = vunpack.c.h.b16 %v800
        %v1244 = vunpack.c.l.b16 %v801
        %v1245 = vunpack.c.h.b16 %v801
        %v1246 = vunpack.c.l.b16 %v802
        %v1247 = vunpack.c.h.b16 %v802
        %v1248 = vunpack.c.l.b16 %v803
        %v1249 = vunpack.c.h.b16 %v803
        %v1250 = vunpack.c.l.b16 %v804
        %v1251 = vunpack.c.h.b16 %v804
        %v1252 = vunpack.c.l.b16 %v805
        %v1253 = vunpack.c.h.b16 %v805
        %v1254 = vunpack.c.l.b16 %v806
        %v1255 = vunpack.c.h.b16 %v806
        %v1256 = vunpack.c.l.b16 %v807
        %v1257 = vunpack.c.h.b16 %v807
        %v1258 = vunpack.c.l.b16 %v808
        %v1259 = vunpack.c.h.b16 %v808
        %v1260 = vunpack.c.l.b16 %v809
        %v1261 = vunpack.c.h.b16 %v809
        %v1262 = vunpack.c.l.b16 %v810
        %v1263 = vunpack.c.h.b16 %v810
        %v1264 = vunpack.c.l.b16 %v811
        %v1265 = vunpack.c.h.b16 %v811
        %v1266 = vunpack.c.l.b16 %v812
        %v1267 = vunpack.c.h.b16 %v812
        %v1268 = vunpack.c.l.b16 %v813
        %v1269 = vunpack.c.h.b16 %v813
        %v1270 = vunpack.c.l.b16 %v814
        %v1271 = vunpack.c.h.b16 %v814
        %v1272 = vunpack.c.l.b16 %v815
        %v1273 = vunpack.c.h.b16 %v815
        %v1274 = vunpack.c.l.b16 %v816
        %v1275 = vunpack.c.h.b16 %v816
        %v1276 = vunpack.c.l.b16 %v817
        %v1277 = vunpack.c.h.b16 %v817
        %v1278 = vunpack.c.l.b16 %v818
        %v1279 = vunpack.c.h.b16 %v818
        %v1280 = vunpack.c.l.b16 %v819
        %v1281 = vunpack.c.h.b16 %v819
        %v1282 = vunpack.c.l.b16 %v820
        %v1283 = vunpack.c.h.b16 %v820
        %v1284 = vunpack.c.l.b16 %v821
        %v1285 = vunpack.c.h.b16 %v821
        %v1286 = vunpack.c.l.b16 %v822
        %v1287 = vunpack.c.h.b16 %v822
        %v1288 = vunpack.c.l.b16 %v823
        %v1289 = vunpack.c.h.b16 %v823
        %v1290 = vunpack.c.l.b16 %v824
        %v1291 = vunpack.c.h.b16 %v824
        %v1292 = vunpack.c.l.b16 %v825
        %v1293 = vunpack.c.h.b16 %v825
        %v1294 = vunpack.c.l.b16 %v826
        %v1295 = vunpack.c.h.b16 %v826
        %v1296 = vunpack.c.l.b16 %v827
        %v1297 = vunpack.c.h.b16 %v827
        %v1298 = vunpack.c.l.b16 %v828
        %v1299 = vunpack.c.h.b16 %v828
        %v1300 = vunpack.c.l.b16 %v829
        %v1301 = vunpack.c.h.b16 %v829
        %v1302 = vunpack.c.l.b16 %v830
        %v1303 = vunpack.c.h.b16 %v830
        %v1304 = vunpack.c.l.b16 %v831
        %v1305 = vunpack.c.h.b16 %v831
        %v1306 = vunpack.c.l.b16 %v832
        %v1307 = vunpack.c.h.b16 %v832
        %v1308 = vunpack.c.l.b16 %v833
        %v1309 = vunpack.c.h.b16 %v833
        %v1310 = vunpack.c.l.b16 %v834
        %v1311 = vunpack.c.h.b16 %v834
        %v1312 = vunpack.c.l.b16 %v835
        %v1313 = vunpack.c.h.b16 %v835
        %v1314 = vunpack.c.l.b16 %v836
        %v1315 = vunpack.c.h.b16 %v836
        %v1316 = vunpack.c.l.b16 %v837
        %v1317 = vunpack.c.h.b16 %v837
        %v1318 = vunpack.c.l.b16 %v838
        %v1319 = vunpack.c.h.b16 %v838
        %v1320 = vunpack.c.l.b16 %v839
        %v1321 = vunpack.c.h.b16 %v839
        %v1322 = vunpack.c.l.b16 %v840
        %v1323 = vunpack.c.h.b16 %v840
        %v1324 = vunpack.c.l.b16 %v841
        %v1325 = vunpack.c.h.b16 %v841
        %v1326 = vunpack.c.l.b16 %v842
        %v1327 = vunpack.c.h.b16 %v842
        %v1328 = vunpack.c.l.b16 %v843
        %v1329 = vunpack.c.h.b16 %v843
        %v1330 = vunpack.c.l.b16 %v844
        %v1331 = vunpack.c.h.b16 %v844
        %v1332 = vunpack.c.l.b16 %v845
        %v1333 = vunpack.c.h.b16 %v845
        %v1334 = vunpack.c.l.b16 %v846
        %v1335 = vunpack.c.h.b16 %v846
        %v1336 = vunpack.c.l.b16 %v847
        %v1337 = vunpack.c.h.b16 %v847
        %v1338 = vunpack.c.l.b16 %v848
        %v1339 = vunpack.c.h.b16 %v848
        %v1340 = vunpack.c.l.b16 %v849
        %v1341 = vunpack.c.h.b16 %v849
        %v1342 = vunpack.c.l.b16 %v850
        %v1343 = vunpack.c.h.b16 %v850
        %v1344 = vunpack.c.l.b16 %v851
        %v1345 = vunpack.c.h.b16 %v851
        %v1346 = vunpack.c.l.b16 %v852
        %v1347 = vunpack.c.h.b16 %v852
        %v1348 = vunpack.c.l.b16 %v853
        %v1349 = vunpack.c.h.b16 %v853
        %v1350 = vunpack.c.l.b16 %v854
        %v1351 = vunpack.c.h.b16 %v854
        %v1352 = vunpack.c.l.b16 %v855
        %v1353 = vunpack.c.h.b16 %v855
        %v1354 = vunpack.c.l.b16 %v856
        %v1355 = vunpack.c.h.b16 %v856
        %v1356 = vunpack.c.l.b16 %v857
        %v1357 = vunpack.c.h.b16 %v857
        %v1358 = vunpack.c.l.b16 %v858
        %v1359 = vunpack.c.h.b16 %v858
        %v1360 = vunpack.c.l.b16 %v859
        %v1361 = vunpack.c.h.b16 %v859
        %v1362 = vunpack.c.l.b16 %v860
        %v1363 = vunpack.c.h.b16 %v860
        %v1364 = vunpack.c.l.b16 %v861
        %v1365 = vunpack.c.h.b16 %v861
        %v1366 = vunpack.c.l.b16 %v862
        %v1367 = vunpack.c.h.b16 %v862
        %v1368 = vunpack.c.l.b16 %v863
        %v1369 = vunpack.c.h.b16 %v863
        %v1370 = vunpack.c.l.b16 %v864
        %v1371 = vunpack.c.h.b16 %v864
        %v1372 = vunpack.c.l.b16 %v865
        %v1373 = vunpack.c.h.b16 %v865
        %v1374 = vunpack.c.l.b16 %v866
        %v1375 = vunpack.c.h.b16 %v866
        %v1376 = vunpack.c.l.b16 %v867
        %v1377 = vunpack.c.h.b16 %v867
        %v1378 = vunpack.c.l.b16 %v868
        %v1379 = vunpack.c.h.b16 %v868
        %v1380 = vunpack.c.l.b16 %v869
        %v1381 = vunpack.c.h.b16 %v869
        %v1382 = vpack.c.b16 %v1130, %v1126
        %v1383 = vpack.c.b16 %v1131, %v1127
        %v1384 = vpack.c.b16 %v1132, %v1128
        %v1385 = vpack.c.b16 %v1133, %v1129
        %v1386 = vpack.c.b16 %v1138, %v1134
        %v1387 = vpack.c.b16 %v1139, %v1135
        %v1388 = vpack.c.b16 %v1140, %v1136
        %v1389 = vpack.c.b16 %v1141, %v1137
        %v1390 = vpack.c.b16 %v1146, %v1142
        %v1391 = vpack.c.b16 %v1147, %v1143
        %v1392 = vpack.c.b16 %v1148, %v1144
        %v1393 = vpack.c.b16 %v1149, %v1145
        %v1394 = vpack.c.b16 %v1154, %v1150
        %v1395 = vpack.c.b16 %v1155, %v1151
        %v1396 = vpack.c.b16 %v1156, %v1152
        %v1397 = vpack.c.b16 %v1157, %v1153
        %v1398 = vpack.c.b16 %v1162, %v1158
        %v1399 = vpack.c.b16 %v1163, %v1159
        %v1400 = vpack.c.b16 %v1164, %v1160
        %v1401 = vpack.c.b16 %v1165, %v1161
        %v1402 = vpack.c.b16 %v1170, %v1166
        %v1403 = vpack.c.b16 %v1171, %v1167
        %v1404 = vpack.c.b16 %v1172, %v1168
        %v1405 = vpack.c.b16 %v1173, %v1169
        %v1406 = vpack.c.b16 %v1178, %v1174
        %v1407 = vpack.c.b16 %v1179, %v1175
        %v1408 = vpack.c.b16 %v1180, %v1176
        %v1409 = vpack.c.b16 %v1181, %v1177
        %v1410 = vpack.c.b16 %v1186, %v1182
        %v1411 = vpack.c.b16 %v1187, %v1183
        %v1412 = vpack.c.b16 %v1188, %v1184
        %v1413 = vpack.c.b16 %v1189, %v1185
        %v1414 = vpack.c.b16 %v1194, %v1190
        %v1415 = vpack.c.b16 %v1195, %v1191
        %v1416 = vpack.c.b16 %v1196, %v1192
        %v1417 = vpack.c.b16 %v1197, %v1193
        %v1418 = vpack.c.b16 %v1202, %v1198
        %v1419 = vpack.c.b16 %v1203, %v1199
        %v1420 = vpack.c.b16 %v1204, %v1200
        %v1421 = vpack.c.b16 %v1205, %v1201
        %v1422 = vpack.c.b16 %v1210, %v1206
        %v1423 = vpack.c.b16 %v1211, %v1207
        %v1424 = vpack.c.b16 %v1212, %v1208
        %v1425 = vpack.c.b16 %v1213, %v1209
        %v1426 = vpack.c.b16 %v1218, %v1214
        %v1427 = vpack.c.b16 %v1219, %v1215
        %v1428 = vpack.c.b16 %v1220, %v1216
        %v1429 = vpack.c.b16 %v1221, %v1217
        %v1430 = vpack.c.b16 %v1226, %v1222
        %v1431 = vpack.c.b16 %v1227, %v1223
        %v1432 = vpack.c.b16 %v1228, %v1224
        %v1433 = vpack.c.b16 %v1229, %v1225
        %v1434 = vpack.c.b16 %v1234, %v1230
        %v1435 = vpack.c.b16 %v1235, %v1231
        %v1436 = vpack.c.b16 %v1236, %v1232
        %v1437 = vpack.c.b16 %v1237, %v1233
        %v1438 = vpack.c.b16 %v1242, %v1238
        %v1439 = vpack.c.b16 %v1243, %v1239
        %v1440 = vpack.c.b16 %v1244, %v1240
        %v1441 = vpack.c.b16 %v1245, %v1241
        %v1442 = vpack.c.b16 %v1250, %v1246
        %v1443 = vpack.c.b16 %v1251, %v1247
        %v1444 = vpack.c.b16 %v1252, %v1248
        %v1445 = vpack.c.b16 %v1253, %v1249
        %v1446 = vpack.c.b16 %v1258, %v1254
        %v1447 = vpack.c.b16 %v1259, %v1255
        %v1448 = vpack.c.b16 %v1260, %v1256
        %v1449 = vpack.c.b16 %v1261, %v1257
        %v1450 = vpack.c.b16 %v1266, %v1262
        %v1451 = vpack.c.b16 %v1267, %v1263
        %v1452 = vpack.c.b16 %v1268, %v1264
        %v1453 = vpack.c.b16 %v1269, %v1265
        %v1454 = vpack.c.b16 %v1274, %v1270
        %v1455 = vpack.c.b16 %v1275, %v1271
        %v1456 = vpack.c.b16 %v1276, %v1272
        %v1457 = vpack.c.b16 %v1277, %v1273
        %v1458 = vpack.c.b16 %v1282, %v1278
        %v1459 = vpack.c.b16 %v1283, %v1279
        %v1460 = vpack.c.b16 %v1284, %v1280
        %v1461 = vpack.c.b16 %v1285, %v1281
        %v1462 = vpack.c.b16 %v1290, %v1286
        %v1463 = vpack.c.b16 %v1291, %v1287
        %v1464 = vpack.c.b16 %v1292, %v1288
        %v1465 = vpack.c.b16 %v1293, %v1289
        %v1466 = vpack.c.b16 %v1298, %v1294
        %v1467 = vpack.c.b16 %v1299, %v1295
        %v1468 = vpack.c.b16 %v1300, %v1296
        %v1469 = vpack.c.b16 %v1301, %v1297
        %v1470 = vpack.c.b16 %v1306, %v1302
        %v1471 = vpack.c.b16 %v1307, %v1303
        %v1472 = vpack.c.b16 %v1308, %v1304
        %v1473 = vpack.c.b16 %v1309, %v1305
        %v1474 = vpack.c.b16 %v1314, %v1310
        %v1475 = vpack.c.b16 %v1315, %v1311
        %v1476 = vpack.c.b16 %v1316, %v1312
        %v1477 = vpack.c.b16 %v1317, %v1313
        %v1478 = vpack.c.b16 %v1322, %v1318
        %v1479 = vpack.c.b16 %v1323, %v1319
        %v1480 = vpack.c.b16 %v1324, %v1320
        %v1481 = vpack.c.b16 %v1325, %v1321
        %v1482 = vpack.c.b16 %v1330, %v1326
        %v1483 = vpack.c.b16 %v1331, %v1327
        %v1484 = vpack.c.b16 %v1332, %v1328
        %v1485 = vpack.c.b16 %v1333, %v1329
        %v1486 = vpack.c.b16 %v1338, %v1334
        %v1487 = vpack.c.b16 %v1339, %v1335
        %v1488 = vpack.c.b16 %v1340, %v1336
        %v1489 = vpack.c.b16 %v1341, %v1337
        %v1490 = vpack.c.b16 %v1346, %v1342
        %v1491 = vpack.c.b16 %v1347, %v1343
        %v1492 = vpack.c.b16 %v1348, %v1344
        %v1493 = vpack.c.b16 %v1349, %v1345
        %v1494 = vpack.c.b16 %v1354, %v1350
        %v1495 = vpack.c.b16 %v1355, %v1351
        %v1496 = vpack.c.b16 %v1356, %v1352
        %v1497 = vpack.c.b16 %v1357, %v1353
        %v1498 = vpack.c.b16 %v1362, %v1358
        %v1499 = vpack.c.b16 %v1363, %v1359
        %v1500 = vpack.c.b16 %v1364, %v1360
        %v1501 = vpack.c.b16 %v1365, %v1361
        %v1502 = vpack.c.b16 %v1370, %v1366
        %v1503 = vpack.c.b16 %v1371, %v1367
        %v1504 = vpack.c.b16 %v1372, %v1368
        %v1505 = vpack.c.b16 %v1373, %v1369
        %v1506 = vpack.c.b16 %v1378, %v1374
        %v1507 = vpack.c.b16 %v1379, %v1375
        %v1508 = vpack.c.b16 %v1380, %v1376
        %v1509 = vpack.c.b16 %v1381, %v1377
        %v1766 = vunpack.c.l.b16 %v870
        %v1767 = vunpack.c.h.b16 %v870
        %v1768 = vunpack.c.l.b16 %v871
        %v1769 = vunpack.c.h.b16 %v871
        %v1770 = vunpack.c.l.b16 %v872
        %v1771 = vunpack.c.h.b16 %v872
        %v1772 = vunpack.c.l.b16 %v873
        %v1773 = vunpack.c.h.b16 %v873
        %v1774 = vunpack.c.l.b16 %v874
        %v1775 = vunpack.c.h.b16 %v874
        %v1776 = vunpack.c.l.b16 %v875
        %v1777 = vunpack.c.h.b16 %v875
        %v1778 = vunpack.c.l.b16 %v876
        %v1779 = vunpack.c.h.b16 %v876
        %v1780 = vunpack.c.l.b16 %v877
        %v1781 = vunpack.c.h.b16 %v877
        %v1782 = vunpack.c.l.b16 %v878
        %v1783 = vunpack.c.h.b16 %v878
        %v1784 = vunpack.c.l.b16 %v879
        %v1785 = vunpack.c.h.b16 %v879
        %v1786 = vunpack.c.l.b16 %v880
        %v1787 = vunpack.c.h.b16 %v880
        %v1788 = vunpack.c.l.b16 %v881
        %v1789 = vunpack.c.h.b16 %v881
        %v1790 = vunpack.c.l.b16 %v882
        %v1791 = vunpack.c.h.b16 %v882
        %v1792 = vunpack.c.l.b16 %v883
        %v1793 = vunpack.c.h.b16 %v883
        %v1794 = vunpack.c.l.b16 %v884
        %v1795 = vunpack.c.h.b16 %v884
        %v1796 = vunpack.c.l.b16 %v885
        %v1797 = vunpack.c.h.b16 %v885
        %v1798 = vunpack.c.l.b16 %v886
        %v1799 = vunpack.c.h.b16 %v886
        %v1800 = vunpack.c.l.b16 %v887
        %v1801 = vunpack.c.h.b16 %v887
        %v1802 = vunpack.c.l.b16 %v888
        %v1803 = vunpack.c.h.b16 %v888
        %v1804 = vunpack.c.l.b16 %v889
        %v1805 = vunpack.c.h.b16 %v889
        %v1806 = vunpack.c.l.b16 %v890
        %v1807 = vunpack.c.h.b16 %v890
        %v1808 = vunpack.c.l.b16 %v891
        %v1809 = vunpack.c.h.b16 %v891
        %v1810 = vunpack.c.l.b16 %v892
        %v1811 = vunpack.c.h.b16 %v892
        %v1812 = vunpack.c.l.b16 %v893
        %v1813 = vunpack.c.h.b16 %v893
        %v1814 = vunpack.c.l.b16 %v894
        %v1815 = vunpack.c.h.b16 %v894
        %v1816 = vunpack.c.l.b16 %v895
        %v1817 = vunpack.c.h.b16 %v895
        %v1818 = vunpack.c.l.b16 %v896
        %v1819 = vunpack.c.h.b16 %v896
        %v1820 = vunpack.c.l.b16 %v897
        %v1821 = vunpack.c.h.b16 %v897
        %v1822 = vunpack.c.l.b16 %v898
        %v1823 = vunpack.c.h.b16 %v898
        %v1824 = vunpack.c.l.b16 %v899
        %v1825 = vunpack.c.h.b16 %v899
        %v1826 = vunpack.c.l.b16 %v900
        %v1827 = vunpack.c.h.b16 %v900
        %v1828 = vunpack.c.l.b16 %v901
        %v1829 = vunpack.c.h.b16 %v901
        %v1830 = vunpack.c.l.b16 %v902
        %v1831 = vunpack.c.h.b16 %v902
        %v1832 = vunpack.c.l.b16 %v903
        %v1833 = vunpack.c.h.b16 %v903
        %v1834 = vunpack.c.l.b16 %v904
        %v1835 = vunpack.c.h.b16 %v904
        %v1836 = vunpack.c.l.b16 %v905
        %v1837 = vunpack.c.h.b16 %v905
        %v1838 = vunpack.c.l.b16 %v906
        %v1839 = vunpack.c.h.b16 %v906
        %v1840 = vunpack.c.l.b16 %v907
        %v1841 = vunpack.c.h.b16 %v907
        %v1842 = vunpack.c.l.b16 %v908
        %v1843 = vunpack.c.h.b16 %v908
        %v1844 = vunpack.c.l.b16 %v909
        %v1845 = vunpack.c.h.b16 %v909
        %v1846 = vunpack.c.l.b16 %v910
        %v1847 = vunpack.c.h.b16 %v910
        %v1848 = vunpack.c.l.b16 %v911
        %v1849 = vunpack.c.h.b16 %v911
        %v1850 = vunpack.c.l.b16 %v912
        %v1851 = vunpack.c.h.b16 %v912
        %v1852 = vunpack.c.l.b16 %v913
        %v1853 = vunpack.c.h.b16 %v913
        %v1854 = vunpack.c.l.b16 %v914
        %v1855 = vunpack.c.h.b16 %v914
        %v1856 = vunpack.c.l.b16 %v915
        %v1857 = vunpack.c.h.b16 %v915
        %v1858 = vunpack.c.l.b16 %v916
        %v1859 = vunpack.c.h.b16 %v916
        %v1860 = vunpack.c.l.b16 %v917
        %v1861 = vunpack.c.h.b16 %v917
        %v1862 = vunpack.c.l.b16 %v918
        %v1863 = vunpack.c.h.b16 %v918
        %v1864 = vunpack.c.l.b16 %v919
        %v1865 = vunpack.c.h.b16 %v919
        %v1866 = vunpack.c.l.b16 %v920
        %v1867 = vunpack.c.h.b16 %v920
        %v1868 = vunpack.c.l.b16 %v921
        %v1869 = vunpack.c.h.b16 %v921
        %v1870 = vunpack.c.l.b16 %v922
        %v1871 = vunpack.c.h.b16 %v922
        %v1872 = vunpack.c.l.b16 %v923
        %v1873 = vunpack.c.h.b16 %v923
        %v1874 = vunpack.c.l.b16 %v924
        %v1875 = vunpack.c.h.b16 %v924
        %v1876 = vunpack.c.l.b16 %v925
        %v1877 = vunpack.c.h.b16 %v925
        %v1878 = vunpack.c.l.b16 %v926
        %v1879 = vunpack.c.h.b16 %v926
        %v1880 = vunpack.c.l.b16 %v927
        %v1881 = vunpack.c.h.b16 %v927
        %v1882 = vunpack.c.l.b16 %v928
        %v1883 = vunpack.c.h.b16 %v928
        %v1884 = vunpack.c.l.b16 %v929
        %v1885 = vunpack.c.h.b16 %v929
        %v1886 = vunpack.c.l.b16 %v930
        %v1887 = vunpack.c.h.b16 %v930
        %v1888 = vunpack.c.l.b16 %v931
        %v1889 = vunpack.c.h.b16 %v931
        %v1890 = vunpack.c.l.b16 %v932
        %v1891 = vunpack.c.h.b16 %v932
        %v1892 = vunpack.c.l.b16 %v933
        %v1893 = vunpack.c.h.b16 %v933
        %v1894 = vunpack.c.l.b16 %v934
        %v1895 = vunpack.c.h.b16 %v934
        %v1896 = vunpack.c.l.b16 %v935
        %v1897 = vunpack.c.h.b16 %v935
        %v1898 = vunpack.c.l.b16 %v936
        %v1899 = vunpack.c.h.b16 %v936
        %v1900 = vunpack.c.l.b16 %v937
        %v1901 = vunpack.c.h.b16 %v937
        %v1902 = vunpack.c.l.b16 %v938
        %v1903 = vunpack.c.h.b16 %v938
        %v1904 = vunpack.c.l.b16 %v939
        %v1905 = vunpack.c.h.b16 %v939
        %v1906 = vunpack.c.l.b16 %v940
        %v1907 = vunpack.c.h.b16 %v940
        %v1908 = vunpack.c.l.b16 %v941
        %v1909 = vunpack.c.h.b16 %v941
        %v1910 = vunpack.c.l.b16 %v942
        %v1911 = vunpack.c.h.b16 %v942
        %v1912 = vunpack.c.l.b16 %v943
        %v1913 = vunpack.c.h.b16 %v943
        %v1914 = vunpack.c.l.b16 %v944
        %v1915 = vunpack.c.h.b16 %v944
        %v1916 = vunpack.c.l.b16 %v945
        %v1917 = vunpack.c.h.b16 %v945
        %v1918 = vunpack.c.l.b16 %v946
        %v1919 = vunpack.c.h.b16 %v946
        %v1920 = vunpack.c.l.b16 %v947
        %v1921 = vunpack.c.h.b16 %v947
        %v1922 = vunpack.c.l.b16 %v948
        %v1923 = vunpack.c.h.b16 %v948
        %v1924 = vunpack.c.l.b16 %v949
        %v1925 = vunpack.c.h.b16 %v949
        %v1926 = vunpack.c.l.b16 %v950
        %v1927 = vunpack.c.h.b16 %v950
        %v1928 = vunpack.c.l.b16 %v951
        %v1929 = vunpack.c.h.b16 %v951
        %v1930 = vunpack.c.l.b16 %v952
        %v1931 = vunpack.c.h.b16 %v952
        %v1932 = vunpack.c.l.b16 %v953
        %v1933 = vunpack.c.h.b16 %v953
        %v1934 = vunpack.c.l.b16 %v954
        %v1935 = vunpack.c.h.b16 %v954
        %v1936 = vunpack.c.l.b16 %v955
        %v1937 = vunpack.c.h.b16 %v955
        %v1938 = vunpack.c.l.b16 %v956
        %v1939 = vunpack.c.h.b16 %v956
        %v1940 = vunpack.c.l.b16 %v957
        %v1941 = vunpack.c.h.b16 %v957
        %v1942 = vunpack.c.l.b16 %v958
        %v1943 = vunpack.c.h.b16 %v958
        %v1944 = vunpack.c.l.b16 %v959
        %v1945 = vunpack.c.h.b16 %v959
        %v1946 = vunpack.c.l.b16 %v960
        %v1947 = vunpack.c.h.b16 %v960
        %v1948 = vunpack.c.l.b16 %v961
        %v1949 = vunpack.c.h.b16 %v961
        %v1950 = vunpack.c.l.b16 %v962
        %v1951 = vunpack.c.h.b16 %v962
        %v1952 = vunpack.c.l.b16 %v963
        %v1953 = vunpack.c.h.b16 %v963
        %v1954 = vunpack.c.l.b16 %v964
        %v1955 = vunpack.c.h.b16 %v964
        %v1956 = vunpack.c.l.b16 %v965
        %v1957 = vunpack.c.h.b16 %v965
        %v1958 = vunpack.c.l.b16 %v966
        %v1959 = vunpack.c.h.b16 %v966
        %v1960 = vunpack.c.l.b16 %v967
        %v1961 = vunpack.c.h.b16 %v967
        %v1962 = vunpack.c.l.b16 %v968
        %v1963 = vunpack.c.h.b16 %v968
        %v1964 = vunpack.c.l.b16 %v969
        %v1965 = vunpack.c.h.b16 %v969
        %v1966 = vunpack.c.l.b16 %v970
        %v1967 = vunpack.c.h.b16 %v970
        %v1968 = vunpack.c.l.b16 %v971
        %v1969 = vunpack.c.h.b16 %v971
        %v1970 = vunpack.c.l.b16 %v972
        %v1971 = vunpack.c.h.b16 %v972
        %v1972 = vunpack.c.l.b16 %v973
        %v1973 = vunpack.c.h.b16 %v973
        %v1974 = vunpack.c.l.b16 %v974
        %v1975 = vunpack.c.h.b16 %v974
        %v1976 = vunpack.c.l.b16 %v975
        %v1977 = vunpack.c.h.b16 %v975
        %v1978 = vunpack.c.l.b16 %v976
        %v1979 = vunpack.c.h.b16 %v976
        %v1980 = vunpack.c.l.b16 %v977
        %v1981 = vunpack.c.h.b16 %v977
        %v1982 = vunpack.c.l.b16 %v978
        %v1983 = vunpack.c.h.b16 %v978
        %v1984 = vunpack.c.l.b16 %v979
        %v1985 = vunpack.c.h.b16 %v979
        %v1986 = vunpack.c.l.b16 %v980
        %v1987 = vunpack.c.h.b16 %v980
        %v1988 = vunpack.c.l.b16 %v981
        %v1989 = vunpack.c.h.b16 %v981
        %v1990 = vunpack.c.l.b16 %v982
        %v1991 = vunpack.c.h.b16 %v982
        %v1992 = vunpack.c.l.b16 %v983
        %v1993 = vunpack.c.h.b16 %v983
        %v1994 = vunpack.c.l.b16 %v984
        %v1995 = vunpack.c.h.b16 %v984
        %v1996 = vunpack.c.l.b16 %v985
        %v1997 = vunpack.c.h.b16 %v985
        %v1998 = vunpack.c.l.b16 %v986
        %v1999 = vunpack.c.h.b16 %v986
        %v2000 = vunpack.c.l.b16 %v987
        %v2001 = vunpack.c.h.b16 %v987
        %v2002 = vunpack.c.l.b16 %v988
        %v2003 = vunpack.c.h.b16 %v988
        %v2004 = vunpack.c.l.b16 %v989
        %v2005 = vunpack.c.h.b16 %v989
        %v2006 = vunpack.c.l.b16 %v990
        %v2007 = vunpack.c.h.b16 %v990
        %v2008 = vunpack.c.l.b16 %v991
        %v2009 = vunpack.c.h.b16 %v991
        %v2010 = vunpack.c.l.b16 %v992
        %v2011 = vunpack.c.h.b16 %v992
        %v2012 = vunpack.c.l.b16 %v993
        %v2013 = vunpack.c.h.b16 %v993
        %v2014 = vunpack.c.l.b16 %v994
        %v2015 = vunpack.c.h.b16 %v994
        %v2016 = vunpack.c.l.b16 %v995
        %v2017 = vunpack.c.h.b16 %v995
        %v2018 = vunpack.c.l.b16 %v996
        %v2019 = vunpack.c.h.b16 %v996
        %v2020 = vunpack.c.l.b16 %v997
        %v2021 = vunpack.c.h.b16 %v997
        %v2022 = vpack.c.b16 %v1770, %v1766
        %v2023 = vpack.c.b16 %v1771, %v1767
        %v2024 = vpack.c.b16 %v1772, %v1768
        %v2025 = vpack.c.b16 %v1773, %v1769
        %v2026 = vpack.c.b16 %v1778, %v1774
        %v2027 = vpack.c.b16 %v1779, %v1775
        %v2028 = vpack.c.b16 %v1780, %v1776
        %v2029 = vpack.c.b16 %v1781, %v1777
        %v2030 = vpack.c.b16 %v1786, %v1782
        %v2031 = vpack.c.b16 %v1787, %v1783
        %v2032 = vpack.c.b16 %v1788, %v1784
        %v2033 = vpack.c.b16 %v1789, %v1785
        %v2034 = vpack.c.b16 %v1794, %v1790
        %v2035 = vpack.c.b16 %v1795, %v1791
        %v2036 = vpack.c.b16 %v1796, %v1792
        %v2037 = vpack.c.b16 %v1797, %v1793
        %v2038 = vpack.c.b16 %v1802, %v1798
        %v2039 = vpack.c.b16 %v1803, %v1799
        %v2040 = vpack.c.b16 %v1804, %v1800
        %v2041 = vpack.c.b16 %v1805, %v1801
        %v2042 = vpack.c.b16 %v1810, %v1806
        %v2043 = vpack.c.b16 %v1811, %v1807
        %v2044 = vpack.c.b16 %v1812, %v1808
        %v2045 = vpack.c.b16 %v1813, %v1809
        %v2046 = vpack.c.b16 %v1818, %v1814
        %v2047 = vpack.c.b16 %v1819, %v1815
        %v2048 = vpack.c.b16 %v1820, %v1816
        %v2049 = vpack.c.b16 %v1821, %v1817
        %v2050 = vpack.c.b16 %v1826, %v1822
        %v2051 = vpack.c.b16 %v1827, %v1823
        %v2052 = vpack.c.b16 %v1828, %v1824
        %v2053 = vpack.c.b16 %v1829, %v1825
        %v2054 = vpack.c.b16 %v1834, %v1830
        %v2055 = vpack.c.b16 %v1835, %v1831
        %v2056 = vpack.c.b16 %v1836, %v1832
        %v2057 = vpack.c.b16 %v1837, %v1833
        %v2058 = vpack.c.b16 %v1842, %v1838
        %v2059 = vpack.c.b16 %v1843, %v1839
        %v2060 = vpack.c.b16 %v1844, %v1840
        %v2061 = vpack.c.b16 %v1845, %v1841
        %v2062 = vpack.c.b16 %v1850, %v1846
        %v2063 = vpack.c.b16 %v1851, %v1847
        %v2064 = vpack.c.b16 %v1852, %v1848
        %v2065 = vpack.c.b16 %v1853, %v1849
        %v2066 = vpack.c.b16 %v1858, %v1854
        %v2067 = vpack.c.b16 %v1859, %v1855
        %v2068 = vpack.c.b16 %v1860, %v1856
        %v2069 = vpack.c.b16 %v1861, %v1857
        %v2070 = vpack.c.b16 %v1866, %v1862
        %v2071 = vpack.c.b16 %v1867, %v1863
        %v2072 = vpack.c.b16 %v1868, %v1864
        %v2073 = vpack.c.b16 %v1869, %v1865
        %v2074 = vpack.c.b16 %v1874, %v1870
        %v2075 = vpack.c.b16 %v1875, %v1871
        %v2076 = vpack.c.b16 %v1876, %v1872
        %v2077 = vpack.c.b16 %v1877, %v1873
        %v2078 = vpack.c.b16 %v1882, %v1878
        %v2079 = vpack.c.b16 %v1883, %v1879
        %v2080 = vpack.c.b16 %v1884, %v1880
        %v2081 = vpack.c.b16 %v1885, %v1881
        %v2082 = vpack.c.b16 %v1890, %v1886
        %v2083 = vpack.c.b16 %v1891, %v1887
        %v2084 = vpack.c.b16 %v1892, %v1888
        %v2085 = vpack.c.b16 %v1893, %v1889
        %v2086 = vpack.c.b16 %v1898, %v1894
        %v2087 = vpack.c.b16 %v1899, %v1895
        %v2088 = vpack.c.b16 %v1900, %v1896
        %v2089 = vpack.c.b16 %v1901, %v1897
        %v2090 = vpack.c.b16 %v1906, %v1902
        %v2091 = vpack.c.b16 %v1907, %v1903
        %v2092 = vpack.c.b16 %v1908, %v1904
        %v2093 = vpack.c.b16 %v1909, %v1905
        %v2094 = vpack.c.b16 %v1914, %v1910
        %v2095 = vpack.c.b16 %v1915, %v1911
        %v2096 = vpack.c.b16 %v1916, %v1912
        %v2097 = vpack.c.b16 %v1917, %v1913
        %v2098 = vpack.c.b16 %v1922, %v1918
        %v2099 = vpack.c.b16 %v1923, %v1919
        %v2100 = vpack.c.b16 %v1924, %v1920
        %v2101 = vpack.c.b16 %v1925, %v1921
        %v2102 = vpack.c.b16 %v1930, %v1926
        %v2103 = vpack.c.b16 %v1931, %v1927
        %v2104 = vpack.c.b16 %v1932, %v1928
        %v2105 = vpack.c.b16 %v1933, %v1929
        %v2106 = vpack.c.b16 %v1938, %v1934
        %v2107 = vpack.c.b16 %v1939, %v1935
        %v2108 = vpack.c.b16 %v1940, %v1936
        %v2109 = vpack.c.b16 %v1941, %v1937
        %v2110 = vpack.c.b16 %v1946, %v1942
        %v2111 = vpack.c.b16 %v1947, %v1943
        %v2112 = vpack.c.b16 %v1948, %v1944
        %v2113 = vpack.c.b16 %v1949, %v1945
        %v2114 = vpack.c.b16 %v1954, %v1950
        %v2115 = vpack.c.b16 %v1955, %v1951
        %v2116 = vpack.c.b16 %v1956, %v1952
        %v2117 = vpack.c.b16 %v1957, %v1953
        %v2118 = vpack.c.b16 %v1962, %v1958
        %v2119 = vpack.c.b16 %v1963, %v1959
        %v2120 = vpack.c.b16 %v1964, %v1960
        %v2121 = vpack.c.b16 %v1965, %v1961
        %v2122 = vpack.c.b16 %v1970, %v1966
        %v2123 = vpack.c.b16 %v1971, %v1967
        %v2124 = vpack.c.b16 %v1972, %v1968
        %v2125 = vpack.c.b16 %v1973, %v1969
        %v2126 = vpack.c.b16 %v1978, %v1974
        %v2127 = vpack.c.b16 %v1979, %v1975
        %v2128 = vpack.c.b16 %v1980, %v1976
        %v2129 = vpack.c.b16 %v1981, %v1977
        %v2130 = vpack.c.b16 %v1986, %v1982
        %v2131 = vpack.c.b16 %v1987, %v1983
        %v2132 = vpack.c.b16 %v1988, %v1984
        %v2133 = vpack.c.b16 %v1989, %v1985
        %v2134 = vpack.c.b16 %v1994, %v1990
        %v2135 = vpack.c.b16 %v1995, %v1991
        %v2136 = vpack.c.b16 %v1996, %v1992
        %v2137 = vpack.c.b16 %v1997, %v1993
        %v2138 = vpack.c.b16 %v2002, %v1998
        %v2139 = vpack.c.b16 %v2003, %v1999
        %v2140 = vpack.c.b16 %v2004, %v2000
        %v2141 = vpack.c.b16 %v2005, %v2001
        %v2142 = vpack.c.b16 %v2010, %v2006
        %v2143 = vpack.c.b16 %v2011, %v2007
        %v2144 = vpack.c.b16 %v2012, %v2008
        %v2145 = vpack.c.b16 %v2013, %v2009
        %v2146 = vpack.c.b16 %v2018, %v2014
        %v2147 = vpack.c.b16 %v2019, %v2015
        %v2148 = vpack.c.b16 %v2020, %v2016
        %v2149 = vpack.c.b16 %v2021, %v2017
        %2278 = vmatpush.bf16.msra.mxu0 %v2050
        %2279 = vmatpush.bf16.msra.mxu0 %v2046
        %2280 = vmatpush.bf16.msra.mxu0 %v2042
        %2281 = vmatpush.bf16.msra.mxu0 %v2038
        %2282 = vmatpush.bf16.msra.mxu0 %v2034
        %2283 = vmatpush.bf16.msra.mxu0 %v2030
        %2284 = vmatpush.bf16.msra.mxu0 %v2026
        %2285 = vmatpush.bf16.msra.mxu0 %v2022
        %2286 = vmatmul.bf16.gmra.mxu0 %v1382
        %v2287 = vpop.f32.mrf.mxu0
        %v2288 = vadd.f32 0.0, %v2287
        %v2289 = vpop.f32.mrf.mxu0
        %v2290 = vadd.f32 0.0, %v2289
        %2291 = vmatmul.bf16.gmra.mxu0 %v1386
        %v2292 = vpop.f32.mrf.mxu0
        %v2293 = vadd.f32 0.0, %v2292
        %v2294 = vpop.f32.mrf.mxu0
        %v2295 = vadd.f32 0.0, %v2294
        %2296 = vmatmul.bf16.gmra.mxu0 %v1390
        %v2297 = vpop.f32.mrf.mxu0
        %v2298 = vadd.f32 0.0, %v2297
        %v2299 = vpop.f32.mrf.mxu0
        %v2300 = vadd.f32 0.0, %v2299
        %2301 = vmatmul.bf16.gmra.mxu0 %v1394
        %v2302 = vpop.f32.mrf.mxu0
        %v2303 = vadd.f32 0.0, %v2302
        %v2304 = vpop.f32.mrf.mxu0
        %v2305 = vadd.f32 0.0, %v2304
        %2306 = vmatmul.bf16.gmra.mxu0 %v1398
        %v2307 = vpop.f32.mrf.mxu0
        %v2308 = vadd.f32 0.0, %v2307
        %v2309 = vpop.f32.mrf.mxu0
        %v2310 = vadd.f32 0.0, %v2309
        %2311 = vmatmul.bf16.gmra.mxu0 %v1402
        %v2312 = vpop.f32.mrf.mxu0
        %v2313 = vadd.f32 0.0, %v2312
        %v2314 = vpop.f32.mrf.mxu0
        %v2315 = vadd.f32 0.0, %v2314
        %2316 = vmatmul.bf16.gmra.mxu0 %v1406
        %v2317 = vpop.f32.mrf.mxu0
        %v2318 = vadd.f32 0.0, %v2317
        %v2319 = vpop.f32.mrf.mxu0
        %v2320 = vadd.f32 0.0, %v2319
        %2321 = vmatmul.bf16.gmra.mxu0 %v1410
        %v2322 = vpop.f32.mrf.mxu0
        %v2323 = vadd.f32 0.0, %v2322
        %v2324 = vpop.f32.mrf.mxu0
        %v2325 = vadd.f32 0.0, %v2324
        %2326 = vmatmul.bf16.gmra.mxu0 %v1414
        %v2327 = vpop.f32.mrf.mxu0
        %v2328 = vadd.f32 0.0, %v2327
        %v2329 = vpop.f32.mrf.mxu0
        %v2330 = vadd.f32 0.0, %v2329
        %2331 = vmatmul.bf16.gmra.mxu0 %v1418
        %v2332 = vpop.f32.mrf.mxu0
        %v2333 = vadd.f32 0.0, %v2332
        %v2334 = vpop.f32.mrf.mxu0
        %v2335 = vadd.f32 0.0, %v2334
        %2336 = vmatmul.bf16.gmra.mxu0 %v1422
        %v2337 = vpop.f32.mrf.mxu0
        %v2338 = vadd.f32 0.0, %v2337
        %v2339 = vpop.f32.mrf.mxu0
        %v2340 = vadd.f32 0.0, %v2339
        %2341 = vmatmul.bf16.gmra.mxu0 %v1426
        %v2342 = vpop.f32.mrf.mxu0
        %v2343 = vadd.f32 0.0, %v2342
        %v2344 = vpop.f32.mrf.mxu0
        %v2345 = vadd.f32 0.0, %v2344
        %2346 = vmatmul.bf16.gmra.mxu0 %v1430
        %v2347 = vpop.f32.mrf.mxu0
        %v2348 = vadd.f32 0.0, %v2347
        %v2349 = vpop.f32.mrf.mxu0
        %v2350 = vadd.f32 0.0, %v2349
        %2351 = vmatmul.bf16.gmra.mxu0 %v1434
        %v2352 = vpop.f32.mrf.mxu0
        %v2353 = vadd.f32 0.0, %v2352
        %v2354 = vpop.f32.mrf.mxu0
        %v2355 = vadd.f32 0.0, %v2354
        %2356 = vmatmul.bf16.gmra.mxu0 %v1438
        %v2357 = vpop.f32.mrf.mxu0
        %v2358 = vadd.f32 0.0, %v2357
        %v2359 = vpop.f32.mrf.mxu0
        %v2360 = vadd.f32 0.0, %v2359
        %2361 = vmatmul.bf16.gmra.mxu0 %v1442
        %v2362 = vpop.f32.mrf.mxu0
        %v2363 = vadd.f32 0.0, %v2362
        %v2364 = vpop.f32.mrf.mxu0
        %v2365 = vadd.f32 0.0, %v2364
        %2366 = vmatmul.bf16.gmra.mxu0 %v1446
        %v2367 = vpop.f32.mrf.mxu0
        %v2368 = vadd.f32 0.0, %v2367
        %v2369 = vpop.f32.mrf.mxu0
        %v2370 = vadd.f32 0.0, %v2369
        %2371 = vmatmul.bf16.gmra.mxu0 %v1450
        %v2372 = vpop.f32.mrf.mxu0
        %v2373 = vadd.f32 0.0, %v2372
        %v2374 = vpop.f32.mrf.mxu0
        %v2375 = vadd.f32 0.0, %v2374
        %2376 = vmatmul.bf16.gmra.mxu0 %v1454
        %v2377 = vpop.f32.mrf.mxu0
        %v2378 = vadd.f32 0.0, %v2377
        %v2379 = vpop.f32.mrf.mxu0
        %v2380 = vadd.f32 0.0, %v2379
        %2381 = vmatmul.bf16.gmra.mxu0 %v1458
        %v2382 = vpop.f32.mrf.mxu0
        %v2383 = vadd.f32 0.0, %v2382
        %v2384 = vpop.f32.mrf.mxu0
        %v2385 = vadd.f32 0.0, %v2384
        %2386 = vmatmul.bf16.gmra.mxu0 %v1462
        %v2387 = vpop.f32.mrf.mxu0
        %v2388 = vadd.f32 0.0, %v2387
        %v2389 = vpop.f32.mrf.mxu0
        %v2390 = vadd.f32 0.0, %v2389
        %2391 = vmatmul.bf16.gmra.mxu0 %v1466
        %v2392 = vpop.f32.mrf.mxu0
        %v2393 = vadd.f32 0.0, %v2392
        %v2394 = vpop.f32.mrf.mxu0
        %v2395 = vadd.f32 0.0, %v2394
        %2396 = vmatmul.bf16.gmra.mxu0 %v1470
        %v2397 = vpop.f32.mrf.mxu0
        %v2398 = vadd.f32 0.0, %v2397
        %v2399 = vpop.f32.mrf.mxu0
        %v2400 = vadd.f32 0.0, %v2399
        %2401 = vmatmul.bf16.gmra.mxu0 %v1474
        %v2402 = vpop.f32.mrf.mxu0
        %v2403 = vadd.f32 0.0, %v2402
        %v2404 = vpop.f32.mrf.mxu0
        %v2405 = vadd.f32 0.0, %v2404
        %2406 = vmatmul.bf16.gmra.mxu0 %v1478
        %v2407 = vpop.f32.mrf.mxu0
        %v2408 = vadd.f32 0.0, %v2407
        %v2409 = vpop.f32.mrf.mxu0
        %v2410 = vadd.f32 0.0, %v2409
        %2411 = vmatmul.bf16.gmra.mxu0 %v1482
        %v2412 = vpop.f32.mrf.mxu0
        %v2413 = vadd.f32 0.0, %v2412
        %v2414 = vpop.f32.mrf.mxu0
        %v2415 = vadd.f32 0.0, %v2414
        %2416 = vmatmul.bf16.gmra.mxu0 %v1486
        %v2417 = vpop.f32.mrf.mxu0
        %v2418 = vadd.f32 0.0, %v2417
        %v2419 = vpop.f32.mrf.mxu0
        %v2420 = vadd.f32 0.0, %v2419
        %2421 = vmatmul.bf16.gmra.mxu0 %v1490
        %v2422 = vpop.f32.mrf.mxu0
        %v2423 = vadd.f32 0.0, %v2422
        %v2424 = vpop.f32.mrf.mxu0
        %v2425 = vadd.f32 0.0, %v2424
        %2426 = vmatmul.bf16.gmra.mxu0 %v1494
        %v2427 = vpop.f32.mrf.mxu0
        %v2428 = vadd.f32 0.0, %v2427
        %v2429 = vpop.f32.mrf.mxu0
        %v2430 = vadd.f32 0.0, %v2429
        %2431 = vmatmul.bf16.gmra.mxu0 %v1498
        %v2432 = vpop.f32.mrf.mxu0
        %v2433 = vadd.f32 0.0, %v2432
        %v2434 = vpop.f32.mrf.mxu0
        %v2435 = vadd.f32 0.0, %v2434
        %2436 = vmatmul.bf16.gmra.mxu0 %v1502
        %v2437 = vpop.f32.mrf.mxu0
        %v2438 = vadd.f32 0.0, %v2437
        %v2439 = vpop.f32.mrf.mxu0
        %v2440 = vadd.f32 0.0, %v2439
        %2441 = vmatmul.bf16.gmra.mxu0 %v1506
        %v2442 = vpop.f32.mrf.mxu0
        %v2443 = vadd.f32 0.0, %v2442
        %v2444 = vpop.f32.mrf.mxu0
        %v2445 = vadd.f32 0.0, %v2444
        %2446 = vdwg.mxu0
        %2447 = vmatpush.bf16.msra.mxu0 %v2082
        %2448 = vmatpush.bf16.msra.mxu0 %v2078
        %2449 = vmatpush.bf16.msra.mxu0 %v2074
        %2450 = vmatpush.bf16.msra.mxu0 %v2070
        %2451 = vmatpush.bf16.msra.mxu0 %v2066
        %2452 = vmatpush.bf16.msra.mxu0 %v2062
        %2453 = vmatpush.bf16.msra.mxu0 %v2058
        %2454 = vmatpush.bf16.msra.mxu0 %v2054
        %2455 = vmatmul.bf16.gmra.mxu0 %v1383
        %v2456 = vpop.f32.mrf.mxu0
        %v2457 = vadd.f32 %v2288, %v2456
        %v2458 = vpop.f32.mrf.mxu0
        %v2459 = vadd.f32 %v2290, %v2458
        %2460 = vmatmul.bf16.gmra.mxu0 %v1387
        %v2461 = vpop.f32.mrf.mxu0
        %v2462 = vadd.f32 %v2293, %v2461
        %v2463 = vpop.f32.mrf.mxu0
        %v2464 = vadd.f32 %v2295, %v2463
        %2465 = vmatmul.bf16.gmra.mxu0 %v1391
        %v2466 = vpop.f32.mrf.mxu0
        %v2467 = vadd.f32 %v2298, %v2466
        %v2468 = vpop.f32.mrf.mxu0
        %v2469 = vadd.f32 %v2300, %v2468
        %2470 = vmatmul.bf16.gmra.mxu0 %v1395
        %v2471 = vpop.f32.mrf.mxu0
        %v2472 = vadd.f32 %v2303, %v2471
        %v2473 = vpop.f32.mrf.mxu0
        %v2474 = vadd.f32 %v2305, %v2473
        %2475 = vmatmul.bf16.gmra.mxu0 %v1399
        %v2476 = vpop.f32.mrf.mxu0
        %v2477 = vadd.f32 %v2308, %v2476
        %v2478 = vpop.f32.mrf.mxu0
        %v2479 = vadd.f32 %v2310, %v2478
        %2480 = vmatmul.bf16.gmra.mxu0 %v1403
        %v2481 = vpop.f32.mrf.mxu0
        %v2482 = vadd.f32 %v2313, %v2481
        %v2483 = vpop.f32.mrf.mxu0
        %v2484 = vadd.f32 %v2315, %v2483
        %2485 = vmatmul.bf16.gmra.mxu0 %v1407
        %v2486 = vpop.f32.mrf.mxu0
        %v2487 = vadd.f32 %v2318, %v2486
        %v2488 = vpop.f32.mrf.mxu0
        %v2489 = vadd.f32 %v2320, %v2488
        %2490 = vmatmul.bf16.gmra.mxu0 %v1411
        %v2491 = vpop.f32.mrf.mxu0
        %v2492 = vadd.f32 %v2323, %v2491
        %v2493 = vpop.f32.mrf.mxu0
        %v2494 = vadd.f32 %v2325, %v2493
        %2495 = vmatmul.bf16.gmra.mxu0 %v1415
        %v2496 = vpop.f32.mrf.mxu0
        %v2497 = vadd.f32 %v2328, %v2496
        %v2498 = vpop.f32.mrf.mxu0
        %v2499 = vadd.f32 %v2330, %v2498
        %2500 = vmatmul.bf16.gmra.mxu0 %v1419
        %v2501 = vpop.f32.mrf.mxu0
        %v2502 = vadd.f32 %v2333, %v2501
        %v2503 = vpop.f32.mrf.mxu0
        %v2504 = vadd.f32 %v2335, %v2503
        %2505 = vmatmul.bf16.gmra.mxu0 %v1423
        %v2506 = vpop.f32.mrf.mxu0
        %v2507 = vadd.f32 %v2338, %v2506
        %v2508 = vpop.f32.mrf.mxu0
        %v2509 = vadd.f32 %v2340, %v2508
        %2510 = vmatmul.bf16.gmra.mxu0 %v1427
        %v2511 = vpop.f32.mrf.mxu0
        %v2512 = vadd.f32 %v2343, %v2511
        %v2513 = vpop.f32.mrf.mxu0
        %v2514 = vadd.f32 %v2345, %v2513
        %2515 = vmatmul.bf16.gmra.mxu0 %v1431
        %v2516 = vpop.f32.mrf.mxu0
        %v2517 = vadd.f32 %v2348, %v2516
        %v2518 = vpop.f32.mrf.mxu0
        %v2519 = vadd.f32 %v2350, %v2518
        %2520 = vmatmul.bf16.gmra.mxu0 %v1435
        %v2521 = vpop.f32.mrf.mxu0
        %v2522 = vadd.f32 %v2353, %v2521
        %v2523 = vpop.f32.mrf.mxu0
        %v2524 = vadd.f32 %v2355, %v2523
        %2525 = vmatmul.bf16.gmra.mxu0 %v1439
        %v2526 = vpop.f32.mrf.mxu0
        %v2527 = vadd.f32 %v2358, %v2526
        %v2528 = vpop.f32.mrf.mxu0
        %v2529 = vadd.f32 %v2360, %v2528
        %2530 = vmatmul.bf16.gmra.mxu0 %v1443
        %v2531 = vpop.f32.mrf.mxu0
        %v2532 = vadd.f32 %v2363, %v2531
        %v2533 = vpop.f32.mrf.mxu0
        %v2534 = vadd.f32 %v2365, %v2533
        %2535 = vmatmul.bf16.gmra.mxu0 %v1447
        %v2536 = vpop.f32.mrf.mxu0
        %v2537 = vadd.f32 %v2368, %v2536
        %v2538 = vpop.f32.mrf.mxu0
        %v2539 = vadd.f32 %v2370, %v2538
        %2540 = vmatmul.bf16.gmra.mxu0 %v1451
        %v2541 = vpop.f32.mrf.mxu0
        %v2542 = vadd.f32 %v2373, %v2541
        %v2543 = vpop.f32.mrf.mxu0
        %v2544 = vadd.f32 %v2375, %v2543
        %2545 = vmatmul.bf16.gmra.mxu0 %v1455
        %v2546 = vpop.f32.mrf.mxu0
        %v2547 = vadd.f32 %v2378, %v2546
        %v2548 = vpop.f32.mrf.mxu0
        %v2549 = vadd.f32 %v2380, %v2548
        %2550 = vmatmul.bf16.gmra.mxu0 %v1459
        %v2551 = vpop.f32.mrf.mxu0
        %v2552 = vadd.f32 %v2383, %v2551
        %v2553 = vpop.f32.mrf.mxu0
        %v2554 = vadd.f32 %v2385, %v2553
        %2555 = vmatmul.bf16.gmra.mxu0 %v1463
        %v2556 = vpop.f32.mrf.mxu0
        %v2557 = vadd.f32 %v2388, %v2556
        %v2558 = vpop.f32.mrf.mxu0
        %v2559 = vadd.f32 %v2390, %v2558
        %2560 = vmatmul.bf16.gmra.mxu0 %v1467
        %v2561 = vpop.f32.mrf.mxu0
        %v2562 = vadd.f32 %v2393, %v2561
        %v2563 = vpop.f32.mrf.mxu0
        %v2564 = vadd.f32 %v2395, %v2563
        %2565 = vmatmul.bf16.gmra.mxu0 %v1471
        %v2566 = vpop.f32.mrf.mxu0
        %v2567 = vadd.f32 %v2398, %v2566
        %v2568 = vpop.f32.mrf.mxu0
        %v2569 = vadd.f32 %v2400, %v2568
        %2570 = vmatmul.bf16.gmra.mxu0 %v1475
        %v2571 = vpop.f32.mrf.mxu0
        %v2572 = vadd.f32 %v2403, %v2571
        %v2573 = vpop.f32.mrf.mxu0
        %v2574 = vadd.f32 %v2405, %v2573
        %2575 = vmatmul.bf16.gmra.mxu0 %v1479
        %v2576 = vpop.f32.mrf.mxu0
        %v2577 = vadd.f32 %v2408, %v2576
        %v2578 = vpop.f32.mrf.mxu0
        %v2579 = vadd.f32 %v2410, %v2578
        %2580 = vmatmul.bf16.gmra.mxu0 %v1483
        %v2581 = vpop.f32.mrf.mxu0
        %v2582 = vadd.f32 %v2413, %v2581
        %v2583 = vpop.f32.mrf.mxu0
        %v2584 = vadd.f32 %v2415, %v2583
        %2585 = vmatmul.bf16.gmra.mxu0 %v1487
        %v2586 = vpop.f32.mrf.mxu0
        %v2587 = vadd.f32 %v2418, %v2586
        %v2588 = vpop.f32.mrf.mxu0
        %v2589 = vadd.f32 %v2420, %v2588
        %2590 = vmatmul.bf16.gmra.mxu0 %v1491
        %v2591 = vpop.f32.mrf.mxu0
        %v2592 = vadd.f32 %v2423, %v2591
        %v2593 = vpop.f32.mrf.mxu0
        %v2594 = vadd.f32 %v2425, %v2593
        %2595 = vmatmul.bf16.gmra.mxu0 %v1495
        %v2596 = vpop.f32.mrf.mxu0
        %v2597 = vadd.f32 %v2428, %v2596
        %v2598 = vpop.f32.mrf.mxu0
        %v2599 = vadd.f32 %v2430, %v2598
        %2600 = vmatmul.bf16.gmra.mxu0 %v1499
        %v2601 = vpop.f32.mrf.mxu0
        %v2602 = vadd.f32 %v2433, %v2601
        %v2603 = vpop.f32.mrf.mxu0
        %v2604 = vadd.f32 %v2435, %v2603
        %2605 = vmatmul.bf16.gmra.mxu0 %v1503
        %v2606 = vpop.f32.mrf.mxu0
        %v2607 = vadd.f32 %v2438, %v2606
        %v2608 = vpop.f32.mrf.mxu0
        %v2609 = vadd.f32 %v2440, %v2608
        %2610 = vmatmul.bf16.gmra.mxu0 %v1507
        %v2611 = vpop.f32.mrf.mxu0
        %v2612 = vadd.f32 %v2443, %v2611
        %v2613 = vpop.f32.mrf.mxu0
        %v2614 = vadd.f32 %v2445, %v2613
        %2615 = vdwg.mxu0
        %2616 = vmatpush.bf16.msra.mxu0 %v2114
        %2617 = vmatpush.bf16.msra.mxu0 %v2110
        %2618 = vmatpush.bf16.msra.mxu0 %v2106
        %2619 = vmatpush.bf16.msra.mxu0 %v2102
        %2620 = vmatpush.bf16.msra.mxu0 %v2098
        %2621 = vmatpush.bf16.msra.mxu0 %v2094
        %2622 = vmatpush.bf16.msra.mxu0 %v2090
        %2623 = vmatpush.bf16.msra.mxu0 %v2086
        %2624 = vmatmul.bf16.gmra.mxu0 %v1384
        %v2625 = vpop.f32.mrf.mxu0
        %v2626 = vadd.f32 %v2457, %v2625
        %v2627 = vpop.f32.mrf.mxu0
        %v2628 = vadd.f32 %v2459, %v2627
        %2629 = vmatmul.bf16.gmra.mxu0 %v1388
        %v2630 = vpop.f32.mrf.mxu0
        %v2631 = vadd.f32 %v2462, %v2630
        %v2632 = vpop.f32.mrf.mxu0
        %v2633 = vadd.f32 %v2464, %v2632
        %2634 = vmatmul.bf16.gmra.mxu0 %v1392
        %v2635 = vpop.f32.mrf.mxu0
        %v2636 = vadd.f32 %v2467, %v2635
        %v2637 = vpop.f32.mrf.mxu0
        %v2638 = vadd.f32 %v2469, %v2637
        %2639 = vmatmul.bf16.gmra.mxu0 %v1396
        %v2640 = vpop.f32.mrf.mxu0
        %v2641 = vadd.f32 %v2472, %v2640
        %v2642 = vpop.f32.mrf.mxu0
        %v2643 = vadd.f32 %v2474, %v2642
        %2644 = vmatmul.bf16.gmra.mxu0 %v1400
        %v2645 = vpop.f32.mrf.mxu0
        %v2646 = vadd.f32 %v2477, %v2645
        %v2647 = vpop.f32.mrf.mxu0
        %v2648 = vadd.f32 %v2479, %v2647
        %2649 = vmatmul.bf16.gmra.mxu0 %v1404
        %v2650 = vpop.f32.mrf.mxu0
        %v2651 = vadd.f32 %v2482, %v2650
        %v2652 = vpop.f32.mrf.mxu0
        %v2653 = vadd.f32 %v2484, %v2652
        %2654 = vmatmul.bf16.gmra.mxu0 %v1408
        %v2655 = vpop.f32.mrf.mxu0
        %v2656 = vadd.f32 %v2487, %v2655
        %v2657 = vpop.f32.mrf.mxu0
        %v2658 = vadd.f32 %v2489, %v2657
        %2659 = vmatmul.bf16.gmra.mxu0 %v1412
        %v2660 = vpop.f32.mrf.mxu0
        %v2661 = vadd.f32 %v2492, %v2660
        %v2662 = vpop.f32.mrf.mxu0
        %v2663 = vadd.f32 %v2494, %v2662
        %2664 = vmatmul.bf16.gmra.mxu0 %v1416
        %v2665 = vpop.f32.mrf.mxu0
        %v2666 = vadd.f32 %v2497, %v2665
        %v2667 = vpop.f32.mrf.mxu0
        %v2668 = vadd.f32 %v2499, %v2667
        %2669 = vmatmul.bf16.gmra.mxu0 %v1420
        %v2670 = vpop.f32.mrf.mxu0
        %v2671 = vadd.f32 %v2502, %v2670
        %v2672 = vpop.f32.mrf.mxu0
        %v2673 = vadd.f32 %v2504, %v2672
        %2674 = vmatmul.bf16.gmra.mxu0 %v1424
        %v2675 = vpop.f32.mrf.mxu0
        %v2676 = vadd.f32 %v2507, %v2675
        %v2677 = vpop.f32.mrf.mxu0
        %v2678 = vadd.f32 %v2509, %v2677
        %2679 = vmatmul.bf16.gmra.mxu0 %v1428
        %v2680 = vpop.f32.mrf.mxu0
        %v2681 = vadd.f32 %v2512, %v2680
        %v2682 = vpop.f32.mrf.mxu0
        %v2683 = vadd.f32 %v2514, %v2682
        %2684 = vmatmul.bf16.gmra.mxu0 %v1432
        %v2685 = vpop.f32.mrf.mxu0
        %v2686 = vadd.f32 %v2517, %v2685
        %v2687 = vpop.f32.mrf.mxu0
        %v2688 = vadd.f32 %v2519, %v2687
        %2689 = vmatmul.bf16.gmra.mxu0 %v1436
        %v2690 = vpop.f32.mrf.mxu0
        %v2691 = vadd.f32 %v2522, %v2690
        %v2692 = vpop.f32.mrf.mxu0
        %v2693 = vadd.f32 %v2524, %v2692
        %2694 = vmatmul.bf16.gmra.mxu0 %v1440
        %v2695 = vpop.f32.mrf.mxu0
        %v2696 = vadd.f32 %v2527, %v2695
        %v2697 = vpop.f32.mrf.mxu0
        %v2698 = vadd.f32 %v2529, %v2697
        %2699 = vmatmul.bf16.gmra.mxu0 %v1444
        %v2700 = vpop.f32.mrf.mxu0
        %v2701 = vadd.f32 %v2532, %v2700
        %v2702 = vpop.f32.mrf.mxu0
        %v2703 = vadd.f32 %v2534, %v2702
        %2704 = vmatmul.bf16.gmra.mxu0 %v1448
        %v2705 = vpop.f32.mrf.mxu0
        %v2706 = vadd.f32 %v2537, %v2705
        %v2707 = vpop.f32.mrf.mxu0
        %v2708 = vadd.f32 %v2539, %v2707
        %2709 = vmatmul.bf16.gmra.mxu0 %v1452
        %v2710 = vpop.f32.mrf.mxu0
        %v2711 = vadd.f32 %v2542, %v2710
        %v2712 = vpop.f32.mrf.mxu0
        %v2713 = vadd.f32 %v2544, %v2712
        %2714 = vmatmul.bf16.gmra.mxu0 %v1456
        %v2715 = vpop.f32.mrf.mxu0
        %v2716 = vadd.f32 %v2547, %v2715
        %v2717 = vpop.f32.mrf.mxu0
        %v2718 = vadd.f32 %v2549, %v2717
        %2719 = vmatmul.bf16.gmra.mxu0 %v1460
        %v2720 = vpop.f32.mrf.mxu0
        %v2721 = vadd.f32 %v2552, %v2720
        %v2722 = vpop.f32.mrf.mxu0
        %v2723 = vadd.f32 %v2554, %v2722
        %2724 = vmatmul.bf16.gmra.mxu0 %v1464
        %v2725 = vpop.f32.mrf.mxu0
        %v2726 = vadd.f32 %v2557, %v2725
        %v2727 = vpop.f32.mrf.mxu0
        %v2728 = vadd.f32 %v2559, %v2727
        %2729 = vmatmul.bf16.gmra.mxu0 %v1468
        %v2730 = vpop.f32.mrf.mxu0
        %v2731 = vadd.f32 %v2562, %v2730
        %v2732 = vpop.f32.mrf.mxu0
        %v2733 = vadd.f32 %v2564, %v2732
        %2734 = vmatmul.bf16.gmra.mxu0 %v1472
        %v2735 = vpop.f32.mrf.mxu0
        %v2736 = vadd.f32 %v2567, %v2735
        %v2737 = vpop.f32.mrf.mxu0
        %v2738 = vadd.f32 %v2569, %v2737
        %2739 = vmatmul.bf16.gmra.mxu0 %v1476
        %v2740 = vpop.f32.mrf.mxu0
        %v2741 = vadd.f32 %v2572, %v2740
        %v2742 = vpop.f32.mrf.mxu0
        %v2743 = vadd.f32 %v2574, %v2742
        %2744 = vmatmul.bf16.gmra.mxu0 %v1480
        %v2745 = vpop.f32.mrf.mxu0
        %v2746 = vadd.f32 %v2577, %v2745
        %v2747 = vpop.f32.mrf.mxu0
        %v2748 = vadd.f32 %v2579, %v2747
        %2749 = vmatmul.bf16.gmra.mxu0 %v1484
        %v2750 = vpop.f32.mrf.mxu0
        %v2751 = vadd.f32 %v2582, %v2750
        %v2752 = vpop.f32.mrf.mxu0
        %v2753 = vadd.f32 %v2584, %v2752
        %2754 = vmatmul.bf16.gmra.mxu0 %v1488
        %v2755 = vpop.f32.mrf.mxu0
        %v2756 = vadd.f32 %v2587, %v2755
        %v2757 = vpop.f32.mrf.mxu0
        %v2758 = vadd.f32 %v2589, %v2757
        %2759 = vmatmul.bf16.gmra.mxu0 %v1492
        %v2760 = vpop.f32.mrf.mxu0
        %v2761 = vadd.f32 %v2592, %v2760
        %v2762 = vpop.f32.mrf.mxu0
        %v2763 = vadd.f32 %v2594, %v2762
        %2764 = vmatmul.bf16.gmra.mxu0 %v1496
        %v2765 = vpop.f32.mrf.mxu0
        %v2766 = vadd.f32 %v2597, %v2765
        %v2767 = vpop.f32.mrf.mxu0
        %v2768 = vadd.f32 %v2599, %v2767
        %2769 = vmatmul.bf16.gmra.mxu0 %v1500
        %v2770 = vpop.f32.mrf.mxu0
        %v2771 = vadd.f32 %v2602, %v2770
        %v2772 = vpop.f32.mrf.mxu0
        %v2773 = vadd.f32 %v2604, %v2772
        %2774 = vmatmul.bf16.gmra.mxu0 %v1504
        %v2775 = vpop.f32.mrf.mxu0
        %v2776 = vadd.f32 %v2607, %v2775
        %v2777 = vpop.f32.mrf.mxu0
        %v2778 = vadd.f32 %v2609, %v2777
        %2779 = vmatmul.bf16.gmra.mxu0 %v1508
        %v2780 = vpop.f32.mrf.mxu0
        %v2781 = vadd.f32 %v2612, %v2780
        %v2782 = vpop.f32.mrf.mxu0
        %v2783 = vadd.f32 %v2614, %v2782
        %2784 = vdwg.mxu0
        %2785 = vmatpush.bf16.msra.mxu0 %v2146
        %2786 = vmatpush.bf16.msra.mxu0 %v2142
        %2787 = vmatpush.bf16.msra.mxu0 %v2138
        %2788 = vmatpush.bf16.msra.mxu0 %v2134
        %2789 = vmatpush.bf16.msra.mxu0 %v2130
        %2790 = vmatpush.bf16.msra.mxu0 %v2126
        %2791 = vmatpush.bf16.msra.mxu0 %v2122
        %2792 = vmatpush.bf16.msra.mxu0 %v2118
        %2793 = vmatmul.bf16.gmra.mxu0 %v1385
        %v2794 = vpop.f32.mrf.mxu0
        %v2795 = vadd.f32 %v2626, %v2794
        %v2796 = vpop.f32.mrf.mxu0
        %v2797 = vadd.f32 %v2628, %v2796
        %2798 = vmatmul.bf16.gmra.mxu0 %v1389
        %v2799 = vpop.f32.mrf.mxu0
        %v2800 = vadd.f32 %v2631, %v2799
        %v2801 = vpop.f32.mrf.mxu0
        %v2802 = vadd.f32 %v2633, %v2801
        %2803 = vmatmul.bf16.gmra.mxu0 %v1393
        %v2804 = vpop.f32.mrf.mxu0
        %v2805 = vadd.f32 %v2636, %v2804
        %v2806 = vpop.f32.mrf.mxu0
        %v2807 = vadd.f32 %v2638, %v2806
        %2808 = vmatmul.bf16.gmra.mxu0 %v1397
        %v2809 = vpop.f32.mrf.mxu0
        %v2810 = vadd.f32 %v2641, %v2809
        %v2811 = vpop.f32.mrf.mxu0
        %v2812 = vadd.f32 %v2643, %v2811
        %2813 = vmatmul.bf16.gmra.mxu0 %v1401
        %v2814 = vpop.f32.mrf.mxu0
        %v2815 = vadd.f32 %v2646, %v2814
        %v2816 = vpop.f32.mrf.mxu0
        %v2817 = vadd.f32 %v2648, %v2816
        %2818 = vmatmul.bf16.gmra.mxu0 %v1405
        %v2819 = vpop.f32.mrf.mxu0
        %v2820 = vadd.f32 %v2651, %v2819
        %v2821 = vpop.f32.mrf.mxu0
        %v2822 = vadd.f32 %v2653, %v2821
        %2823 = vmatmul.bf16.gmra.mxu0 %v1409
        %v2824 = vpop.f32.mrf.mxu0
        %v2825 = vadd.f32 %v2656, %v2824
        %v2826 = vpop.f32.mrf.mxu0
        %v2827 = vadd.f32 %v2658, %v2826
        %2828 = vmatmul.bf16.gmra.mxu0 %v1413
        %v2829 = vpop.f32.mrf.mxu0
        %v2830 = vadd.f32 %v2661, %v2829
        %v2831 = vpop.f32.mrf.mxu0
        %v2832 = vadd.f32 %v2663, %v2831
        %2833 = vmatmul.bf16.gmra.mxu0 %v1417
        %v2834 = vpop.f32.mrf.mxu0
        %v2835 = vadd.f32 %v2666, %v2834
        %v2836 = vpop.f32.mrf.mxu0
        %v2837 = vadd.f32 %v2668, %v2836
        %2838 = vmatmul.bf16.gmra.mxu0 %v1421
        %v2839 = vpop.f32.mrf.mxu0
        %v2840 = vadd.f32 %v2671, %v2839
        %v2841 = vpop.f32.mrf.mxu0
        %v2842 = vadd.f32 %v2673, %v2841
        %2843 = vmatmul.bf16.gmra.mxu0 %v1425
        %v2844 = vpop.f32.mrf.mxu0
        %v2845 = vadd.f32 %v2676, %v2844
        %v2846 = vpop.f32.mrf.mxu0
        %v2847 = vadd.f32 %v2678, %v2846
        %2848 = vmatmul.bf16.gmra.mxu0 %v1429
        %v2849 = vpop.f32.mrf.mxu0
        %v2850 = vadd.f32 %v2681, %v2849
        %v2851 = vpop.f32.mrf.mxu0
        %v2852 = vadd.f32 %v2683, %v2851
        %2853 = vmatmul.bf16.gmra.mxu0 %v1433
        %v2854 = vpop.f32.mrf.mxu0
        %v2855 = vadd.f32 %v2686, %v2854
        %v2856 = vpop.f32.mrf.mxu0
        %v2857 = vadd.f32 %v2688, %v2856
        %2858 = vmatmul.bf16.gmra.mxu0 %v1437
        %v2859 = vpop.f32.mrf.mxu0
        %v2860 = vadd.f32 %v2691, %v2859
        %v2861 = vpop.f32.mrf.mxu0
        %v2862 = vadd.f32 %v2693, %v2861
        %2863 = vmatmul.bf16.gmra.mxu0 %v1441
        %v2864 = vpop.f32.mrf.mxu0
        %v2865 = vadd.f32 %v2696, %v2864
        %v2866 = vpop.f32.mrf.mxu0
        %v2867 = vadd.f32 %v2698, %v2866
        %2868 = vmatmul.bf16.gmra.mxu0 %v1445
        %v2869 = vpop.f32.mrf.mxu0
        %v2870 = vadd.f32 %v2701, %v2869
        %v2871 = vpop.f32.mrf.mxu0
        %v2872 = vadd.f32 %v2703, %v2871
        %2873 = vmatmul.bf16.gmra.mxu0 %v1449
        %v2874 = vpop.f32.mrf.mxu0
        %v2875 = vadd.f32 %v2706, %v2874
        %v2876 = vpop.f32.mrf.mxu0
        %v2877 = vadd.f32 %v2708, %v2876
        %2878 = vmatmul.bf16.gmra.mxu0 %v1453
        %v2879 = vpop.f32.mrf.mxu0
        %v2880 = vadd.f32 %v2711, %v2879
        %v2881 = vpop.f32.mrf.mxu0
        %v2882 = vadd.f32 %v2713, %v2881
        %2883 = vmatmul.bf16.gmra.mxu0 %v1457
        %v2884 = vpop.f32.mrf.mxu0
        %v2885 = vadd.f32 %v2716, %v2884
        %v2886 = vpop.f32.mrf.mxu0
        %v2887 = vadd.f32 %v2718, %v2886
        %2888 = vmatmul.bf16.gmra.mxu0 %v1461
        %v2889 = vpop.f32.mrf.mxu0
        %v2890 = vadd.f32 %v2721, %v2889
        %v2891 = vpop.f32.mrf.mxu0
        %v2892 = vadd.f32 %v2723, %v2891
        %2893 = vmatmul.bf16.gmra.mxu0 %v1465
        %v2894 = vpop.f32.mrf.mxu0
        %v2895 = vadd.f32 %v2726, %v2894
        %v2896 = vpop.f32.mrf.mxu0
        %v2897 = vadd.f32 %v2728, %v2896
        %2898 = vmatmul.bf16.gmra.mxu0 %v1469
        %v2899 = vpop.f32.mrf.mxu0
        %v2900 = vadd.f32 %v2731, %v2899
        %v2901 = vpop.f32.mrf.mxu0
        %v2902 = vadd.f32 %v2733, %v2901
        %2903 = vmatmul.bf16.gmra.mxu0 %v1473
        %v2904 = vpop.f32.mrf.mxu0
        %v2905 = vadd.f32 %v2736, %v2904
        %v2906 = vpop.f32.mrf.mxu0
        %v2907 = vadd.f32 %v2738, %v2906
        %2908 = vmatmul.bf16.gmra.mxu0 %v1477
        %v2909 = vpop.f32.mrf.mxu0
        %v2910 = vadd.f32 %v2741, %v2909
        %v2911 = vpop.f32.mrf.mxu0
        %v2912 = vadd.f32 %v2743, %v2911
        %2913 = vmatmul.bf16.gmra.mxu0 %v1481
        %v2914 = vpop.f32.mrf.mxu0
        %v2915 = vadd.f32 %v2746, %v2914
        %v2916 = vpop.f32.mrf.mxu0
        %v2917 = vadd.f32 %v2748, %v2916
        %2918 = vmatmul.bf16.gmra.mxu0 %v1485
        %v2919 = vpop.f32.mrf.mxu0
        %v2920 = vadd.f32 %v2751, %v2919
        %v2921 = vpop.f32.mrf.mxu0
        %v2922 = vadd.f32 %v2753, %v2921
        %2923 = vmatmul.bf16.gmra.mxu0 %v1489
        %v2924 = vpop.f32.mrf.mxu0
        %v2925 = vadd.f32 %v2756, %v2924
        %v2926 = vpop.f32.mrf.mxu0
        %v2927 = vadd.f32 %v2758, %v2926
        %2928 = vmatmul.bf16.gmra.mxu0 %v1493
        %v2929 = vpop.f32.mrf.mxu0
        %v2930 = vadd.f32 %v2761, %v2929
        %v2931 = vpop.f32.mrf.mxu0
        %v2932 = vadd.f32 %v2763, %v2931
        %2933 = vmatmul.bf16.gmra.mxu0 %v1497
        %v2934 = vpop.f32.mrf.mxu0
        %v2935 = vadd.f32 %v2766, %v2934
        %v2936 = vpop.f32.mrf.mxu0
        %v2937 = vadd.f32 %v2768, %v2936
        %2938 = vmatmul.bf16.gmra.mxu0 %v1501
        %v2939 = vpop.f32.mrf.mxu0
        %v2940 = vadd.f32 %v2771, %v2939
        %v2941 = vpop.f32.mrf.mxu0
        %v2942 = vadd.f32 %v2773, %v2941
        %2943 = vmatmul.bf16.gmra.mxu0 %v1505
        %v2944 = vpop.f32.mrf.mxu0
        %v2945 = vadd.f32 %v2776, %v2944
        %v2946 = vpop.f32.mrf.mxu0
        %v2947 = vadd.f32 %v2778, %v2946
        %2948 = vmatmul.bf16.gmra.mxu0 %v1509
        %v2949 = vpop.f32.mrf.mxu0
        %v2950 = vadd.f32 %v2781, %v2949
        %v2951 = vpop.f32.mrf.mxu0
        %v2952 = vadd.f32 %v2783, %v2951
        %2953 = vdwg.mxu0
        %2954 = vmatpush.bf16.msra.mxu0 %v2051
        %2955 = vmatpush.bf16.msra.mxu0 %v2047
        %2956 = vmatpush.bf16.msra.mxu0 %v2043
        %2957 = vmatpush.bf16.msra.mxu0 %v2039
        %2958 = vmatpush.bf16.msra.mxu0 %v2035
        %2959 = vmatpush.bf16.msra.mxu0 %v2031
        %2960 = vmatpush.bf16.msra.mxu0 %v2027
        %2961 = vmatpush.bf16.msra.mxu0 %v2023
        %2962 = vmatmul.bf16.gmra.mxu0 %v1382
        %v2963 = vpop.f32.mrf.mxu0
        %v2964 = vadd.f32 0.0, %v2963
        %v2965 = vpop.f32.mrf.mxu0
        %v2966 = vadd.f32 0.0, %v2965
        %2967 = vmatmul.bf16.gmra.mxu0 %v1386
        %v2968 = vpop.f32.mrf.mxu0
        %v2969 = vadd.f32 0.0, %v2968
        %v2970 = vpop.f32.mrf.mxu0
        %v2971 = vadd.f32 0.0, %v2970
        %2972 = vmatmul.bf16.gmra.mxu0 %v1390
        %v2973 = vpop.f32.mrf.mxu0
        %v2974 = vadd.f32 0.0, %v2973
        %v2975 = vpop.f32.mrf.mxu0
        %v2976 = vadd.f32 0.0, %v2975
        %2977 = vmatmul.bf16.gmra.mxu0 %v1394
        %v2978 = vpop.f32.mrf.mxu0
        %v2979 = vadd.f32 0.0, %v2978
        %v2980 = vpop.f32.mrf.mxu0
        %v2981 = vadd.f32 0.0, %v2980
        %2982 = vmatmul.bf16.gmra.mxu0 %v1398
        %v2983 = vpop.f32.mrf.mxu0
        %v2984 = vadd.f32 0.0, %v2983
        %v2985 = vpop.f32.mrf.mxu0
        %v2986 = vadd.f32 0.0, %v2985
        %2987 = vmatmul.bf16.gmra.mxu0 %v1402
        %v2988 = vpop.f32.mrf.mxu0
        %v2989 = vadd.f32 0.0, %v2988
        %v2990 = vpop.f32.mrf.mxu0
        %v2991 = vadd.f32 0.0, %v2990
        %2992 = vmatmul.bf16.gmra.mxu0 %v1406
        %v2993 = vpop.f32.mrf.mxu0
        %v2994 = vadd.f32 0.0, %v2993
        %v2995 = vpop.f32.mrf.mxu0
        %v2996 = vadd.f32 0.0, %v2995
        %2997 = vmatmul.bf16.gmra.mxu0 %v1410
        %v2998 = vpop.f32.mrf.mxu0
        %v2999 = vadd.f32 0.0, %v2998
        %v3000 = vpop.f32.mrf.mxu0
        %v3001 = vadd.f32 0.0, %v3000
        %3002 = vmatmul.bf16.gmra.mxu0 %v1414
        %v3003 = vpop.f32.mrf.mxu0
        %v3004 = vadd.f32 0.0, %v3003
        %v3005 = vpop.f32.mrf.mxu0
        %v3006 = vadd.f32 0.0, %v3005
        %3007 = vmatmul.bf16.gmra.mxu0 %v1418
        %v3008 = vpop.f32.mrf.mxu0
        %v3009 = vadd.f32 0.0, %v3008
        %v3010 = vpop.f32.mrf.mxu0
        %v3011 = vadd.f32 0.0, %v3010
        %3012 = vmatmul.bf16.gmra.mxu0 %v1422
        %v3013 = vpop.f32.mrf.mxu0
        %v3014 = vadd.f32 0.0, %v3013
        %v3015 = vpop.f32.mrf.mxu0
        %v3016 = vadd.f32 0.0, %v3015
        %3017 = vmatmul.bf16.gmra.mxu0 %v1426
        %v3018 = vpop.f32.mrf.mxu0
        %v3019 = vadd.f32 0.0, %v3018
        %v3020 = vpop.f32.mrf.mxu0
        %v3021 = vadd.f32 0.0, %v3020
        %3022 = vmatmul.bf16.gmra.mxu0 %v1430
        %v3023 = vpop.f32.mrf.mxu0
        %v3024 = vadd.f32 0.0, %v3023
        %v3025 = vpop.f32.mrf.mxu0
        %v3026 = vadd.f32 0.0, %v3025
        %3027 = vmatmul.bf16.gmra.mxu0 %v1434
        %v3028 = vpop.f32.mrf.mxu0
        %v3029 = vadd.f32 0.0, %v3028
        %v3030 = vpop.f32.mrf.mxu0
        %v3031 = vadd.f32 0.0, %v3030
        %3032 = vmatmul.bf16.gmra.mxu0 %v1438
        %v3033 = vpop.f32.mrf.mxu0
        %v3034 = vadd.f32 0.0, %v3033
        %v3035 = vpop.f32.mrf.mxu0
        %v3036 = vadd.f32 0.0, %v3035
        %3037 = vmatmul.bf16.gmra.mxu0 %v1442
        %v3038 = vpop.f32.mrf.mxu0
        %v3039 = vadd.f32 0.0, %v3038
        %v3040 = vpop.f32.mrf.mxu0
        %v3041 = vadd.f32 0.0, %v3040
        %3042 = vmatmul.bf16.gmra.mxu0 %v1446
        %v3043 = vpop.f32.mrf.mxu0
        %v3044 = vadd.f32 0.0, %v3043
        %v3045 = vpop.f32.mrf.mxu0
        %v3046 = vadd.f32 0.0, %v3045
        %3047 = vmatmul.bf16.gmra.mxu0 %v1450
        %v3048 = vpop.f32.mrf.mxu0
        %v3049 = vadd.f32 0.0, %v3048
        %v3050 = vpop.f32.mrf.mxu0
        %v3051 = vadd.f32 0.0, %v3050
        %3052 = vmatmul.bf16.gmra.mxu0 %v1454
        %v3053 = vpop.f32.mrf.mxu0
        %v3054 = vadd.f32 0.0, %v3053
        %v3055 = vpop.f32.mrf.mxu0
        %v3056 = vadd.f32 0.0, %v3055
        %3057 = vmatmul.bf16.gmra.mxu0 %v1458
        %v3058 = vpop.f32.mrf.mxu0
        %v3059 = vadd.f32 0.0, %v3058
        %v3060 = vpop.f32.mrf.mxu0
        %v3061 = vadd.f32 0.0, %v3060
        %3062 = vmatmul.bf16.gmra.mxu0 %v1462
        %v3063 = vpop.f32.mrf.mxu0
        %v3064 = vadd.f32 0.0, %v3063
        %v3065 = vpop.f32.mrf.mxu0
        %v3066 = vadd.f32 0.0, %v3065
        %3067 = vmatmul.bf16.gmra.mxu0 %v1466
        %v3068 = vpop.f32.mrf.mxu0
        %v3069 = vadd.f32 0.0, %v3068
        %v3070 = vpop.f32.mrf.mxu0
        %v3071 = vadd.f32 0.0, %v3070
        %3072 = vmatmul.bf16.gmra.mxu0 %v1470
        %v3073 = vpop.f32.mrf.mxu0
        %v3074 = vadd.f32 0.0, %v3073
        %v3075 = vpop.f32.mrf.mxu0
        %v3076 = vadd.f32 0.0, %v3075
        %3077 = vmatmul.bf16.gmra.mxu0 %v1474
        %v3078 = vpop.f32.mrf.mxu0
        %v3079 = vadd.f32 0.0, %v3078
        %v3080 = vpop.f32.mrf.mxu0
        %v3081 = vadd.f32 0.0, %v3080
        %3082 = vmatmul.bf16.gmra.mxu0 %v1478
        %v3083 = vpop.f32.mrf.mxu0
        %v3084 = vadd.f32 0.0, %v3083
        %v3085 = vpop.f32.mrf.mxu0
        %v3086 = vadd.f32 0.0, %v3085
        %3087 = vmatmul.bf16.gmra.mxu0 %v1482
        %v3088 = vpop.f32.mrf.mxu0
        %v3089 = vadd.f32 0.0, %v3088
        %v3090 = vpop.f32.mrf.mxu0
        %v3091 = vadd.f32 0.0, %v3090
        %3092 = vmatmul.bf16.gmra.mxu0 %v1486
        %v3093 = vpop.f32.mrf.mxu0
        %v3094 = vadd.f32 0.0, %v3093
        %v3095 = vpop.f32.mrf.mxu0
        %v3096 = vadd.f32 0.0, %v3095
        %3097 = vmatmul.bf16.gmra.mxu0 %v1490
        %v3098 = vpop.f32.mrf.mxu0
        %v3099 = vadd.f32 0.0, %v3098
        %v3100 = vpop.f32.mrf.mxu0
        %v3101 = vadd.f32 0.0, %v3100
        %3102 = vmatmul.bf16.gmra.mxu0 %v1494
        %v3103 = vpop.f32.mrf.mxu0
        %v3104 = vadd.f32 0.0, %v3103
        %v3105 = vpop.f32.mrf.mxu0
        %v3106 = vadd.f32 0.0, %v3105
        %3107 = vmatmul.bf16.gmra.mxu0 %v1498
        %v3108 = vpop.f32.mrf.mxu0
        %v3109 = vadd.f32 0.0, %v3108
        %v3110 = vpop.f32.mrf.mxu0
        %v3111 = vadd.f32 0.0, %v3110
        %3112 = vmatmul.bf16.gmra.mxu0 %v1502
        %v3113 = vpop.f32.mrf.mxu0
        %v3114 = vadd.f32 0.0, %v3113
        %v3115 = vpop.f32.mrf.mxu0
        %v3116 = vadd.f32 0.0, %v3115
        %3117 = vmatmul.bf16.gmra.mxu0 %v1506
        %v3118 = vpop.f32.mrf.mxu0
        %v3119 = vadd.f32 0.0, %v3118
        %v3120 = vpop.f32.mrf.mxu0
        %v3121 = vadd.f32 0.0, %v3120
        %3122 = vdwg.mxu0
        %3123 = vmatpush.bf16.msra.mxu0 %v2083
        %3124 = vmatpush.bf16.msra.mxu0 %v2079
        %3125 = vmatpush.bf16.msra.mxu0 %v2075
        %3126 = vmatpush.bf16.msra.mxu0 %v2071
        %3127 = vmatpush.bf16.msra.mxu0 %v2067
        %3128 = vmatpush.bf16.msra.mxu0 %v2063
        %3129 = vmatpush.bf16.msra.mxu0 %v2059
        %3130 = vmatpush.bf16.msra.mxu0 %v2055
        %3131 = vmatmul.bf16.gmra.mxu0 %v1383
        %v3132 = vpop.f32.mrf.mxu0
        %v3133 = vadd.f32 %v2964, %v3132
        %v3134 = vpop.f32.mrf.mxu0
        %v3135 = vadd.f32 %v2966, %v3134
        %3136 = vmatmul.bf16.gmra.mxu0 %v1387
        %v3137 = vpop.f32.mrf.mxu0
        %v3138 = vadd.f32 %v2969, %v3137
        %v3139 = vpop.f32.mrf.mxu0
        %v3140 = vadd.f32 %v2971, %v3139
        %3141 = vmatmul.bf16.gmra.mxu0 %v1391
        %v3142 = vpop.f32.mrf.mxu0
        %v3143 = vadd.f32 %v2974, %v3142
        %v3144 = vpop.f32.mrf.mxu0
        %v3145 = vadd.f32 %v2976, %v3144
        %3146 = vmatmul.bf16.gmra.mxu0 %v1395
        %v3147 = vpop.f32.mrf.mxu0
        %v3148 = vadd.f32 %v2979, %v3147
        %v3149 = vpop.f32.mrf.mxu0
        %v3150 = vadd.f32 %v2981, %v3149
        %3151 = vmatmul.bf16.gmra.mxu0 %v1399
        %v3152 = vpop.f32.mrf.mxu0
        %v3153 = vadd.f32 %v2984, %v3152
        %v3154 = vpop.f32.mrf.mxu0
        %v3155 = vadd.f32 %v2986, %v3154
        %3156 = vmatmul.bf16.gmra.mxu0 %v1403
        %v3157 = vpop.f32.mrf.mxu0
        %v3158 = vadd.f32 %v2989, %v3157
        %v3159 = vpop.f32.mrf.mxu0
        %v3160 = vadd.f32 %v2991, %v3159
        %3161 = vmatmul.bf16.gmra.mxu0 %v1407
        %v3162 = vpop.f32.mrf.mxu0
        %v3163 = vadd.f32 %v2994, %v3162
        %v3164 = vpop.f32.mrf.mxu0
        %v3165 = vadd.f32 %v2996, %v3164
        %3166 = vmatmul.bf16.gmra.mxu0 %v1411
        %v3167 = vpop.f32.mrf.mxu0
        %v3168 = vadd.f32 %v2999, %v3167
        %v3169 = vpop.f32.mrf.mxu0
        %v3170 = vadd.f32 %v3001, %v3169
        %3171 = vmatmul.bf16.gmra.mxu0 %v1415
        %v3172 = vpop.f32.mrf.mxu0
        %v3173 = vadd.f32 %v3004, %v3172
        %v3174 = vpop.f32.mrf.mxu0
        %v3175 = vadd.f32 %v3006, %v3174
        %3176 = vmatmul.bf16.gmra.mxu0 %v1419
        %v3177 = vpop.f32.mrf.mxu0
        %v3178 = vadd.f32 %v3009, %v3177
        %v3179 = vpop.f32.mrf.mxu0
        %v3180 = vadd.f32 %v3011, %v3179
        %3181 = vmatmul.bf16.gmra.mxu0 %v1423
        %v3182 = vpop.f32.mrf.mxu0
        %v3183 = vadd.f32 %v3014, %v3182
        %v3184 = vpop.f32.mrf.mxu0
        %v3185 = vadd.f32 %v3016, %v3184
        %3186 = vmatmul.bf16.gmra.mxu0 %v1427
        %v3187 = vpop.f32.mrf.mxu0
        %v3188 = vadd.f32 %v3019, %v3187
        %v3189 = vpop.f32.mrf.mxu0
        %v3190 = vadd.f32 %v3021, %v3189
        %3191 = vmatmul.bf16.gmra.mxu0 %v1431
        %v3192 = vpop.f32.mrf.mxu0
        %v3193 = vadd.f32 %v3024, %v3192
        %v3194 = vpop.f32.mrf.mxu0
        %v3195 = vadd.f32 %v3026, %v3194
        %3196 = vmatmul.bf16.gmra.mxu0 %v1435
        %v3197 = vpop.f32.mrf.mxu0
        %v3198 = vadd.f32 %v3029, %v3197
        %v3199 = vpop.f32.mrf.mxu0
        %v3200 = vadd.f32 %v3031, %v3199
        %3201 = vmatmul.bf16.gmra.mxu0 %v1439
        %v3202 = vpop.f32.mrf.mxu0
        %v3203 = vadd.f32 %v3034, %v3202
        %v3204 = vpop.f32.mrf.mxu0
        %v3205 = vadd.f32 %v3036, %v3204
        %3206 = vmatmul.bf16.gmra.mxu0 %v1443
        %v3207 = vpop.f32.mrf.mxu0
        %v3208 = vadd.f32 %v3039, %v3207
        %v3209 = vpop.f32.mrf.mxu0
        %v3210 = vadd.f32 %v3041, %v3209
        %3211 = vmatmul.bf16.gmra.mxu0 %v1447
        %v3212 = vpop.f32.mrf.mxu0
        %v3213 = vadd.f32 %v3044, %v3212
        %v3214 = vpop.f32.mrf.mxu0
        %v3215 = vadd.f32 %v3046, %v3214
        %3216 = vmatmul.bf16.gmra.mxu0 %v1451
        %v3217 = vpop.f32.mrf.mxu0
        %v3218 = vadd.f32 %v3049, %v3217
        %v3219 = vpop.f32.mrf.mxu0
        %v3220 = vadd.f32 %v3051, %v3219
        %3221 = vmatmul.bf16.gmra.mxu0 %v1455
        %v3222 = vpop.f32.mrf.mxu0
        %v3223 = vadd.f32 %v3054, %v3222
        %v3224 = vpop.f32.mrf.mxu0
        %v3225 = vadd.f32 %v3056, %v3224
        %3226 = vmatmul.bf16.gmra.mxu0 %v1459
        %v3227 = vpop.f32.mrf.mxu0
        %v3228 = vadd.f32 %v3059, %v3227
        %v3229 = vpop.f32.mrf.mxu0
        %v3230 = vadd.f32 %v3061, %v3229
        %3231 = vmatmul.bf16.gmra.mxu0 %v1463
        %v3232 = vpop.f32.mrf.mxu0
        %v3233 = vadd.f32 %v3064, %v3232
        %v3234 = vpop.f32.mrf.mxu0
        %v3235 = vadd.f32 %v3066, %v3234
        %3236 = vmatmul.bf16.gmra.mxu0 %v1467
        %v3237 = vpop.f32.mrf.mxu0
        %v3238 = vadd.f32 %v3069, %v3237
        %v3239 = vpop.f32.mrf.mxu0
        %v3240 = vadd.f32 %v3071, %v3239
        %3241 = vmatmul.bf16.gmra.mxu0 %v1471
        %v3242 = vpop.f32.mrf.mxu0
        %v3243 = vadd.f32 %v3074, %v3242
        %v3244 = vpop.f32.mrf.mxu0
        %v3245 = vadd.f32 %v3076, %v3244
        %3246 = vmatmul.bf16.gmra.mxu0 %v1475
        %v3247 = vpop.f32.mrf.mxu0
        %v3248 = vadd.f32 %v3079, %v3247
        %v3249 = vpop.f32.mrf.mxu0
        %v3250 = vadd.f32 %v3081, %v3249
        %3251 = vmatmul.bf16.gmra.mxu0 %v1479
        %v3252 = vpop.f32.mrf.mxu0
        %v3253 = vadd.f32 %v3084, %v3252
        %v3254 = vpop.f32.mrf.mxu0
        %v3255 = vadd.f32 %v3086, %v3254
        %3256 = vmatmul.bf16.gmra.mxu0 %v1483
        %v3257 = vpop.f32.mrf.mxu0
        %v3258 = vadd.f32 %v3089, %v3257
        %v3259 = vpop.f32.mrf.mxu0
        %v3260 = vadd.f32 %v3091, %v3259
        %3261 = vmatmul.bf16.gmra.mxu0 %v1487
        %v3262 = vpop.f32.mrf.mxu0
        %v3263 = vadd.f32 %v3094, %v3262
        %v3264 = vpop.f32.mrf.mxu0
        %v3265 = vadd.f32 %v3096, %v3264
        %3266 = vmatmul.bf16.gmra.mxu0 %v1491
        %v3267 = vpop.f32.mrf.mxu0
        %v3268 = vadd.f32 %v3099, %v3267
        %v3269 = vpop.f32.mrf.mxu0
        %v3270 = vadd.f32 %v3101, %v3269
        %3271 = vmatmul.bf16.gmra.mxu0 %v1495
        %v3272 = vpop.f32.mrf.mxu0
        %v3273 = vadd.f32 %v3104, %v3272
        %v3274 = vpop.f32.mrf.mxu0
        %v3275 = vadd.f32 %v3106, %v3274
        %3276 = vmatmul.bf16.gmra.mxu0 %v1499
        %v3277 = vpop.f32.mrf.mxu0
        %v3278 = vadd.f32 %v3109, %v3277
        %v3279 = vpop.f32.mrf.mxu0
        %v3280 = vadd.f32 %v3111, %v3279
        %3281 = vmatmul.bf16.gmra.mxu0 %v1503
        %v3282 = vpop.f32.mrf.mxu0
        %v3283 = vadd.f32 %v3114, %v3282
        %v3284 = vpop.f32.mrf.mxu0
        %v3285 = vadd.f32 %v3116, %v3284
        %3286 = vmatmul.bf16.gmra.mxu0 %v1507
        %v3287 = vpop.f32.mrf.mxu0
        %v3288 = vadd.f32 %v3119, %v3287
        %v3289 = vpop.f32.mrf.mxu0
        %v3290 = vadd.f32 %v3121, %v3289
        %3291 = vdwg.mxu0
        %3292 = vmatpush.bf16.msra.mxu0 %v2115
        %3293 = vmatpush.bf16.msra.mxu0 %v2111
        %3294 = vmatpush.bf16.msra.mxu0 %v2107
        %3295 = vmatpush.bf16.msra.mxu0 %v2103
        %3296 = vmatpush.bf16.msra.mxu0 %v2099
        %3297 = vmatpush.bf16.msra.mxu0 %v2095
        %3298 = vmatpush.bf16.msra.mxu0 %v2091
        %3299 = vmatpush.bf16.msra.mxu0 %v2087
        %3300 = vmatmul.bf16.gmra.mxu0 %v1384
        %v3301 = vpop.f32.mrf.mxu0
        %v3302 = vadd.f32 %v3133, %v3301
        %v3303 = vpop.f32.mrf.mxu0
        %v3304 = vadd.f32 %v3135, %v3303
        %3305 = vmatmul.bf16.gmra.mxu0 %v1388
        %v3306 = vpop.f32.mrf.mxu0
        %v3307 = vadd.f32 %v3138, %v3306
        %v3308 = vpop.f32.mrf.mxu0
        %v3309 = vadd.f32 %v3140, %v3308
        %3310 = vmatmul.bf16.gmra.mxu0 %v1392
        %v3311 = vpop.f32.mrf.mxu0
        %v3312 = vadd.f32 %v3143, %v3311
        %v3313 = vpop.f32.mrf.mxu0
        %v3314 = vadd.f32 %v3145, %v3313
        %3315 = vmatmul.bf16.gmra.mxu0 %v1396
        %v3316 = vpop.f32.mrf.mxu0
        %v3317 = vadd.f32 %v3148, %v3316
        %v3318 = vpop.f32.mrf.mxu0
        %v3319 = vadd.f32 %v3150, %v3318
        %3320 = vmatmul.bf16.gmra.mxu0 %v1400
        %v3321 = vpop.f32.mrf.mxu0
        %v3322 = vadd.f32 %v3153, %v3321
        %v3323 = vpop.f32.mrf.mxu0
        %v3324 = vadd.f32 %v3155, %v3323
        %3325 = vmatmul.bf16.gmra.mxu0 %v1404
        %v3326 = vpop.f32.mrf.mxu0
        %v3327 = vadd.f32 %v3158, %v3326
        %v3328 = vpop.f32.mrf.mxu0
        %v3329 = vadd.f32 %v3160, %v3328
        %3330 = vmatmul.bf16.gmra.mxu0 %v1408
        %v3331 = vpop.f32.mrf.mxu0
        %v3332 = vadd.f32 %v3163, %v3331
        %v3333 = vpop.f32.mrf.mxu0
        %v3334 = vadd.f32 %v3165, %v3333
        %3335 = vmatmul.bf16.gmra.mxu0 %v1412
        %v3336 = vpop.f32.mrf.mxu0
        %v3337 = vadd.f32 %v3168, %v3336
        %v3338 = vpop.f32.mrf.mxu0
        %v3339 = vadd.f32 %v3170, %v3338
        %3340 = vmatmul.bf16.gmra.mxu0 %v1416
        %v3341 = vpop.f32.mrf.mxu0
        %v3342 = vadd.f32 %v3173, %v3341
        %v3343 = vpop.f32.mrf.mxu0
        %v3344 = vadd.f32 %v3175, %v3343
        %3345 = vmatmul.bf16.gmra.mxu0 %v1420
        %v3346 = vpop.f32.mrf.mxu0
        %v3347 = vadd.f32 %v3178, %v3346
        %v3348 = vpop.f32.mrf.mxu0
        %v3349 = vadd.f32 %v3180, %v3348
        %3350 = vmatmul.bf16.gmra.mxu0 %v1424
        %v3351 = vpop.f32.mrf.mxu0
        %v3352 = vadd.f32 %v3183, %v3351
        %v3353 = vpop.f32.mrf.mxu0
        %v3354 = vadd.f32 %v3185, %v3353
        %3355 = vmatmul.bf16.gmra.mxu0 %v1428
        %v3356 = vpop.f32.mrf.mxu0
        %v3357 = vadd.f32 %v3188, %v3356
        %v3358 = vpop.f32.mrf.mxu0
        %v3359 = vadd.f32 %v3190, %v3358
        %3360 = vmatmul.bf16.gmra.mxu0 %v1432
        %v3361 = vpop.f32.mrf.mxu0
        %v3362 = vadd.f32 %v3193, %v3361
        %v3363 = vpop.f32.mrf.mxu0
        %v3364 = vadd.f32 %v3195, %v3363
        %3365 = vmatmul.bf16.gmra.mxu0 %v1436
        %v3366 = vpop.f32.mrf.mxu0
        %v3367 = vadd.f32 %v3198, %v3366
        %v3368 = vpop.f32.mrf.mxu0
        %v3369 = vadd.f32 %v3200, %v3368
        %3370 = vmatmul.bf16.gmra.mxu0 %v1440
        %v3371 = vpop.f32.mrf.mxu0
        %v3372 = vadd.f32 %v3203, %v3371
        %v3373 = vpop.f32.mrf.mxu0
        %v3374 = vadd.f32 %v3205, %v3373
        %3375 = vmatmul.bf16.gmra.mxu0 %v1444
        %v3376 = vpop.f32.mrf.mxu0
        %v3377 = vadd.f32 %v3208, %v3376
        %v3378 = vpop.f32.mrf.mxu0
        %v3379 = vadd.f32 %v3210, %v3378
        %3380 = vmatmul.bf16.gmra.mxu0 %v1448
        %v3381 = vpop.f32.mrf.mxu0
        %v3382 = vadd.f32 %v3213, %v3381
        %v3383 = vpop.f32.mrf.mxu0
        %v3384 = vadd.f32 %v3215, %v3383
        %3385 = vmatmul.bf16.gmra.mxu0 %v1452
        %v3386 = vpop.f32.mrf.mxu0
        %v3387 = vadd.f32 %v3218, %v3386
        %v3388 = vpop.f32.mrf.mxu0
        %v3389 = vadd.f32 %v3220, %v3388
        %3390 = vmatmul.bf16.gmra.mxu0 %v1456
        %v3391 = vpop.f32.mrf.mxu0
        %v3392 = vadd.f32 %v3223, %v3391
        %v3393 = vpop.f32.mrf.mxu0
        %v3394 = vadd.f32 %v3225, %v3393
        %3395 = vmatmul.bf16.gmra.mxu0 %v1460
        %v3396 = vpop.f32.mrf.mxu0
        %v3397 = vadd.f32 %v3228, %v3396
        %v3398 = vpop.f32.mrf.mxu0
        %v3399 = vadd.f32 %v3230, %v3398
        %3400 = vmatmul.bf16.gmra.mxu0 %v1464
        %v3401 = vpop.f32.mrf.mxu0
        %v3402 = vadd.f32 %v3233, %v3401
        %v3403 = vpop.f32.mrf.mxu0
        %v3404 = vadd.f32 %v3235, %v3403
        %3405 = vmatmul.bf16.gmra.mxu0 %v1468
        %v3406 = vpop.f32.mrf.mxu0
        %v3407 = vadd.f32 %v3238, %v3406
        %v3408 = vpop.f32.mrf.mxu0
        %v3409 = vadd.f32 %v3240, %v3408
        %3410 = vmatmul.bf16.gmra.mxu0 %v1472
        %v3411 = vpop.f32.mrf.mxu0
        %v3412 = vadd.f32 %v3243, %v3411
        %v3413 = vpop.f32.mrf.mxu0
        %v3414 = vadd.f32 %v3245, %v3413
        %3415 = vmatmul.bf16.gmra.mxu0 %v1476
        %v3416 = vpop.f32.mrf.mxu0
        %v3417 = vadd.f32 %v3248, %v3416
        %v3418 = vpop.f32.mrf.mxu0
        %v3419 = vadd.f32 %v3250, %v3418
        %3420 = vmatmul.bf16.gmra.mxu0 %v1480
        %v3421 = vpop.f32.mrf.mxu0
        %v3422 = vadd.f32 %v3253, %v3421
        %v3423 = vpop.f32.mrf.mxu0
        %v3424 = vadd.f32 %v3255, %v3423
        %3425 = vmatmul.bf16.gmra.mxu0 %v1484
        %v3426 = vpop.f32.mrf.mxu0
        %v3427 = vadd.f32 %v3258, %v3426
        %v3428 = vpop.f32.mrf.mxu0
        %v3429 = vadd.f32 %v3260, %v3428
        %3430 = vmatmul.bf16.gmra.mxu0 %v1488
        %v3431 = vpop.f32.mrf.mxu0
        %v3432 = vadd.f32 %v3263, %v3431
        %v3433 = vpop.f32.mrf.mxu0
        %v3434 = vadd.f32 %v3265, %v3433
        %3435 = vmatmul.bf16.gmra.mxu0 %v1492
        %v3436 = vpop.f32.mrf.mxu0
        %v3437 = vadd.f32 %v3268, %v3436
        %v3438 = vpop.f32.mrf.mxu0
        %v3439 = vadd.f32 %v3270, %v3438
        %3440 = vmatmul.bf16.gmra.mxu0 %v1496
        %v3441 = vpop.f32.mrf.mxu0
        %v3442 = vadd.f32 %v3273, %v3441
        %v3443 = vpop.f32.mrf.mxu0
        %v3444 = vadd.f32 %v3275, %v3443
        %3445 = vmatmul.bf16.gmra.mxu0 %v1500
        %v3446 = vpop.f32.mrf.mxu0
        %v3447 = vadd.f32 %v3278, %v3446
        %v3448 = vpop.f32.mrf.mxu0
        %v3449 = vadd.f32 %v3280, %v3448
        %3450 = vmatmul.bf16.gmra.mxu0 %v1504
        %v3451 = vpop.f32.mrf.mxu0
        %v3452 = vadd.f32 %v3283, %v3451
        %v3453 = vpop.f32.mrf.mxu0
        %v3454 = vadd.f32 %v3285, %v3453
        %3455 = vmatmul.bf16.gmra.mxu0 %v1508
        %v3456 = vpop.f32.mrf.mxu0
        %v3457 = vadd.f32 %v3288, %v3456
        %v3458 = vpop.f32.mrf.mxu0
        %v3459 = vadd.f32 %v3290, %v3458
        %3460 = vdwg.mxu0
        %3461 = vmatpush.bf16.msra.mxu0 %v2147
        %3462 = vmatpush.bf16.msra.mxu0 %v2143
        %3463 = vmatpush.bf16.msra.mxu0 %v2139
        %3464 = vmatpush.bf16.msra.mxu0 %v2135
        %3465 = vmatpush.bf16.msra.mxu0 %v2131
        %3466 = vmatpush.bf16.msra.mxu0 %v2127
        %3467 = vmatpush.bf16.msra.mxu0 %v2123
        %3468 = vmatpush.bf16.msra.mxu0 %v2119
        %3469 = vmatmul.bf16.gmra.mxu0 %v1385
        %v3470 = vpop.f32.mrf.mxu0
        %v3471 = vadd.f32 %v3302, %v3470
        %v3472 = vpop.f32.mrf.mxu0
        %v3473 = vadd.f32 %v3304, %v3472
        %3474 = vmatmul.bf16.gmra.mxu0 %v1389
        %v3475 = vpop.f32.mrf.mxu0
        %v3476 = vadd.f32 %v3307, %v3475
        %v3477 = vpop.f32.mrf.mxu0
        %v3478 = vadd.f32 %v3309, %v3477
        %3479 = vmatmul.bf16.gmra.mxu0 %v1393
        %v3480 = vpop.f32.mrf.mxu0
        %v3481 = vadd.f32 %v3312, %v3480
        %v3482 = vpop.f32.mrf.mxu0
        %v3483 = vadd.f32 %v3314, %v3482
        %3484 = vmatmul.bf16.gmra.mxu0 %v1397
        %v3485 = vpop.f32.mrf.mxu0
        %v3486 = vadd.f32 %v3317, %v3485
        %v3487 = vpop.f32.mrf.mxu0
        %v3488 = vadd.f32 %v3319, %v3487
        %3489 = vmatmul.bf16.gmra.mxu0 %v1401
        %v3490 = vpop.f32.mrf.mxu0
        %v3491 = vadd.f32 %v3322, %v3490
        %v3492 = vpop.f32.mrf.mxu0
        %v3493 = vadd.f32 %v3324, %v3492
        %3494 = vmatmul.bf16.gmra.mxu0 %v1405
        %v3495 = vpop.f32.mrf.mxu0
        %v3496 = vadd.f32 %v3327, %v3495
        %v3497 = vpop.f32.mrf.mxu0
        %v3498 = vadd.f32 %v3329, %v3497
        %3499 = vmatmul.bf16.gmra.mxu0 %v1409
        %v3500 = vpop.f32.mrf.mxu0
        %v3501 = vadd.f32 %v3332, %v3500
        %v3502 = vpop.f32.mrf.mxu0
        %v3503 = vadd.f32 %v3334, %v3502
        %3504 = vmatmul.bf16.gmra.mxu0 %v1413
        %v3505 = vpop.f32.mrf.mxu0
        %v3506 = vadd.f32 %v3337, %v3505
        %v3507 = vpop.f32.mrf.mxu0
        %v3508 = vadd.f32 %v3339, %v3507
        %3509 = vmatmul.bf16.gmra.mxu0 %v1417
        %v3510 = vpop.f32.mrf.mxu0
        %v3511 = vadd.f32 %v3342, %v3510
        %v3512 = vpop.f32.mrf.mxu0
        %v3513 = vadd.f32 %v3344, %v3512
        %3514 = vmatmul.bf16.gmra.mxu0 %v1421
        %v3515 = vpop.f32.mrf.mxu0
        %v3516 = vadd.f32 %v3347, %v3515
        %v3517 = vpop.f32.mrf.mxu0
        %v3518 = vadd.f32 %v3349, %v3517
        %3519 = vmatmul.bf16.gmra.mxu0 %v1425
        %v3520 = vpop.f32.mrf.mxu0
        %v3521 = vadd.f32 %v3352, %v3520
        %v3522 = vpop.f32.mrf.mxu0
        %v3523 = vadd.f32 %v3354, %v3522
        %3524 = vmatmul.bf16.gmra.mxu0 %v1429
        %v3525 = vpop.f32.mrf.mxu0
        %v3526 = vadd.f32 %v3357, %v3525
        %v3527 = vpop.f32.mrf.mxu0
        %v3528 = vadd.f32 %v3359, %v3527
        %3529 = vmatmul.bf16.gmra.mxu0 %v1433
        %v3530 = vpop.f32.mrf.mxu0
        %v3531 = vadd.f32 %v3362, %v3530
        %v3532 = vpop.f32.mrf.mxu0
        %v3533 = vadd.f32 %v3364, %v3532
        %3534 = vmatmul.bf16.gmra.mxu0 %v1437
        %v3535 = vpop.f32.mrf.mxu0
        %v3536 = vadd.f32 %v3367, %v3535
        %v3537 = vpop.f32.mrf.mxu0
        %v3538 = vadd.f32 %v3369, %v3537
        %3539 = vmatmul.bf16.gmra.mxu0 %v1441
        %v3540 = vpop.f32.mrf.mxu0
        %v3541 = vadd.f32 %v3372, %v3540
        %v3542 = vpop.f32.mrf.mxu0
        %v3543 = vadd.f32 %v3374, %v3542
        %3544 = vmatmul.bf16.gmra.mxu0 %v1445
        %v3545 = vpop.f32.mrf.mxu0
        %v3546 = vadd.f32 %v3377, %v3545
        %v3547 = vpop.f32.mrf.mxu0
        %v3548 = vadd.f32 %v3379, %v3547
        %3549 = vmatmul.bf16.gmra.mxu0 %v1449
        %v3550 = vpop.f32.mrf.mxu0
        %v3551 = vadd.f32 %v3382, %v3550
        %v3552 = vpop.f32.mrf.mxu0
        %v3553 = vadd.f32 %v3384, %v3552
        %3554 = vmatmul.bf16.gmra.mxu0 %v1453
        %v3555 = vpop.f32.mrf.mxu0
        %v3556 = vadd.f32 %v3387, %v3555
        %v3557 = vpop.f32.mrf.mxu0
        %v3558 = vadd.f32 %v3389, %v3557
        %3559 = vmatmul.bf16.gmra.mxu0 %v1457
        %v3560 = vpop.f32.mrf.mxu0
        %v3561 = vadd.f32 %v3392, %v3560
        %v3562 = vpop.f32.mrf.mxu0
        %v3563 = vadd.f32 %v3394, %v3562
        %3564 = vmatmul.bf16.gmra.mxu0 %v1461
        %v3565 = vpop.f32.mrf.mxu0
        %v3566 = vadd.f32 %v3397, %v3565
        %v3567 = vpop.f32.mrf.mxu0
        %v3568 = vadd.f32 %v3399, %v3567
        %3569 = vmatmul.bf16.gmra.mxu0 %v1465
        %v3570 = vpop.f32.mrf.mxu0
        %v3571 = vadd.f32 %v3402, %v3570
        %v3572 = vpop.f32.mrf.mxu0
        %v3573 = vadd.f32 %v3404, %v3572
        %3574 = vmatmul.bf16.gmra.mxu0 %v1469
        %v3575 = vpop.f32.mrf.mxu0
        %v3576 = vadd.f32 %v3407, %v3575
        %v3577 = vpop.f32.mrf.mxu0
        %v3578 = vadd.f32 %v3409, %v3577
        %3579 = vmatmul.bf16.gmra.mxu0 %v1473
        %v3580 = vpop.f32.mrf.mxu0
        %v3581 = vadd.f32 %v3412, %v3580
        %v3582 = vpop.f32.mrf.mxu0
        %v3583 = vadd.f32 %v3414, %v3582
        %3584 = vmatmul.bf16.gmra.mxu0 %v1477
        %v3585 = vpop.f32.mrf.mxu0
        %v3586 = vadd.f32 %v3417, %v3585
        %v3587 = vpop.f32.mrf.mxu0
        %v3588 = vadd.f32 %v3419, %v3587
        %3589 = vmatmul.bf16.gmra.mxu0 %v1481
        %v3590 = vpop.f32.mrf.mxu0
        %v3591 = vadd.f32 %v3422, %v3590
        %v3592 = vpop.f32.mrf.mxu0
        %v3593 = vadd.f32 %v3424, %v3592
        %3594 = vmatmul.bf16.gmra.mxu0 %v1485
        %v3595 = vpop.f32.mrf.mxu0
        %v3596 = vadd.f32 %v3427, %v3595
        %v3597 = vpop.f32.mrf.mxu0
        %v3598 = vadd.f32 %v3429, %v3597
        %3599 = vmatmul.bf16.gmra.mxu0 %v1489
        %v3600 = vpop.f32.mrf.mxu0
        %v3601 = vadd.f32 %v3432, %v3600
        %v3602 = vpop.f32.mrf.mxu0
        %v3603 = vadd.f32 %v3434, %v3602
        %3604 = vmatmul.bf16.gmra.mxu0 %v1493
        %v3605 = vpop.f32.mrf.mxu0
        %v3606 = vadd.f32 %v3437, %v3605
        %v3607 = vpop.f32.mrf.mxu0
        %v3608 = vadd.f32 %v3439, %v3607
        %3609 = vmatmul.bf16.gmra.mxu0 %v1497
        %v3610 = vpop.f32.mrf.mxu0
        %v3611 = vadd.f32 %v3442, %v3610
        %v3612 = vpop.f32.mrf.mxu0
        %v3613 = vadd.f32 %v3444, %v3612
        %3614 = vmatmul.bf16.gmra.mxu0 %v1501
        %v3615 = vpop.f32.mrf.mxu0
        %v3616 = vadd.f32 %v3447, %v3615
        %v3617 = vpop.f32.mrf.mxu0
        %v3618 = vadd.f32 %v3449, %v3617
        %3619 = vmatmul.bf16.gmra.mxu0 %v1505
        %v3620 = vpop.f32.mrf.mxu0
        %v3621 = vadd.f32 %v3452, %v3620
        %v3622 = vpop.f32.mrf.mxu0
        %v3623 = vadd.f32 %v3454, %v3622
        %3624 = vmatmul.bf16.gmra.mxu0 %v1509
        %v3625 = vpop.f32.mrf.mxu0
        %v3626 = vadd.f32 %v3457, %v3625
        %v3627 = vpop.f32.mrf.mxu0
        %v3628 = vadd.f32 %v3459, %v3627
        %3629 = vdwg.mxu0
        %3630 = vmatpush.bf16.msra.mxu0 %v2052
        %3631 = vmatpush.bf16.msra.mxu0 %v2048
        %3632 = vmatpush.bf16.msra.mxu0 %v2044
        %3633 = vmatpush.bf16.msra.mxu0 %v2040
        %3634 = vmatpush.bf16.msra.mxu0 %v2036
        %3635 = vmatpush.bf16.msra.mxu0 %v2032
        %3636 = vmatpush.bf16.msra.mxu0 %v2028
        %3637 = vmatpush.bf16.msra.mxu0 %v2024
        %3638 = vmatmul.bf16.gmra.mxu0 %v1382
        %v3639 = vpop.f32.mrf.mxu0
        %v3640 = vadd.f32 0.0, %v3639
        %v3641 = vpop.f32.mrf.mxu0
        %v3642 = vadd.f32 0.0, %v3641
        %3643 = vmatmul.bf16.gmra.mxu0 %v1386
        %v3644 = vpop.f32.mrf.mxu0
        %v3645 = vadd.f32 0.0, %v3644
        %v3646 = vpop.f32.mrf.mxu0
        %v3647 = vadd.f32 0.0, %v3646
        %3648 = vmatmul.bf16.gmra.mxu0 %v1390
        %v3649 = vpop.f32.mrf.mxu0
        %v3650 = vadd.f32 0.0, %v3649
        %v3651 = vpop.f32.mrf.mxu0
        %v3652 = vadd.f32 0.0, %v3651
        %3653 = vmatmul.bf16.gmra.mxu0 %v1394
        %v3654 = vpop.f32.mrf.mxu0
        %v3655 = vadd.f32 0.0, %v3654
        %v3656 = vpop.f32.mrf.mxu0
        %v3657 = vadd.f32 0.0, %v3656
        %3658 = vmatmul.bf16.gmra.mxu0 %v1398
        %v3659 = vpop.f32.mrf.mxu0
        %v3660 = vadd.f32 0.0, %v3659
        %v3661 = vpop.f32.mrf.mxu0
        %v3662 = vadd.f32 0.0, %v3661
        %3663 = vmatmul.bf16.gmra.mxu0 %v1402
        %v3664 = vpop.f32.mrf.mxu0
        %v3665 = vadd.f32 0.0, %v3664
        %v3666 = vpop.f32.mrf.mxu0
        %v3667 = vadd.f32 0.0, %v3666
        %3668 = vmatmul.bf16.gmra.mxu0 %v1406
        %v3669 = vpop.f32.mrf.mxu0
        %v3670 = vadd.f32 0.0, %v3669
        %v3671 = vpop.f32.mrf.mxu0
        %v3672 = vadd.f32 0.0, %v3671
        %3673 = vmatmul.bf16.gmra.mxu0 %v1410
        %v3674 = vpop.f32.mrf.mxu0
        %v3675 = vadd.f32 0.0, %v3674
        %v3676 = vpop.f32.mrf.mxu0
        %v3677 = vadd.f32 0.0, %v3676
        %3678 = vmatmul.bf16.gmra.mxu0 %v1414
        %v3679 = vpop.f32.mrf.mxu0
        %v3680 = vadd.f32 0.0, %v3679
        %v3681 = vpop.f32.mrf.mxu0
        %v3682 = vadd.f32 0.0, %v3681
        %3683 = vmatmul.bf16.gmra.mxu0 %v1418
        %v3684 = vpop.f32.mrf.mxu0
        %v3685 = vadd.f32 0.0, %v3684
        %v3686 = vpop.f32.mrf.mxu0
        %v3687 = vadd.f32 0.0, %v3686
        %3688 = vmatmul.bf16.gmra.mxu0 %v1422
        %v3689 = vpop.f32.mrf.mxu0
        %v3690 = vadd.f32 0.0, %v3689
        %v3691 = vpop.f32.mrf.mxu0
        %v3692 = vadd.f32 0.0, %v3691
        %3693 = vmatmul.bf16.gmra.mxu0 %v1426
        %v3694 = vpop.f32.mrf.mxu0
        %v3695 = vadd.f32 0.0, %v3694
        %v3696 = vpop.f32.mrf.mxu0
        %v3697 = vadd.f32 0.0, %v3696
        %3698 = vmatmul.bf16.gmra.mxu0 %v1430
        %v3699 = vpop.f32.mrf.mxu0
        %v3700 = vadd.f32 0.0, %v3699
        %v3701 = vpop.f32.mrf.mxu0
        %v3702 = vadd.f32 0.0, %v3701
        %3703 = vmatmul.bf16.gmra.mxu0 %v1434
        %v3704 = vpop.f32.mrf.mxu0
        %v3705 = vadd.f32 0.0, %v3704
        %v3706 = vpop.f32.mrf.mxu0
        %v3707 = vadd.f32 0.0, %v3706
        %3708 = vmatmul.bf16.gmra.mxu0 %v1438
        %v3709 = vpop.f32.mrf.mxu0
        %v3710 = vadd.f32 0.0, %v3709
        %v3711 = vpop.f32.mrf.mxu0
        %v3712 = vadd.f32 0.0, %v3711
        %3713 = vmatmul.bf16.gmra.mxu0 %v1442
        %v3714 = vpop.f32.mrf.mxu0
        %v3715 = vadd.f32 0.0, %v3714
        %v3716 = vpop.f32.mrf.mxu0
        %v3717 = vadd.f32 0.0, %v3716
        %3718 = vmatmul.bf16.gmra.mxu0 %v1446
        %v3719 = vpop.f32.mrf.mxu0
        %v3720 = vadd.f32 0.0, %v3719
        %v3721 = vpop.f32.mrf.mxu0
        %v3722 = vadd.f32 0.0, %v3721
        %3723 = vmatmul.bf16.gmra.mxu0 %v1450
        %v3724 = vpop.f32.mrf.mxu0
        %v3725 = vadd.f32 0.0, %v3724
        %v3726 = vpop.f32.mrf.mxu0
        %v3727 = vadd.f32 0.0, %v3726
        %3728 = vmatmul.bf16.gmra.mxu0 %v1454
        %v3729 = vpop.f32.mrf.mxu0
        %v3730 = vadd.f32 0.0, %v3729
        %v3731 = vpop.f32.mrf.mxu0
        %v3732 = vadd.f32 0.0, %v3731
        %3733 = vmatmul.bf16.gmra.mxu0 %v1458
        %v3734 = vpop.f32.mrf.mxu0
        %v3735 = vadd.f32 0.0, %v3734
        %v3736 = vpop.f32.mrf.mxu0
        %v3737 = vadd.f32 0.0, %v3736
        %3738 = vmatmul.bf16.gmra.mxu0 %v1462
        %v3739 = vpop.f32.mrf.mxu0
        %v3740 = vadd.f32 0.0, %v3739
        %v3741 = vpop.f32.mrf.mxu0
        %v3742 = vadd.f32 0.0, %v3741
        %3743 = vmatmul.bf16.gmra.mxu0 %v1466
        %v3744 = vpop.f32.mrf.mxu0
        %v3745 = vadd.f32 0.0, %v3744
        %v3746 = vpop.f32.mrf.mxu0
        %v3747 = vadd.f32 0.0, %v3746
        %3748 = vmatmul.bf16.gmra.mxu0 %v1470
        %v3749 = vpop.f32.mrf.mxu0
        %v3750 = vadd.f32 0.0, %v3749
        %v3751 = vpop.f32.mrf.mxu0
        %v3752 = vadd.f32 0.0, %v3751
        %3753 = vmatmul.bf16.gmra.mxu0 %v1474
        %v3754 = vpop.f32.mrf.mxu0
        %v3755 = vadd.f32 0.0, %v3754
        %v3756 = vpop.f32.mrf.mxu0
        %v3757 = vadd.f32 0.0, %v3756
        %3758 = vmatmul.bf16.gmra.mxu0 %v1478
        %v3759 = vpop.f32.mrf.mxu0
        %v3760 = vadd.f32 0.0, %v3759
        %v3761 = vpop.f32.mrf.mxu0
        %v3762 = vadd.f32 0.0, %v3761
        %3763 = vmatmul.bf16.gmra.mxu0 %v1482
        %v3764 = vpop.f32.mrf.mxu0
        %v3765 = vadd.f32 0.0, %v3764
        %v3766 = vpop.f32.mrf.mxu0
        %v3767 = vadd.f32 0.0, %v3766
        %3768 = vmatmul.bf16.gmra.mxu0 %v1486
        %v3769 = vpop.f32.mrf.mxu0
        %v3770 = vadd.f32 0.0, %v3769
        %v3771 = vpop.f32.mrf.mxu0
        %v3772 = vadd.f32 0.0, %v3771
        %3773 = vmatmul.bf16.gmra.mxu0 %v1490
        %v3774 = vpop.f32.mrf.mxu0
        %v3775 = vadd.f32 0.0, %v3774
        %v3776 = vpop.f32.mrf.mxu0
        %v3777 = vadd.f32 0.0, %v3776
        %3778 = vmatmul.bf16.gmra.mxu0 %v1494
        %v3779 = vpop.f32.mrf.mxu0
        %v3780 = vadd.f32 0.0, %v3779
        %v3781 = vpop.f32.mrf.mxu0
        %v3782 = vadd.f32 0.0, %v3781
        %3783 = vmatmul.bf16.gmra.mxu0 %v1498
        %v3784 = vpop.f32.mrf.mxu0
        %v3785 = vadd.f32 0.0, %v3784
        %v3786 = vpop.f32.mrf.mxu0
        %v3787 = vadd.f32 0.0, %v3786
        %3788 = vmatmul.bf16.gmra.mxu0 %v1502
        %v3789 = vpop.f32.mrf.mxu0
        %v3790 = vadd.f32 0.0, %v3789
        %v3791 = vpop.f32.mrf.mxu0
        %v3792 = vadd.f32 0.0, %v3791
        %3793 = vmatmul.bf16.gmra.mxu0 %v1506
        %v3794 = vpop.f32.mrf.mxu0
        %v3795 = vadd.f32 0.0, %v3794
        %v3796 = vpop.f32.mrf.mxu0
        %v3797 = vadd.f32 0.0, %v3796
        %3798 = vdwg.mxu0
        %3799 = vmatpush.bf16.msra.mxu0 %v2084
        %3800 = vmatpush.bf16.msra.mxu0 %v2080
        %3801 = vmatpush.bf16.msra.mxu0 %v2076
        %3802 = vmatpush.bf16.msra.mxu0 %v2072
        %3803 = vmatpush.bf16.msra.mxu0 %v2068
        %3804 = vmatpush.bf16.msra.mxu0 %v2064
        %3805 = vmatpush.bf16.msra.mxu0 %v2060
        %3806 = vmatpush.bf16.msra.mxu0 %v2056
        %3807 = vmatmul.bf16.gmra.mxu0 %v1383
        %v3808 = vpop.f32.mrf.mxu0
        %v3809 = vadd.f32 %v3640, %v3808
        %v3810 = vpop.f32.mrf.mxu0
        %v3811 = vadd.f32 %v3642, %v3810
        %3812 = vmatmul.bf16.gmra.mxu0 %v1387
        %v3813 = vpop.f32.mrf.mxu0
        %v3814 = vadd.f32 %v3645, %v3813
        %v3815 = vpop.f32.mrf.mxu0
        %v3816 = vadd.f32 %v3647, %v3815
        %3817 = vmatmul.bf16.gmra.mxu0 %v1391
        %v3818 = vpop.f32.mrf.mxu0
        %v3819 = vadd.f32 %v3650, %v3818
        %v3820 = vpop.f32.mrf.mxu0
        %v3821 = vadd.f32 %v3652, %v3820
        %3822 = vmatmul.bf16.gmra.mxu0 %v1395
        %v3823 = vpop.f32.mrf.mxu0
        %v3824 = vadd.f32 %v3655, %v3823
        %v3825 = vpop.f32.mrf.mxu0
        %v3826 = vadd.f32 %v3657, %v3825
        %3827 = vmatmul.bf16.gmra.mxu0 %v1399
        %v3828 = vpop.f32.mrf.mxu0
        %v3829 = vadd.f32 %v3660, %v3828
        %v3830 = vpop.f32.mrf.mxu0
        %v3831 = vadd.f32 %v3662, %v3830
        %3832 = vmatmul.bf16.gmra.mxu0 %v1403
        %v3833 = vpop.f32.mrf.mxu0
        %v3834 = vadd.f32 %v3665, %v3833
        %v3835 = vpop.f32.mrf.mxu0
        %v3836 = vadd.f32 %v3667, %v3835
        %3837 = vmatmul.bf16.gmra.mxu0 %v1407
        %v3838 = vpop.f32.mrf.mxu0
        %v3839 = vadd.f32 %v3670, %v3838
        %v3840 = vpop.f32.mrf.mxu0
        %v3841 = vadd.f32 %v3672, %v3840
        %3842 = vmatmul.bf16.gmra.mxu0 %v1411
        %v3843 = vpop.f32.mrf.mxu0
        %v3844 = vadd.f32 %v3675, %v3843
        %v3845 = vpop.f32.mrf.mxu0
        %v3846 = vadd.f32 %v3677, %v3845
        %3847 = vmatmul.bf16.gmra.mxu0 %v1415
        %v3848 = vpop.f32.mrf.mxu0
        %v3849 = vadd.f32 %v3680, %v3848
        %v3850 = vpop.f32.mrf.mxu0
        %v3851 = vadd.f32 %v3682, %v3850
        %3852 = vmatmul.bf16.gmra.mxu0 %v1419
        %v3853 = vpop.f32.mrf.mxu0
        %v3854 = vadd.f32 %v3685, %v3853
        %v3855 = vpop.f32.mrf.mxu0
        %v3856 = vadd.f32 %v3687, %v3855
        %3857 = vmatmul.bf16.gmra.mxu0 %v1423
        %v3858 = vpop.f32.mrf.mxu0
        %v3859 = vadd.f32 %v3690, %v3858
        %v3860 = vpop.f32.mrf.mxu0
        %v3861 = vadd.f32 %v3692, %v3860
        %3862 = vmatmul.bf16.gmra.mxu0 %v1427
        %v3863 = vpop.f32.mrf.mxu0
        %v3864 = vadd.f32 %v3695, %v3863
        %v3865 = vpop.f32.mrf.mxu0
        %v3866 = vadd.f32 %v3697, %v3865
        %3867 = vmatmul.bf16.gmra.mxu0 %v1431
        %v3868 = vpop.f32.mrf.mxu0
        %v3869 = vadd.f32 %v3700, %v3868
        %v3870 = vpop.f32.mrf.mxu0
        %v3871 = vadd.f32 %v3702, %v3870
        %3872 = vmatmul.bf16.gmra.mxu0 %v1435
        %v3873 = vpop.f32.mrf.mxu0
        %v3874 = vadd.f32 %v3705, %v3873
        %v3875 = vpop.f32.mrf.mxu0
        %v3876 = vadd.f32 %v3707, %v3875
        %3877 = vmatmul.bf16.gmra.mxu0 %v1439
        %v3878 = vpop.f32.mrf.mxu0
        %v3879 = vadd.f32 %v3710, %v3878
        %v3880 = vpop.f32.mrf.mxu0
        %v3881 = vadd.f32 %v3712, %v3880
        %3882 = vmatmul.bf16.gmra.mxu0 %v1443
        %v3883 = vpop.f32.mrf.mxu0
        %v3884 = vadd.f32 %v3715, %v3883
        %v3885 = vpop.f32.mrf.mxu0
        %v3886 = vadd.f32 %v3717, %v3885
        %3887 = vmatmul.bf16.gmra.mxu0 %v1447
        %v3888 = vpop.f32.mrf.mxu0
        %v3889 = vadd.f32 %v3720, %v3888
        %v3890 = vpop.f32.mrf.mxu0
        %v3891 = vadd.f32 %v3722, %v3890
        %3892 = vmatmul.bf16.gmra.mxu0 %v1451
        %v3893 = vpop.f32.mrf.mxu0
        %v3894 = vadd.f32 %v3725, %v3893
        %v3895 = vpop.f32.mrf.mxu0
        %v3896 = vadd.f32 %v3727, %v3895
        %3897 = vmatmul.bf16.gmra.mxu0 %v1455
        %v3898 = vpop.f32.mrf.mxu0
        %v3899 = vadd.f32 %v3730, %v3898
        %v3900 = vpop.f32.mrf.mxu0
        %v3901 = vadd.f32 %v3732, %v3900
        %3902 = vmatmul.bf16.gmra.mxu0 %v1459
        %v3903 = vpop.f32.mrf.mxu0
        %v3904 = vadd.f32 %v3735, %v3903
        %v3905 = vpop.f32.mrf.mxu0
        %v3906 = vadd.f32 %v3737, %v3905
        %3907 = vmatmul.bf16.gmra.mxu0 %v1463
        %v3908 = vpop.f32.mrf.mxu0
        %v3909 = vadd.f32 %v3740, %v3908
        %v3910 = vpop.f32.mrf.mxu0
        %v3911 = vadd.f32 %v3742, %v3910
        %3912 = vmatmul.bf16.gmra.mxu0 %v1467
        %v3913 = vpop.f32.mrf.mxu0
        %v3914 = vadd.f32 %v3745, %v3913
        %v3915 = vpop.f32.mrf.mxu0
        %v3916 = vadd.f32 %v3747, %v3915
        %3917 = vmatmul.bf16.gmra.mxu0 %v1471
        %v3918 = vpop.f32.mrf.mxu0
        %v3919 = vadd.f32 %v3750, %v3918
        %v3920 = vpop.f32.mrf.mxu0
        %v3921 = vadd.f32 %v3752, %v3920
        %3922 = vmatmul.bf16.gmra.mxu0 %v1475
        %v3923 = vpop.f32.mrf.mxu0
        %v3924 = vadd.f32 %v3755, %v3923
        %v3925 = vpop.f32.mrf.mxu0
        %v3926 = vadd.f32 %v3757, %v3925
        %3927 = vmatmul.bf16.gmra.mxu0 %v1479
        %v3928 = vpop.f32.mrf.mxu0
        %v3929 = vadd.f32 %v3760, %v3928
        %v3930 = vpop.f32.mrf.mxu0
        %v3931 = vadd.f32 %v3762, %v3930
        %3932 = vmatmul.bf16.gmra.mxu0 %v1483
        %v3933 = vpop.f32.mrf.mxu0
        %v3934 = vadd.f32 %v3765, %v3933
        %v3935 = vpop.f32.mrf.mxu0
        %v3936 = vadd.f32 %v3767, %v3935
        %3937 = vmatmul.bf16.gmra.mxu0 %v1487
        %v3938 = vpop.f32.mrf.mxu0
        %v3939 = vadd.f32 %v3770, %v3938
        %v3940 = vpop.f32.mrf.mxu0
        %v3941 = vadd.f32 %v3772, %v3940
        %3942 = vmatmul.bf16.gmra.mxu0 %v1491
        %v3943 = vpop.f32.mrf.mxu0
        %v3944 = vadd.f32 %v3775, %v3943
        %v3945 = vpop.f32.mrf.mxu0
        %v3946 = vadd.f32 %v3777, %v3945
        %3947 = vmatmul.bf16.gmra.mxu0 %v1495
        %v3948 = vpop.f32.mrf.mxu0
        %v3949 = vadd.f32 %v3780, %v3948
        %v3950 = vpop.f32.mrf.mxu0
        %v3951 = vadd.f32 %v3782, %v3950
        %3952 = vmatmul.bf16.gmra.mxu0 %v1499
        %v3953 = vpop.f32.mrf.mxu0
        %v3954 = vadd.f32 %v3785, %v3953
        %v3955 = vpop.f32.mrf.mxu0
        %v3956 = vadd.f32 %v3787, %v3955
        %3957 = vmatmul.bf16.gmra.mxu0 %v1503
        %v3958 = vpop.f32.mrf.mxu0
        %v3959 = vadd.f32 %v3790, %v3958
        %v3960 = vpop.f32.mrf.mxu0
        %v3961 = vadd.f32 %v3792, %v3960
        %3962 = vmatmul.bf16.gmra.mxu0 %v1507
        %v3963 = vpop.f32.mrf.mxu0
        %v3964 = vadd.f32 %v3795, %v3963
        %v3965 = vpop.f32.mrf.mxu0
        %v3966 = vadd.f32 %v3797, %v3965
        %3967 = vdwg.mxu0
        %3968 = vmatpush.bf16.msra.mxu0 %v2116
        %3969 = vmatpush.bf16.msra.mxu0 %v2112
        %3970 = vmatpush.bf16.msra.mxu0 %v2108
        %3971 = vmatpush.bf16.msra.mxu0 %v2104
        %3972 = vmatpush.bf16.msra.mxu0 %v2100
        %3973 = vmatpush.bf16.msra.mxu0 %v2096
        %3974 = vmatpush.bf16.msra.mxu0 %v2092
        %3975 = vmatpush.bf16.msra.mxu0 %v2088
        %3976 = vmatmul.bf16.gmra.mxu0 %v1384
        %v3977 = vpop.f32.mrf.mxu0
        %v3978 = vadd.f32 %v3809, %v3977
        %v3979 = vpop.f32.mrf.mxu0
        %v3980 = vadd.f32 %v3811, %v3979
        %3981 = vmatmul.bf16.gmra.mxu0 %v1388
        %v3982 = vpop.f32.mrf.mxu0
        %v3983 = vadd.f32 %v3814, %v3982
        %v3984 = vpop.f32.mrf.mxu0
        %v3985 = vadd.f32 %v3816, %v3984
        %3986 = vmatmul.bf16.gmra.mxu0 %v1392
        %v3987 = vpop.f32.mrf.mxu0
        %v3988 = vadd.f32 %v3819, %v3987
        %v3989 = vpop.f32.mrf.mxu0
        %v3990 = vadd.f32 %v3821, %v3989
        %3991 = vmatmul.bf16.gmra.mxu0 %v1396
        %v3992 = vpop.f32.mrf.mxu0
        %v3993 = vadd.f32 %v3824, %v3992
        %v3994 = vpop.f32.mrf.mxu0
        %v3995 = vadd.f32 %v3826, %v3994
        %3996 = vmatmul.bf16.gmra.mxu0 %v1400
        %v3997 = vpop.f32.mrf.mxu0
        %v3998 = vadd.f32 %v3829, %v3997
        %v3999 = vpop.f32.mrf.mxu0
        %v4000 = vadd.f32 %v3831, %v3999
        %4001 = vmatmul.bf16.gmra.mxu0 %v1404
        %v4002 = vpop.f32.mrf.mxu0
        %v4003 = vadd.f32 %v3834, %v4002
        %v4004 = vpop.f32.mrf.mxu0
        %v4005 = vadd.f32 %v3836, %v4004
        %4006 = vmatmul.bf16.gmra.mxu0 %v1408
        %v4007 = vpop.f32.mrf.mxu0
        %v4008 = vadd.f32 %v3839, %v4007
        %v4009 = vpop.f32.mrf.mxu0
        %v4010 = vadd.f32 %v3841, %v4009
        %4011 = vmatmul.bf16.gmra.mxu0 %v1412
        %v4012 = vpop.f32.mrf.mxu0
        %v4013 = vadd.f32 %v3844, %v4012
        %v4014 = vpop.f32.mrf.mxu0
        %v4015 = vadd.f32 %v3846, %v4014
        %4016 = vmatmul.bf16.gmra.mxu0 %v1416
        %v4017 = vpop.f32.mrf.mxu0
        %v4018 = vadd.f32 %v3849, %v4017
        %v4019 = vpop.f32.mrf.mxu0
        %v4020 = vadd.f32 %v3851, %v4019
        %4021 = vmatmul.bf16.gmra.mxu0 %v1420
        %v4022 = vpop.f32.mrf.mxu0
        %v4023 = vadd.f32 %v3854, %v4022
        %v4024 = vpop.f32.mrf.mxu0
        %v4025 = vadd.f32 %v3856, %v4024
        %4026 = vmatmul.bf16.gmra.mxu0 %v1424
        %v4027 = vpop.f32.mrf.mxu0
        %v4028 = vadd.f32 %v3859, %v4027
        %v4029 = vpop.f32.mrf.mxu0
        %v4030 = vadd.f32 %v3861, %v4029
        %4031 = vmatmul.bf16.gmra.mxu0 %v1428
        %v4032 = vpop.f32.mrf.mxu0
        %v4033 = vadd.f32 %v3864, %v4032
        %v4034 = vpop.f32.mrf.mxu0
        %v4035 = vadd.f32 %v3866, %v4034
        %4036 = vmatmul.bf16.gmra.mxu0 %v1432
        %v4037 = vpop.f32.mrf.mxu0
        %v4038 = vadd.f32 %v3869, %v4037
        %v4039 = vpop.f32.mrf.mxu0
        %v4040 = vadd.f32 %v3871, %v4039
        %4041 = vmatmul.bf16.gmra.mxu0 %v1436
        %v4042 = vpop.f32.mrf.mxu0
        %v4043 = vadd.f32 %v3874, %v4042
        %v4044 = vpop.f32.mrf.mxu0
        %v4045 = vadd.f32 %v3876, %v4044
        %4046 = vmatmul.bf16.gmra.mxu0 %v1440
        %v4047 = vpop.f32.mrf.mxu0
        %v4048 = vadd.f32 %v3879, %v4047
        %v4049 = vpop.f32.mrf.mxu0
        %v4050 = vadd.f32 %v3881, %v4049
        %4051 = vmatmul.bf16.gmra.mxu0 %v1444
        %v4052 = vpop.f32.mrf.mxu0
        %v4053 = vadd.f32 %v3884, %v4052
        %v4054 = vpop.f32.mrf.mxu0
        %v4055 = vadd.f32 %v3886, %v4054
        %4056 = vmatmul.bf16.gmra.mxu0 %v1448
        %v4057 = vpop.f32.mrf.mxu0
        %v4058 = vadd.f32 %v3889, %v4057
        %v4059 = vpop.f32.mrf.mxu0
        %v4060 = vadd.f32 %v3891, %v4059
        %4061 = vmatmul.bf16.gmra.mxu0 %v1452
        %v4062 = vpop.f32.mrf.mxu0
        %v4063 = vadd.f32 %v3894, %v4062
        %v4064 = vpop.f32.mrf.mxu0
        %v4065 = vadd.f32 %v3896, %v4064
        %4066 = vmatmul.bf16.gmra.mxu0 %v1456
        %v4067 = vpop.f32.mrf.mxu0
        %v4068 = vadd.f32 %v3899, %v4067
        %v4069 = vpop.f32.mrf.mxu0
        %v4070 = vadd.f32 %v3901, %v4069
        %4071 = vmatmul.bf16.gmra.mxu0 %v1460
        %v4072 = vpop.f32.mrf.mxu0
        %v4073 = vadd.f32 %v3904, %v4072
        %v4074 = vpop.f32.mrf.mxu0
        %v4075 = vadd.f32 %v3906, %v4074
        %4076 = vmatmul.bf16.gmra.mxu0 %v1464
        %v4077 = vpop.f32.mrf.mxu0
        %v4078 = vadd.f32 %v3909, %v4077
        %v4079 = vpop.f32.mrf.mxu0
        %v4080 = vadd.f32 %v3911, %v4079
        %4081 = vmatmul.bf16.gmra.mxu0 %v1468
        %v4082 = vpop.f32.mrf.mxu0
        %v4083 = vadd.f32 %v3914, %v4082
        %v4084 = vpop.f32.mrf.mxu0
        %v4085 = vadd.f32 %v3916, %v4084
        %4086 = vmatmul.bf16.gmra.mxu0 %v1472
        %v4087 = vpop.f32.mrf.mxu0
        %v4088 = vadd.f32 %v3919, %v4087
        %v4089 = vpop.f32.mrf.mxu0
        %v4090 = vadd.f32 %v3921, %v4089
        %4091 = vmatmul.bf16.gmra.mxu0 %v1476
        %v4092 = vpop.f32.mrf.mxu0
        %v4093 = vadd.f32 %v3924, %v4092
        %v4094 = vpop.f32.mrf.mxu0
        %v4095 = vadd.f32 %v3926, %v4094
        %4096 = vmatmul.bf16.gmra.mxu0 %v1480
        %v4097 = vpop.f32.mrf.mxu0
        %v4098 = vadd.f32 %v3929, %v4097
        %v4099 = vpop.f32.mrf.mxu0
        %v4100 = vadd.f32 %v3931, %v4099
        %4101 = vmatmul.bf16.gmra.mxu0 %v1484
        %v4102 = vpop.f32.mrf.mxu0
        %v4103 = vadd.f32 %v3934, %v4102
        %v4104 = vpop.f32.mrf.mxu0
        %v4105 = vadd.f32 %v3936, %v4104
        %4106 = vmatmul.bf16.gmra.mxu0 %v1488
        %v4107 = vpop.f32.mrf.mxu0
        %v4108 = vadd.f32 %v3939, %v4107
        %v4109 = vpop.f32.mrf.mxu0
        %v4110 = vadd.f32 %v3941, %v4109
        %4111 = vmatmul.bf16.gmra.mxu0 %v1492
        %v4112 = vpop.f32.mrf.mxu0
        %v4113 = vadd.f32 %v3944, %v4112
        %v4114 = vpop.f32.mrf.mxu0
        %v4115 = vadd.f32 %v3946, %v4114
        %4116 = vmatmul.bf16.gmra.mxu0 %v1496
        %v4117 = vpop.f32.mrf.mxu0
        %v4118 = vadd.f32 %v3949, %v4117
        %v4119 = vpop.f32.mrf.mxu0
        %v4120 = vadd.f32 %v3951, %v4119
        %4121 = vmatmul.bf16.gmra.mxu0 %v1500
        %v4122 = vpop.f32.mrf.mxu0
        %v4123 = vadd.f32 %v3954, %v4122
        %v4124 = vpop.f32.mrf.mxu0
        %v4125 = vadd.f32 %v3956, %v4124
        %4126 = vmatmul.bf16.gmra.mxu0 %v1504
        %v4127 = vpop.f32.mrf.mxu0
        %v4128 = vadd.f32 %v3959, %v4127
        %v4129 = vpop.f32.mrf.mxu0
        %v4130 = vadd.f32 %v3961, %v4129
        %4131 = vmatmul.bf16.gmra.mxu0 %v1508
        %v4132 = vpop.f32.mrf.mxu0
        %v4133 = vadd.f32 %v3964, %v4132
        %v4134 = vpop.f32.mrf.mxu0
        %v4135 = vadd.f32 %v3966, %v4134
        %4136 = vdwg.mxu0
        %4137 = vmatpush.bf16.msra.mxu0 %v2148
        %4138 = vmatpush.bf16.msra.mxu0 %v2144
        %4139 = vmatpush.bf16.msra.mxu0 %v2140
        %4140 = vmatpush.bf16.msra.mxu0 %v2136
        %4141 = vmatpush.bf16.msra.mxu0 %v2132
        %4142 = vmatpush.bf16.msra.mxu0 %v2128
        %4143 = vmatpush.bf16.msra.mxu0 %v2124
        %4144 = vmatpush.bf16.msra.mxu0 %v2120
        %4145 = vmatmul.bf16.gmra.mxu0 %v1385
        %v4146 = vpop.f32.mrf.mxu0
        %v4147 = vadd.f32 %v3978, %v4146
        %v4148 = vpop.f32.mrf.mxu0
        %v4149 = vadd.f32 %v3980, %v4148
        %4150 = vmatmul.bf16.gmra.mxu0 %v1389
        %v4151 = vpop.f32.mrf.mxu0
        %v4152 = vadd.f32 %v3983, %v4151
        %v4153 = vpop.f32.mrf.mxu0
        %v4154 = vadd.f32 %v3985, %v4153
        %4155 = vmatmul.bf16.gmra.mxu0 %v1393
        %v4156 = vpop.f32.mrf.mxu0
        %v4157 = vadd.f32 %v3988, %v4156
        %v4158 = vpop.f32.mrf.mxu0
        %v4159 = vadd.f32 %v3990, %v4158
        %4160 = vmatmul.bf16.gmra.mxu0 %v1397
        %v4161 = vpop.f32.mrf.mxu0
        %v4162 = vadd.f32 %v3993, %v4161
        %v4163 = vpop.f32.mrf.mxu0
        %v4164 = vadd.f32 %v3995, %v4163
        %4165 = vmatmul.bf16.gmra.mxu0 %v1401
        %v4166 = vpop.f32.mrf.mxu0
        %v4167 = vadd.f32 %v3998, %v4166
        %v4168 = vpop.f32.mrf.mxu0
        %v4169 = vadd.f32 %v4000, %v4168
        %4170 = vmatmul.bf16.gmra.mxu0 %v1405
        %v4171 = vpop.f32.mrf.mxu0
        %v4172 = vadd.f32 %v4003, %v4171
        %v4173 = vpop.f32.mrf.mxu0
        %v4174 = vadd.f32 %v4005, %v4173
        %4175 = vmatmul.bf16.gmra.mxu0 %v1409
        %v4176 = vpop.f32.mrf.mxu0
        %v4177 = vadd.f32 %v4008, %v4176
        %v4178 = vpop.f32.mrf.mxu0
        %v4179 = vadd.f32 %v4010, %v4178
        %4180 = vmatmul.bf16.gmra.mxu0 %v1413
        %v4181 = vpop.f32.mrf.mxu0
        %v4182 = vadd.f32 %v4013, %v4181
        %v4183 = vpop.f32.mrf.mxu0
        %v4184 = vadd.f32 %v4015, %v4183
        %4185 = vmatmul.bf16.gmra.mxu0 %v1417
        %v4186 = vpop.f32.mrf.mxu0
        %v4187 = vadd.f32 %v4018, %v4186
        %v4188 = vpop.f32.mrf.mxu0
        %v4189 = vadd.f32 %v4020, %v4188
        %4190 = vmatmul.bf16.gmra.mxu0 %v1421
        %v4191 = vpop.f32.mrf.mxu0
        %v4192 = vadd.f32 %v4023, %v4191
        %v4193 = vpop.f32.mrf.mxu0
        %v4194 = vadd.f32 %v4025, %v4193
        %4195 = vmatmul.bf16.gmra.mxu0 %v1425
        %v4196 = vpop.f32.mrf.mxu0
        %v4197 = vadd.f32 %v4028, %v4196
        %v4198 = vpop.f32.mrf.mxu0
        %v4199 = vadd.f32 %v4030, %v4198
        %4200 = vmatmul.bf16.gmra.mxu0 %v1429
        %v4201 = vpop.f32.mrf.mxu0
        %v4202 = vadd.f32 %v4033, %v4201
        %v4203 = vpop.f32.mrf.mxu0
        %v4204 = vadd.f32 %v4035, %v4203
        %4205 = vmatmul.bf16.gmra.mxu0 %v1433
        %v4206 = vpop.f32.mrf.mxu0
        %v4207 = vadd.f32 %v4038, %v4206
        %v4208 = vpop.f32.mrf.mxu0
        %v4209 = vadd.f32 %v4040, %v4208
        %4210 = vmatmul.bf16.gmra.mxu0 %v1437
        %v4211 = vpop.f32.mrf.mxu0
        %v4212 = vadd.f32 %v4043, %v4211
        %v4213 = vpop.f32.mrf.mxu0
        %v4214 = vadd.f32 %v4045, %v4213
        %4215 = vmatmul.bf16.gmra.mxu0 %v1441
        %v4216 = vpop.f32.mrf.mxu0
        %v4217 = vadd.f32 %v4048, %v4216
        %v4218 = vpop.f32.mrf.mxu0
        %v4219 = vadd.f32 %v4050, %v4218
        %4220 = vmatmul.bf16.gmra.mxu0 %v1445
        %v4221 = vpop.f32.mrf.mxu0
        %v4222 = vadd.f32 %v4053, %v4221
        %v4223 = vpop.f32.mrf.mxu0
        %v4224 = vadd.f32 %v4055, %v4223
        %4225 = vmatmul.bf16.gmra.mxu0 %v1449
        %v4226 = vpop.f32.mrf.mxu0
        %v4227 = vadd.f32 %v4058, %v4226
        %v4228 = vpop.f32.mrf.mxu0
        %v4229 = vadd.f32 %v4060, %v4228
        %4230 = vmatmul.bf16.gmra.mxu0 %v1453
        %v4231 = vpop.f32.mrf.mxu0
        %v4232 = vadd.f32 %v4063, %v4231
        %v4233 = vpop.f32.mrf.mxu0
        %v4234 = vadd.f32 %v4065, %v4233
        %4235 = vmatmul.bf16.gmra.mxu0 %v1457
        %v4236 = vpop.f32.mrf.mxu0
        %v4237 = vadd.f32 %v4068, %v4236
        %v4238 = vpop.f32.mrf.mxu0
        %v4239 = vadd.f32 %v4070, %v4238
        %4240 = vmatmul.bf16.gmra.mxu0 %v1461
        %v4241 = vpop.f32.mrf.mxu0
        %v4242 = vadd.f32 %v4073, %v4241
        %v4243 = vpop.f32.mrf.mxu0
        %v4244 = vadd.f32 %v4075, %v4243
        %4245 = vmatmul.bf16.gmra.mxu0 %v1465
        %v4246 = vpop.f32.mrf.mxu0
        %v4247 = vadd.f32 %v4078, %v4246
        %v4248 = vpop.f32.mrf.mxu0
        %v4249 = vadd.f32 %v4080, %v4248
        %4250 = vmatmul.bf16.gmra.mxu0 %v1469
        %v4251 = vpop.f32.mrf.mxu0
        %v4252 = vadd.f32 %v4083, %v4251
        %v4253 = vpop.f32.mrf.mxu0
        %v4254 = vadd.f32 %v4085, %v4253
        %4255 = vmatmul.bf16.gmra.mxu0 %v1473
        %v4256 = vpop.f32.mrf.mxu0
        %v4257 = vadd.f32 %v4088, %v4256
        %v4258 = vpop.f32.mrf.mxu0
        %v4259 = vadd.f32 %v4090, %v4258
        %4260 = vmatmul.bf16.gmra.mxu0 %v1477
        %v4261 = vpop.f32.mrf.mxu0
        %v4262 = vadd.f32 %v4093, %v4261
        %v4263 = vpop.f32.mrf.mxu0
        %v4264 = vadd.f32 %v4095, %v4263
        %4265 = vmatmul.bf16.gmra.mxu0 %v1481
        %v4266 = vpop.f32.mrf.mxu0
        %v4267 = vadd.f32 %v4098, %v4266
        %v4268 = vpop.f32.mrf.mxu0
        %v4269 = vadd.f32 %v4100, %v4268
        %4270 = vmatmul.bf16.gmra.mxu0 %v1485
        %v4271 = vpop.f32.mrf.mxu0
        %v4272 = vadd.f32 %v4103, %v4271
        %v4273 = vpop.f32.mrf.mxu0
        %v4274 = vadd.f32 %v4105, %v4273
        %4275 = vmatmul.bf16.gmra.mxu0 %v1489
        %v4276 = vpop.f32.mrf.mxu0
        %v4277 = vadd.f32 %v4108, %v4276
        %v4278 = vpop.f32.mrf.mxu0
        %v4279 = vadd.f32 %v4110, %v4278
        %4280 = vmatmul.bf16.gmra.mxu0 %v1493
        %v4281 = vpop.f32.mrf.mxu0
        %v4282 = vadd.f32 %v4113, %v4281
        %v4283 = vpop.f32.mrf.mxu0
        %v4284 = vadd.f32 %v4115, %v4283
        %4285 = vmatmul.bf16.gmra.mxu0 %v1497
        %v4286 = vpop.f32.mrf.mxu0
        %v4287 = vadd.f32 %v4118, %v4286
        %v4288 = vpop.f32.mrf.mxu0
        %v4289 = vadd.f32 %v4120, %v4288
        %4290 = vmatmul.bf16.gmra.mxu0 %v1501
        %v4291 = vpop.f32.mrf.mxu0
        %v4292 = vadd.f32 %v4123, %v4291
        %v4293 = vpop.f32.mrf.mxu0
        %v4294 = vadd.f32 %v4125, %v4293
        %4295 = vmatmul.bf16.gmra.mxu0 %v1505
        %v4296 = vpop.f32.mrf.mxu0
        %v4297 = vadd.f32 %v4128, %v4296
        %v4298 = vpop.f32.mrf.mxu0
        %v4299 = vadd.f32 %v4130, %v4298
        %4300 = vmatmul.bf16.gmra.mxu0 %v1509
        %v4301 = vpop.f32.mrf.mxu0
        %v4302 = vadd.f32 %v4133, %v4301
        %v4303 = vpop.f32.mrf.mxu0
        %v4304 = vadd.f32 %v4135, %v4303
        %4305 = vdwg.mxu0
        %4306 = vmatpush.bf16.msra.mxu0 %v2053
        %4307 = vmatpush.bf16.msra.mxu0 %v2049
        %4308 = vmatpush.bf16.msra.mxu0 %v2045
        %4309 = vmatpush.bf16.msra.mxu0 %v2041
        %4310 = vmatpush.bf16.msra.mxu0 %v2037
        %4311 = vmatpush.bf16.msra.mxu0 %v2033
        %4312 = vmatpush.bf16.msra.mxu0 %v2029
        %4313 = vmatpush.bf16.msra.mxu0 %v2025
        %4314 = vmatmul.bf16.gmra.mxu0 %v1382
        %v4315 = vpop.f32.mrf.mxu0
        %v4316 = vadd.f32 0.0, %v4315
        %v4317 = vpop.f32.mrf.mxu0
        %v4318 = vadd.f32 0.0, %v4317
        %4319 = vmatmul.bf16.gmra.mxu0 %v1386
        %v4320 = vpop.f32.mrf.mxu0
        %v4321 = vadd.f32 0.0, %v4320
        %v4322 = vpop.f32.mrf.mxu0
        %v4323 = vadd.f32 0.0, %v4322
        %4324 = vmatmul.bf16.gmra.mxu0 %v1390
        %v4325 = vpop.f32.mrf.mxu0
        %v4326 = vadd.f32 0.0, %v4325
        %v4327 = vpop.f32.mrf.mxu0
        %v4328 = vadd.f32 0.0, %v4327
        %4329 = vmatmul.bf16.gmra.mxu0 %v1394
        %v4330 = vpop.f32.mrf.mxu0
        %v4331 = vadd.f32 0.0, %v4330
        %v4332 = vpop.f32.mrf.mxu0
        %v4333 = vadd.f32 0.0, %v4332
        %4334 = vmatmul.bf16.gmra.mxu0 %v1398
        %v4335 = vpop.f32.mrf.mxu0
        %v4336 = vadd.f32 0.0, %v4335
        %v4337 = vpop.f32.mrf.mxu0
        %v4338 = vadd.f32 0.0, %v4337
        %4339 = vmatmul.bf16.gmra.mxu0 %v1402
        %v4340 = vpop.f32.mrf.mxu0
        %v4341 = vadd.f32 0.0, %v4340
        %v4342 = vpop.f32.mrf.mxu0
        %v4343 = vadd.f32 0.0, %v4342
        %4344 = vmatmul.bf16.gmra.mxu0 %v1406
        %v4345 = vpop.f32.mrf.mxu0
        %v4346 = vadd.f32 0.0, %v4345
        %v4347 = vpop.f32.mrf.mxu0
        %v4348 = vadd.f32 0.0, %v4347
        %4349 = vmatmul.bf16.gmra.mxu0 %v1410
        %v4350 = vpop.f32.mrf.mxu0
        %v4351 = vadd.f32 0.0, %v4350
        %v4352 = vpop.f32.mrf.mxu0
        %v4353 = vadd.f32 0.0, %v4352
        %4354 = vmatmul.bf16.gmra.mxu0 %v1414
        %v4355 = vpop.f32.mrf.mxu0
        %v4356 = vadd.f32 0.0, %v4355
        %v4357 = vpop.f32.mrf.mxu0
        %v4358 = vadd.f32 0.0, %v4357
        %4359 = vmatmul.bf16.gmra.mxu0 %v1418
        %v4360 = vpop.f32.mrf.mxu0
        %v4361 = vadd.f32 0.0, %v4360
        %v4362 = vpop.f32.mrf.mxu0
        %v4363 = vadd.f32 0.0, %v4362
        %4364 = vmatmul.bf16.gmra.mxu0 %v1422
        %v4365 = vpop.f32.mrf.mxu0
        %v4366 = vadd.f32 0.0, %v4365
        %v4367 = vpop.f32.mrf.mxu0
        %v4368 = vadd.f32 0.0, %v4367
        %4369 = vmatmul.bf16.gmra.mxu0 %v1426
        %v4370 = vpop.f32.mrf.mxu0
        %v4371 = vadd.f32 0.0, %v4370
        %v4372 = vpop.f32.mrf.mxu0
        %v4373 = vadd.f32 0.0, %v4372
        %4374 = vmatmul.bf16.gmra.mxu0 %v1430
        %v4375 = vpop.f32.mrf.mxu0
        %v4376 = vadd.f32 0.0, %v4375
        %v4377 = vpop.f32.mrf.mxu0
        %v4378 = vadd.f32 0.0, %v4377
        %4379 = vmatmul.bf16.gmra.mxu0 %v1434
        %v4380 = vpop.f32.mrf.mxu0
        %v4381 = vadd.f32 0.0, %v4380
        %v4382 = vpop.f32.mrf.mxu0
        %v4383 = vadd.f32 0.0, %v4382
        %4384 = vmatmul.bf16.gmra.mxu0 %v1438
        %v4385 = vpop.f32.mrf.mxu0
        %v4386 = vadd.f32 0.0, %v4385
        %v4387 = vpop.f32.mrf.mxu0
        %v4388 = vadd.f32 0.0, %v4387
        %4389 = vmatmul.bf16.gmra.mxu0 %v1442
        %v4390 = vpop.f32.mrf.mxu0
        %v4391 = vadd.f32 0.0, %v4390
        %v4392 = vpop.f32.mrf.mxu0
        %v4393 = vadd.f32 0.0, %v4392
        %4394 = vmatmul.bf16.gmra.mxu0 %v1446
        %v4395 = vpop.f32.mrf.mxu0
        %v4396 = vadd.f32 0.0, %v4395
        %v4397 = vpop.f32.mrf.mxu0
        %v4398 = vadd.f32 0.0, %v4397
        %4399 = vmatmul.bf16.gmra.mxu0 %v1450
        %v4400 = vpop.f32.mrf.mxu0
        %v4401 = vadd.f32 0.0, %v4400
        %v4402 = vpop.f32.mrf.mxu0
        %v4403 = vadd.f32 0.0, %v4402
        %4404 = vmatmul.bf16.gmra.mxu0 %v1454
        %v4405 = vpop.f32.mrf.mxu0
        %v4406 = vadd.f32 0.0, %v4405
        %v4407 = vpop.f32.mrf.mxu0
        %v4408 = vadd.f32 0.0, %v4407
        %4409 = vmatmul.bf16.gmra.mxu0 %v1458
        %v4410 = vpop.f32.mrf.mxu0
        %v4411 = vadd.f32 0.0, %v4410
        %v4412 = vpop.f32.mrf.mxu0
        %v4413 = vadd.f32 0.0, %v4412
        %4414 = vmatmul.bf16.gmra.mxu0 %v1462
        %v4415 = vpop.f32.mrf.mxu0
        %v4416 = vadd.f32 0.0, %v4415
        %v4417 = vpop.f32.mrf.mxu0
        %v4418 = vadd.f32 0.0, %v4417
        %4419 = vmatmul.bf16.gmra.mxu0 %v1466
        %v4420 = vpop.f32.mrf.mxu0
        %v4421 = vadd.f32 0.0, %v4420
        %v4422 = vpop.f32.mrf.mxu0
        %v4423 = vadd.f32 0.0, %v4422
        %4424 = vmatmul.bf16.gmra.mxu0 %v1470
        %v4425 = vpop.f32.mrf.mxu0
        %v4426 = vadd.f32 0.0, %v4425
        %v4427 = vpop.f32.mrf.mxu0
        %v4428 = vadd.f32 0.0, %v4427
        %4429 = vmatmul.bf16.gmra.mxu0 %v1474
        %v4430 = vpop.f32.mrf.mxu0
        %v4431 = vadd.f32 0.0, %v4430
        %v4432 = vpop.f32.mrf.mxu0
        %v4433 = vadd.f32 0.0, %v4432
        %4434 = vmatmul.bf16.gmra.mxu0 %v1478
        %v4435 = vpop.f32.mrf.mxu0
        %v4436 = vadd.f32 0.0, %v4435
        %v4437 = vpop.f32.mrf.mxu0
        %v4438 = vadd.f32 0.0, %v4437
        %4439 = vmatmul.bf16.gmra.mxu0 %v1482
        %v4440 = vpop.f32.mrf.mxu0
        %v4441 = vadd.f32 0.0, %v4440
        %v4442 = vpop.f32.mrf.mxu0
        %v4443 = vadd.f32 0.0, %v4442
        %4444 = vmatmul.bf16.gmra.mxu0 %v1486
        %v4445 = vpop.f32.mrf.mxu0
        %v4446 = vadd.f32 0.0, %v4445
        %v4447 = vpop.f32.mrf.mxu0
        %v4448 = vadd.f32 0.0, %v4447
        %4449 = vmatmul.bf16.gmra.mxu0 %v1490
        %v4450 = vpop.f32.mrf.mxu0
        %v4451 = vadd.f32 0.0, %v4450
        %v4452 = vpop.f32.mrf.mxu0
        %v4453 = vadd.f32 0.0, %v4452
        %4454 = vmatmul.bf16.gmra.mxu0 %v1494
        %v4455 = vpop.f32.mrf.mxu0
        %v4456 = vadd.f32 0.0, %v4455
        %v4457 = vpop.f32.mrf.mxu0
        %v4458 = vadd.f32 0.0, %v4457
        %4459 = vmatmul.bf16.gmra.mxu0 %v1498
        %v4460 = vpop.f32.mrf.mxu0
        %v4461 = vadd.f32 0.0, %v4460
        %v4462 = vpop.f32.mrf.mxu0
        %v4463 = vadd.f32 0.0, %v4462
        %4464 = vmatmul.bf16.gmra.mxu0 %v1502
        %v4465 = vpop.f32.mrf.mxu0
        %v4466 = vadd.f32 0.0, %v4465
        %v4467 = vpop.f32.mrf.mxu0
        %v4468 = vadd.f32 0.0, %v4467
        %4469 = vmatmul.bf16.gmra.mxu0 %v1506
        %v4470 = vpop.f32.mrf.mxu0
        %v4471 = vadd.f32 0.0, %v4470
        %v4472 = vpop.f32.mrf.mxu0
        %v4473 = vadd.f32 0.0, %v4472
        %4474 = vdwg.mxu0
        %4475 = vmatpush.bf16.msra.mxu0 %v2085
        %4476 = vmatpush.bf16.msra.mxu0 %v2081
        %4477 = vmatpush.bf16.msra.mxu0 %v2077
        %4478 = vmatpush.bf16.msra.mxu0 %v2073
        %4479 = vmatpush.bf16.msra.mxu0 %v2069
        %4480 = vmatpush.bf16.msra.mxu0 %v2065
        %4481 = vmatpush.bf16.msra.mxu0 %v2061
        %4482 = vmatpush.bf16.msra.mxu0 %v2057
        %4483 = vmatmul.bf16.gmra.mxu0 %v1383
        %v4484 = vpop.f32.mrf.mxu0
        %v4485 = vadd.f32 %v4316, %v4484
        %v4486 = vpop.f32.mrf.mxu0
        %v4487 = vadd.f32 %v4318, %v4486
        %4488 = vmatmul.bf16.gmra.mxu0 %v1387
        %v4489 = vpop.f32.mrf.mxu0
        %v4490 = vadd.f32 %v4321, %v4489
        %v4491 = vpop.f32.mrf.mxu0
        %v4492 = vadd.f32 %v4323, %v4491
        %4493 = vmatmul.bf16.gmra.mxu0 %v1391
        %v4494 = vpop.f32.mrf.mxu0
        %v4495 = vadd.f32 %v4326, %v4494
        %v4496 = vpop.f32.mrf.mxu0
        %v4497 = vadd.f32 %v4328, %v4496
        %4498 = vmatmul.bf16.gmra.mxu0 %v1395
        %v4499 = vpop.f32.mrf.mxu0
        %v4500 = vadd.f32 %v4331, %v4499
        %v4501 = vpop.f32.mrf.mxu0
        %v4502 = vadd.f32 %v4333, %v4501
        %4503 = vmatmul.bf16.gmra.mxu0 %v1399
        %v4504 = vpop.f32.mrf.mxu0
        %v4505 = vadd.f32 %v4336, %v4504
        %v4506 = vpop.f32.mrf.mxu0
        %v4507 = vadd.f32 %v4338, %v4506
        %4508 = vmatmul.bf16.gmra.mxu0 %v1403
        %v4509 = vpop.f32.mrf.mxu0
        %v4510 = vadd.f32 %v4341, %v4509
        %v4511 = vpop.f32.mrf.mxu0
        %v4512 = vadd.f32 %v4343, %v4511
        %4513 = vmatmul.bf16.gmra.mxu0 %v1407
        %v4514 = vpop.f32.mrf.mxu0
        %v4515 = vadd.f32 %v4346, %v4514
        %v4516 = vpop.f32.mrf.mxu0
        %v4517 = vadd.f32 %v4348, %v4516
        %4518 = vmatmul.bf16.gmra.mxu0 %v1411
        %v4519 = vpop.f32.mrf.mxu0
        %v4520 = vadd.f32 %v4351, %v4519
        %v4521 = vpop.f32.mrf.mxu0
        %v4522 = vadd.f32 %v4353, %v4521
        %4523 = vmatmul.bf16.gmra.mxu0 %v1415
        %v4524 = vpop.f32.mrf.mxu0
        %v4525 = vadd.f32 %v4356, %v4524
        %v4526 = vpop.f32.mrf.mxu0
        %v4527 = vadd.f32 %v4358, %v4526
        %4528 = vmatmul.bf16.gmra.mxu0 %v1419
        %v4529 = vpop.f32.mrf.mxu0
        %v4530 = vadd.f32 %v4361, %v4529
        %v4531 = vpop.f32.mrf.mxu0
        %v4532 = vadd.f32 %v4363, %v4531
        %4533 = vmatmul.bf16.gmra.mxu0 %v1423
        %v4534 = vpop.f32.mrf.mxu0
        %v4535 = vadd.f32 %v4366, %v4534
        %v4536 = vpop.f32.mrf.mxu0
        %v4537 = vadd.f32 %v4368, %v4536
        %4538 = vmatmul.bf16.gmra.mxu0 %v1427
        %v4539 = vpop.f32.mrf.mxu0
        %v4540 = vadd.f32 %v4371, %v4539
        %v4541 = vpop.f32.mrf.mxu0
        %v4542 = vadd.f32 %v4373, %v4541
        %4543 = vmatmul.bf16.gmra.mxu0 %v1431
        %v4544 = vpop.f32.mrf.mxu0
        %v4545 = vadd.f32 %v4376, %v4544
        %v4546 = vpop.f32.mrf.mxu0
        %v4547 = vadd.f32 %v4378, %v4546
        %4548 = vmatmul.bf16.gmra.mxu0 %v1435
        %v4549 = vpop.f32.mrf.mxu0
        %v4550 = vadd.f32 %v4381, %v4549
        %v4551 = vpop.f32.mrf.mxu0
        %v4552 = vadd.f32 %v4383, %v4551
        %4553 = vmatmul.bf16.gmra.mxu0 %v1439
        %v4554 = vpop.f32.mrf.mxu0
        %v4555 = vadd.f32 %v4386, %v4554
        %v4556 = vpop.f32.mrf.mxu0
        %v4557 = vadd.f32 %v4388, %v4556
        %4558 = vmatmul.bf16.gmra.mxu0 %v1443
        %v4559 = vpop.f32.mrf.mxu0
        %v4560 = vadd.f32 %v4391, %v4559
        %v4561 = vpop.f32.mrf.mxu0
        %v4562 = vadd.f32 %v4393, %v4561
        %4563 = vmatmul.bf16.gmra.mxu0 %v1447
        %v4564 = vpop.f32.mrf.mxu0
        %v4565 = vadd.f32 %v4396, %v4564
        %v4566 = vpop.f32.mrf.mxu0
        %v4567 = vadd.f32 %v4398, %v4566
        %4568 = vmatmul.bf16.gmra.mxu0 %v1451
        %v4569 = vpop.f32.mrf.mxu0
        %v4570 = vadd.f32 %v4401, %v4569
        %v4571 = vpop.f32.mrf.mxu0
        %v4572 = vadd.f32 %v4403, %v4571
        %4573 = vmatmul.bf16.gmra.mxu0 %v1455
        %v4574 = vpop.f32.mrf.mxu0
        %v4575 = vadd.f32 %v4406, %v4574
        %v4576 = vpop.f32.mrf.mxu0
        %v4577 = vadd.f32 %v4408, %v4576
        %4578 = vmatmul.bf16.gmra.mxu0 %v1459
        %v4579 = vpop.f32.mrf.mxu0
        %v4580 = vadd.f32 %v4411, %v4579
        %v4581 = vpop.f32.mrf.mxu0
        %v4582 = vadd.f32 %v4413, %v4581
        %4583 = vmatmul.bf16.gmra.mxu0 %v1463
        %v4584 = vpop.f32.mrf.mxu0
        %v4585 = vadd.f32 %v4416, %v4584
        %v4586 = vpop.f32.mrf.mxu0
        %v4587 = vadd.f32 %v4418, %v4586
        %4588 = vmatmul.bf16.gmra.mxu0 %v1467
        %v4589 = vpop.f32.mrf.mxu0
        %v4590 = vadd.f32 %v4421, %v4589
        %v4591 = vpop.f32.mrf.mxu0
        %v4592 = vadd.f32 %v4423, %v4591
        %4593 = vmatmul.bf16.gmra.mxu0 %v1471
        %v4594 = vpop.f32.mrf.mxu0
        %v4595 = vadd.f32 %v4426, %v4594
        %v4596 = vpop.f32.mrf.mxu0
        %v4597 = vadd.f32 %v4428, %v4596
        %4598 = vmatmul.bf16.gmra.mxu0 %v1475
        %v4599 = vpop.f32.mrf.mxu0
        %v4600 = vadd.f32 %v4431, %v4599
        %v4601 = vpop.f32.mrf.mxu0
        %v4602 = vadd.f32 %v4433, %v4601
        %4603 = vmatmul.bf16.gmra.mxu0 %v1479
        %v4604 = vpop.f32.mrf.mxu0
        %v4605 = vadd.f32 %v4436, %v4604
        %v4606 = vpop.f32.mrf.mxu0
        %v4607 = vadd.f32 %v4438, %v4606
        %4608 = vmatmul.bf16.gmra.mxu0 %v1483
        %v4609 = vpop.f32.mrf.mxu0
        %v4610 = vadd.f32 %v4441, %v4609
        %v4611 = vpop.f32.mrf.mxu0
        %v4612 = vadd.f32 %v4443, %v4611
        %4613 = vmatmul.bf16.gmra.mxu0 %v1487
        %v4614 = vpop.f32.mrf.mxu0
        %v4615 = vadd.f32 %v4446, %v4614
        %v4616 = vpop.f32.mrf.mxu0
        %v4617 = vadd.f32 %v4448, %v4616
        %4618 = vmatmul.bf16.gmra.mxu0 %v1491
        %v4619 = vpop.f32.mrf.mxu0
        %v4620 = vadd.f32 %v4451, %v4619
        %v4621 = vpop.f32.mrf.mxu0
        %v4622 = vadd.f32 %v4453, %v4621
        %4623 = vmatmul.bf16.gmra.mxu0 %v1495
        %v4624 = vpop.f32.mrf.mxu0
        %v4625 = vadd.f32 %v4456, %v4624
        %v4626 = vpop.f32.mrf.mxu0
        %v4627 = vadd.f32 %v4458, %v4626
        %4628 = vmatmul.bf16.gmra.mxu0 %v1499
        %v4629 = vpop.f32.mrf.mxu0
        %v4630 = vadd.f32 %v4461, %v4629
        %v4631 = vpop.f32.mrf.mxu0
        %v4632 = vadd.f32 %v4463, %v4631
        %4633 = vmatmul.bf16.gmra.mxu0 %v1503
        %v4634 = vpop.f32.mrf.mxu0
        %v4635 = vadd.f32 %v4466, %v4634
        %v4636 = vpop.f32.mrf.mxu0
        %v4637 = vadd.f32 %v4468, %v4636
        %4638 = vmatmul.bf16.gmra.mxu0 %v1507
        %v4639 = vpop.f32.mrf.mxu0
        %v4640 = vadd.f32 %v4471, %v4639
        %v4641 = vpop.f32.mrf.mxu0
        %v4642 = vadd.f32 %v4473, %v4641
        %4643 = vdwg.mxu0
        %4644 = vmatpush.bf16.msra.mxu0 %v2117
        %4645 = vmatpush.bf16.msra.mxu0 %v2113
        %4646 = vmatpush.bf16.msra.mxu0 %v2109
        %4647 = vmatpush.bf16.msra.mxu0 %v2105
        %4648 = vmatpush.bf16.msra.mxu0 %v2101
        %4649 = vmatpush.bf16.msra.mxu0 %v2097
        %4650 = vmatpush.bf16.msra.mxu0 %v2093
        %4651 = vmatpush.bf16.msra.mxu0 %v2089
        %4652 = vmatmul.bf16.gmra.mxu0 %v1384
        %v4653 = vpop.f32.mrf.mxu0
        %v4654 = vadd.f32 %v4485, %v4653
        %v4655 = vpop.f32.mrf.mxu0
        %v4656 = vadd.f32 %v4487, %v4655
        %4657 = vmatmul.bf16.gmra.mxu0 %v1388
        %v4658 = vpop.f32.mrf.mxu0
        %v4659 = vadd.f32 %v4490, %v4658
        %v4660 = vpop.f32.mrf.mxu0
        %v4661 = vadd.f32 %v4492, %v4660
        %4662 = vmatmul.bf16.gmra.mxu0 %v1392
        %v4663 = vpop.f32.mrf.mxu0
        %v4664 = vadd.f32 %v4495, %v4663
        %v4665 = vpop.f32.mrf.mxu0
        %v4666 = vadd.f32 %v4497, %v4665
        %4667 = vmatmul.bf16.gmra.mxu0 %v1396
        %v4668 = vpop.f32.mrf.mxu0
        %v4669 = vadd.f32 %v4500, %v4668
        %v4670 = vpop.f32.mrf.mxu0
        %v4671 = vadd.f32 %v4502, %v4670
        %4672 = vmatmul.bf16.gmra.mxu0 %v1400
        %v4673 = vpop.f32.mrf.mxu0
        %v4674 = vadd.f32 %v4505, %v4673
        %v4675 = vpop.f32.mrf.mxu0
        %v4676 = vadd.f32 %v4507, %v4675
        %4677 = vmatmul.bf16.gmra.mxu0 %v1404
        %v4678 = vpop.f32.mrf.mxu0
        %v4679 = vadd.f32 %v4510, %v4678
        %v4680 = vpop.f32.mrf.mxu0
        %v4681 = vadd.f32 %v4512, %v4680
        %4682 = vmatmul.bf16.gmra.mxu0 %v1408
        %v4683 = vpop.f32.mrf.mxu0
        %v4684 = vadd.f32 %v4515, %v4683
        %v4685 = vpop.f32.mrf.mxu0
        %v4686 = vadd.f32 %v4517, %v4685
        %4687 = vmatmul.bf16.gmra.mxu0 %v1412
        %v4688 = vpop.f32.mrf.mxu0
        %v4689 = vadd.f32 %v4520, %v4688
        %v4690 = vpop.f32.mrf.mxu0
        %v4691 = vadd.f32 %v4522, %v4690
        %4692 = vmatmul.bf16.gmra.mxu0 %v1416
        %v4693 = vpop.f32.mrf.mxu0
        %v4694 = vadd.f32 %v4525, %v4693
        %v4695 = vpop.f32.mrf.mxu0
        %v4696 = vadd.f32 %v4527, %v4695
        %4697 = vmatmul.bf16.gmra.mxu0 %v1420
        %v4698 = vpop.f32.mrf.mxu0
        %v4699 = vadd.f32 %v4530, %v4698
        %v4700 = vpop.f32.mrf.mxu0
        %v4701 = vadd.f32 %v4532, %v4700
        %4702 = vmatmul.bf16.gmra.mxu0 %v1424
        %v4703 = vpop.f32.mrf.mxu0
        %v4704 = vadd.f32 %v4535, %v4703
        %v4705 = vpop.f32.mrf.mxu0
        %v4706 = vadd.f32 %v4537, %v4705
        %4707 = vmatmul.bf16.gmra.mxu0 %v1428
        %v4708 = vpop.f32.mrf.mxu0
        %v4709 = vadd.f32 %v4540, %v4708
        %v4710 = vpop.f32.mrf.mxu0
        %v4711 = vadd.f32 %v4542, %v4710
        %4712 = vmatmul.bf16.gmra.mxu0 %v1432
        %v4713 = vpop.f32.mrf.mxu0
        %v4714 = vadd.f32 %v4545, %v4713
        %v4715 = vpop.f32.mrf.mxu0
        %v4716 = vadd.f32 %v4547, %v4715
        %4717 = vmatmul.bf16.gmra.mxu0 %v1436
        %v4718 = vpop.f32.mrf.mxu0
        %v4719 = vadd.f32 %v4550, %v4718
        %v4720 = vpop.f32.mrf.mxu0
        %v4721 = vadd.f32 %v4552, %v4720
        %4722 = vmatmul.bf16.gmra.mxu0 %v1440
        %v4723 = vpop.f32.mrf.mxu0
        %v4724 = vadd.f32 %v4555, %v4723
        %v4725 = vpop.f32.mrf.mxu0
        %v4726 = vadd.f32 %v4557, %v4725
        %4727 = vmatmul.bf16.gmra.mxu0 %v1444
        %v4728 = vpop.f32.mrf.mxu0
        %v4729 = vadd.f32 %v4560, %v4728
        %v4730 = vpop.f32.mrf.mxu0
        %v4731 = vadd.f32 %v4562, %v4730
        %4732 = vmatmul.bf16.gmra.mxu0 %v1448
        %v4733 = vpop.f32.mrf.mxu0
        %v4734 = vadd.f32 %v4565, %v4733
        %v4735 = vpop.f32.mrf.mxu0
        %v4736 = vadd.f32 %v4567, %v4735
        %4737 = vmatmul.bf16.gmra.mxu0 %v1452
        %v4738 = vpop.f32.mrf.mxu0
        %v4739 = vadd.f32 %v4570, %v4738
        %v4740 = vpop.f32.mrf.mxu0
        %v4741 = vadd.f32 %v4572, %v4740
        %4742 = vmatmul.bf16.gmra.mxu0 %v1456
        %v4743 = vpop.f32.mrf.mxu0
        %v4744 = vadd.f32 %v4575, %v4743
        %v4745 = vpop.f32.mrf.mxu0
        %v4746 = vadd.f32 %v4577, %v4745
        %4747 = vmatmul.bf16.gmra.mxu0 %v1460
        %v4748 = vpop.f32.mrf.mxu0
        %v4749 = vadd.f32 %v4580, %v4748
        %v4750 = vpop.f32.mrf.mxu0
        %v4751 = vadd.f32 %v4582, %v4750
        %4752 = vmatmul.bf16.gmra.mxu0 %v1464
        %v4753 = vpop.f32.mrf.mxu0
        %v4754 = vadd.f32 %v4585, %v4753
        %v4755 = vpop.f32.mrf.mxu0
        %v4756 = vadd.f32 %v4587, %v4755
        %4757 = vmatmul.bf16.gmra.mxu0 %v1468
        %v4758 = vpop.f32.mrf.mxu0
        %v4759 = vadd.f32 %v4590, %v4758
        %v4760 = vpop.f32.mrf.mxu0
        %v4761 = vadd.f32 %v4592, %v4760
        %4762 = vmatmul.bf16.gmra.mxu0 %v1472
        %v4763 = vpop.f32.mrf.mxu0
        %v4764 = vadd.f32 %v4595, %v4763
        %v4765 = vpop.f32.mrf.mxu0
        %v4766 = vadd.f32 %v4597, %v4765
        %4767 = vmatmul.bf16.gmra.mxu0 %v1476
        %v4768 = vpop.f32.mrf.mxu0
        %v4769 = vadd.f32 %v4600, %v4768
        %v4770 = vpop.f32.mrf.mxu0
        %v4771 = vadd.f32 %v4602, %v4770
        %4772 = vmatmul.bf16.gmra.mxu0 %v1480
        %v4773 = vpop.f32.mrf.mxu0
        %v4774 = vadd.f32 %v4605, %v4773
        %v4775 = vpop.f32.mrf.mxu0
        %v4776 = vadd.f32 %v4607, %v4775
        %4777 = vmatmul.bf16.gmra.mxu0 %v1484
        %v4778 = vpop.f32.mrf.mxu0
        %v4779 = vadd.f32 %v4610, %v4778
        %v4780 = vpop.f32.mrf.mxu0
        %v4781 = vadd.f32 %v4612, %v4780
        %4782 = vmatmul.bf16.gmra.mxu0 %v1488
        %v4783 = vpop.f32.mrf.mxu0
        %v4784 = vadd.f32 %v4615, %v4783
        %v4785 = vpop.f32.mrf.mxu0
        %v4786 = vadd.f32 %v4617, %v4785
        %4787 = vmatmul.bf16.gmra.mxu0 %v1492
        %v4788 = vpop.f32.mrf.mxu0
        %v4789 = vadd.f32 %v4620, %v4788
        %v4790 = vpop.f32.mrf.mxu0
        %v4791 = vadd.f32 %v4622, %v4790
        %4792 = vmatmul.bf16.gmra.mxu0 %v1496
        %v4793 = vpop.f32.mrf.mxu0
        %v4794 = vadd.f32 %v4625, %v4793
        %v4795 = vpop.f32.mrf.mxu0
        %v4796 = vadd.f32 %v4627, %v4795
        %4797 = vmatmul.bf16.gmra.mxu0 %v1500
        %v4798 = vpop.f32.mrf.mxu0
        %v4799 = vadd.f32 %v4630, %v4798
        %v4800 = vpop.f32.mrf.mxu0
        %v4801 = vadd.f32 %v4632, %v4800
        %4802 = vmatmul.bf16.gmra.mxu0 %v1504
        %v4803 = vpop.f32.mrf.mxu0
        %v4804 = vadd.f32 %v4635, %v4803
        %v4805 = vpop.f32.mrf.mxu0
        %v4806 = vadd.f32 %v4637, %v4805
        %4807 = vmatmul.bf16.gmra.mxu0 %v1508
        %v4808 = vpop.f32.mrf.mxu0
        %v4809 = vadd.f32 %v4640, %v4808
        %v4810 = vpop.f32.mrf.mxu0
        %v4811 = vadd.f32 %v4642, %v4810
        %4812 = vdwg.mxu0
        %4813 = vmatpush.bf16.msra.mxu0 %v2149
        %4814 = vmatpush.bf16.msra.mxu0 %v2145
        %4815 = vmatpush.bf16.msra.mxu0 %v2141
        %4816 = vmatpush.bf16.msra.mxu0 %v2137
        %4817 = vmatpush.bf16.msra.mxu0 %v2133
        %4818 = vmatpush.bf16.msra.mxu0 %v2129
        %4819 = vmatpush.bf16.msra.mxu0 %v2125
        %4820 = vmatpush.bf16.msra.mxu0 %v2121
        %4821 = vmatmul.bf16.gmra.mxu0 %v1385
        %v4822 = vpop.f32.mrf.mxu0
        %v4823 = vadd.f32 %v4654, %v4822
        %v4824 = vpop.f32.mrf.mxu0
        %v4825 = vadd.f32 %v4656, %v4824
        %4826 = vmatmul.bf16.gmra.mxu0 %v1389
        %v4827 = vpop.f32.mrf.mxu0
        %v4828 = vadd.f32 %v4659, %v4827
        %v4829 = vpop.f32.mrf.mxu0
        %v4830 = vadd.f32 %v4661, %v4829
        %4831 = vmatmul.bf16.gmra.mxu0 %v1393
        %v4832 = vpop.f32.mrf.mxu0
        %v4833 = vadd.f32 %v4664, %v4832
        %v4834 = vpop.f32.mrf.mxu0
        %v4835 = vadd.f32 %v4666, %v4834
        %4836 = vmatmul.bf16.gmra.mxu0 %v1397
        %v4837 = vpop.f32.mrf.mxu0
        %v4838 = vadd.f32 %v4669, %v4837
        %v4839 = vpop.f32.mrf.mxu0
        %v4840 = vadd.f32 %v4671, %v4839
        %4841 = vmatmul.bf16.gmra.mxu0 %v1401
        %v4842 = vpop.f32.mrf.mxu0
        %v4843 = vadd.f32 %v4674, %v4842
        %v4844 = vpop.f32.mrf.mxu0
        %v4845 = vadd.f32 %v4676, %v4844
        %4846 = vmatmul.bf16.gmra.mxu0 %v1405
        %v4847 = vpop.f32.mrf.mxu0
        %v4848 = vadd.f32 %v4679, %v4847
        %v4849 = vpop.f32.mrf.mxu0
        %v4850 = vadd.f32 %v4681, %v4849
        %4851 = vmatmul.bf16.gmra.mxu0 %v1409
        %v4852 = vpop.f32.mrf.mxu0
        %v4853 = vadd.f32 %v4684, %v4852
        %v4854 = vpop.f32.mrf.mxu0
        %v4855 = vadd.f32 %v4686, %v4854
        %4856 = vmatmul.bf16.gmra.mxu0 %v1413
        %v4857 = vpop.f32.mrf.mxu0
        %v4858 = vadd.f32 %v4689, %v4857
        %v4859 = vpop.f32.mrf.mxu0
        %v4860 = vadd.f32 %v4691, %v4859
        %4861 = vmatmul.bf16.gmra.mxu0 %v1417
        %v4862 = vpop.f32.mrf.mxu0
        %v4863 = vadd.f32 %v4694, %v4862
        %v4864 = vpop.f32.mrf.mxu0
        %v4865 = vadd.f32 %v4696, %v4864
        %4866 = vmatmul.bf16.gmra.mxu0 %v1421
        %v4867 = vpop.f32.mrf.mxu0
        %v4868 = vadd.f32 %v4699, %v4867
        %v4869 = vpop.f32.mrf.mxu0
        %v4870 = vadd.f32 %v4701, %v4869
        %4871 = vmatmul.bf16.gmra.mxu0 %v1425
        %v4872 = vpop.f32.mrf.mxu0
        %v4873 = vadd.f32 %v4704, %v4872
        %v4874 = vpop.f32.mrf.mxu0
        %v4875 = vadd.f32 %v4706, %v4874
        %4876 = vmatmul.bf16.gmra.mxu0 %v1429
        %v4877 = vpop.f32.mrf.mxu0
        %v4878 = vadd.f32 %v4709, %v4877
        %v4879 = vpop.f32.mrf.mxu0
        %v4880 = vadd.f32 %v4711, %v4879
        %4881 = vmatmul.bf16.gmra.mxu0 %v1433
        %v4882 = vpop.f32.mrf.mxu0
        %v4883 = vadd.f32 %v4714, %v4882
        %v4884 = vpop.f32.mrf.mxu0
        %v4885 = vadd.f32 %v4716, %v4884
        %4886 = vmatmul.bf16.gmra.mxu0 %v1437
        %v4887 = vpop.f32.mrf.mxu0
        %v4888 = vadd.f32 %v4719, %v4887
        %v4889 = vpop.f32.mrf.mxu0
        %v4890 = vadd.f32 %v4721, %v4889
        %4891 = vmatmul.bf16.gmra.mxu0 %v1441
        %v4892 = vpop.f32.mrf.mxu0
        %v4893 = vadd.f32 %v4724, %v4892
        %v4894 = vpop.f32.mrf.mxu0
        %v4895 = vadd.f32 %v4726, %v4894
        %4896 = vmatmul.bf16.gmra.mxu0 %v1445
        %v4897 = vpop.f32.mrf.mxu0
        %v4898 = vadd.f32 %v4729, %v4897
        %v4899 = vpop.f32.mrf.mxu0
        %v4900 = vadd.f32 %v4731, %v4899
        %4901 = vmatmul.bf16.gmra.mxu0 %v1449
        %v4902 = vpop.f32.mrf.mxu0
        %v4903 = vadd.f32 %v4734, %v4902
        %v4904 = vpop.f32.mrf.mxu0
        %v4905 = vadd.f32 %v4736, %v4904
        %4906 = vmatmul.bf16.gmra.mxu0 %v1453
        %v4907 = vpop.f32.mrf.mxu0
        %v4908 = vadd.f32 %v4739, %v4907
        %v4909 = vpop.f32.mrf.mxu0
        %v4910 = vadd.f32 %v4741, %v4909
        %4911 = vmatmul.bf16.gmra.mxu0 %v1457
        %v4912 = vpop.f32.mrf.mxu0
        %v4913 = vadd.f32 %v4744, %v4912
        %v4914 = vpop.f32.mrf.mxu0
        %v4915 = vadd.f32 %v4746, %v4914
        %4916 = vmatmul.bf16.gmra.mxu0 %v1461
        %v4917 = vpop.f32.mrf.mxu0
        %v4918 = vadd.f32 %v4749, %v4917
        %v4919 = vpop.f32.mrf.mxu0
        %v4920 = vadd.f32 %v4751, %v4919
        %4921 = vmatmul.bf16.gmra.mxu0 %v1465
        %v4922 = vpop.f32.mrf.mxu0
        %v4923 = vadd.f32 %v4754, %v4922
        %v4924 = vpop.f32.mrf.mxu0
        %v4925 = vadd.f32 %v4756, %v4924
        %4926 = vmatmul.bf16.gmra.mxu0 %v1469
        %v4927 = vpop.f32.mrf.mxu0
        %v4928 = vadd.f32 %v4759, %v4927
        %v4929 = vpop.f32.mrf.mxu0
        %v4930 = vadd.f32 %v4761, %v4929
        %4931 = vmatmul.bf16.gmra.mxu0 %v1473
        %v4932 = vpop.f32.mrf.mxu0
        %v4933 = vadd.f32 %v4764, %v4932
        %v4934 = vpop.f32.mrf.mxu0
        %v4935 = vadd.f32 %v4766, %v4934
        %4936 = vmatmul.bf16.gmra.mxu0 %v1477
        %v4937 = vpop.f32.mrf.mxu0
        %v4938 = vadd.f32 %v4769, %v4937
        %v4939 = vpop.f32.mrf.mxu0
        %v4940 = vadd.f32 %v4771, %v4939
        %4941 = vmatmul.bf16.gmra.mxu0 %v1481
        %v4942 = vpop.f32.mrf.mxu0
        %v4943 = vadd.f32 %v4774, %v4942
        %v4944 = vpop.f32.mrf.mxu0
        %v4945 = vadd.f32 %v4776, %v4944
        %4946 = vmatmul.bf16.gmra.mxu0 %v1485
        %v4947 = vpop.f32.mrf.mxu0
        %v4948 = vadd.f32 %v4779, %v4947
        %v4949 = vpop.f32.mrf.mxu0
        %v4950 = vadd.f32 %v4781, %v4949
        %4951 = vmatmul.bf16.gmra.mxu0 %v1489
        %v4952 = vpop.f32.mrf.mxu0
        %v4953 = vadd.f32 %v4784, %v4952
        %v4954 = vpop.f32.mrf.mxu0
        %v4955 = vadd.f32 %v4786, %v4954
        %4956 = vmatmul.bf16.gmra.mxu0 %v1493
        %v4957 = vpop.f32.mrf.mxu0
        %v4958 = vadd.f32 %v4789, %v4957
        %v4959 = vpop.f32.mrf.mxu0
        %v4960 = vadd.f32 %v4791, %v4959
        %4961 = vmatmul.bf16.gmra.mxu0 %v1497
        %v4962 = vpop.f32.mrf.mxu0
        %v4963 = vadd.f32 %v4794, %v4962
        %v4964 = vpop.f32.mrf.mxu0
        %v4965 = vadd.f32 %v4796, %v4964
        %4966 = vmatmul.bf16.gmra.mxu0 %v1501
        %v4967 = vpop.f32.mrf.mxu0
        %v4968 = vadd.f32 %v4799, %v4967
        %v4969 = vpop.f32.mrf.mxu0
        %v4970 = vadd.f32 %v4801, %v4969
        %4971 = vmatmul.bf16.gmra.mxu0 %v1505
        %v4972 = vpop.f32.mrf.mxu0
        %v4973 = vadd.f32 %v4804, %v4972
        %v4974 = vpop.f32.mrf.mxu0
        %v4975 = vadd.f32 %v4806, %v4974
        %4976 = vmatmul.bf16.gmra.mxu0 %v1509
        %v4977 = vpop.f32.mrf.mxu0
        %v4978 = vadd.f32 %v4809, %v4977
        %v4979 = vpop.f32.mrf.mxu0
        %v4980 = vadd.f32 %v4811, %v4979
        %4981 = vdwg.mxu0
        %v4982 = vadd.f32 %v486, %v2795
        %v4983 = vadd.f32 %v487, %v3471
        %v4984 = vadd.f32 %v488, %v4147
        %v4985 = vadd.f32 %v489, %v4823
        %v4986 = vadd.f32 %v490, %v2797
        %v4987 = vadd.f32 %v491, %v3473
        %v4988 = vadd.f32 %v492, %v4149
        %v4989 = vadd.f32 %v493, %v4825
        %v4990 = vadd.f32 %v494, %v2800
        %v4991 = vadd.f32 %v495, %v3476
        %v4992 = vadd.f32 %v496, %v4152
        %v4993 = vadd.f32 %v497, %v4828
        %v4994 = vadd.f32 %v498, %v2802
        %v4995 = vadd.f32 %v499, %v3478
        %v4996 = vadd.f32 %v500, %v4154
        %v4997 = vadd.f32 %v501, %v4830
        %v4998 = vadd.f32 %v502, %v2805
        %v4999 = vadd.f32 %v503, %v3481
        %v5000 = vadd.f32 %v504, %v4157
        %v5001 = vadd.f32 %v505, %v4833
        %v5002 = vadd.f32 %v506, %v2807
        %v5003 = vadd.f32 %v507, %v3483
        %v5004 = vadd.f32 %v508, %v4159
        %v5005 = vadd.f32 %v509, %v4835
        %v5006 = vadd.f32 %v510, %v2810
        %v5007 = vadd.f32 %v511, %v3486
        %v5008 = vadd.f32 %v512, %v4162
        %v5009 = vadd.f32 %v513, %v4838
        %v5010 = vadd.f32 %v514, %v2812
        %v5011 = vadd.f32 %v515, %v3488
        %v5012 = vadd.f32 %v516, %v4164
        %v5013 = vadd.f32 %v517, %v4840
        %v5014 = vadd.f32 %v518, %v2815
        %v5015 = vadd.f32 %v519, %v3491
        %v5016 = vadd.f32 %v520, %v4167
        %v5017 = vadd.f32 %v521, %v4843
        %v5018 = vadd.f32 %v522, %v2817
        %v5019 = vadd.f32 %v523, %v3493
        %v5020 = vadd.f32 %v524, %v4169
        %v5021 = vadd.f32 %v525, %v4845
        %v5022 = vadd.f32 %v526, %v2820
        %v5023 = vadd.f32 %v527, %v3496
        %v5024 = vadd.f32 %v528, %v4172
        %v5025 = vadd.f32 %v529, %v4848
        %v5026 = vadd.f32 %v530, %v2822
        %v5027 = vadd.f32 %v531, %v3498
        %v5028 = vadd.f32 %v532, %v4174
        %v5029 = vadd.f32 %v533, %v4850
        %v5030 = vadd.f32 %v534, %v2825
        %v5031 = vadd.f32 %v535, %v3501
        %v5032 = vadd.f32 %v536, %v4177
        %v5033 = vadd.f32 %v537, %v4853
        %v5034 = vadd.f32 %v538, %v2827
        %v5035 = vadd.f32 %v539, %v3503
        %v5036 = vadd.f32 %v540, %v4179
        %v5037 = vadd.f32 %v541, %v4855
        %v5038 = vadd.f32 %v542, %v2830
        %v5039 = vadd.f32 %v543, %v3506
        %v5040 = vadd.f32 %v544, %v4182
        %v5041 = vadd.f32 %v545, %v4858
        %v5042 = vadd.f32 %v546, %v2832
        %v5043 = vadd.f32 %v547, %v3508
        %v5044 = vadd.f32 %v548, %v4184
        %v5045 = vadd.f32 %v549, %v4860
        %v5046 = vadd.f32 %v550, %v2835
        %v5047 = vadd.f32 %v551, %v3511
        %v5048 = vadd.f32 %v552, %v4187
        %v5049 = vadd.f32 %v553, %v4863
        %v5050 = vadd.f32 %v554, %v2837
        %v5051 = vadd.f32 %v555, %v3513
        %v5052 = vadd.f32 %v556, %v4189
        %v5053 = vadd.f32 %v557, %v4865
        %v5054 = vadd.f32 %v558, %v2840
        %v5055 = vadd.f32 %v559, %v3516
        %v5056 = vadd.f32 %v560, %v4192
        %v5057 = vadd.f32 %v561, %v4868
        %v5058 = vadd.f32 %v562, %v2842
        %v5059 = vadd.f32 %v563, %v3518
        %v5060 = vadd.f32 %v564, %v4194
        %v5061 = vadd.f32 %v565, %v4870
        %v5062 = vadd.f32 %v566, %v2845
        %v5063 = vadd.f32 %v567, %v3521
        %v5064 = vadd.f32 %v568, %v4197
        %v5065 = vadd.f32 %v569, %v4873
        %v5066 = vadd.f32 %v570, %v2847
        %v5067 = vadd.f32 %v571, %v3523
        %v5068 = vadd.f32 %v572, %v4199
        %v5069 = vadd.f32 %v573, %v4875
        %v5070 = vadd.f32 %v574, %v2850
        %v5071 = vadd.f32 %v575, %v3526
        %v5072 = vadd.f32 %v576, %v4202
        %v5073 = vadd.f32 %v577, %v4878
        %v5074 = vadd.f32 %v578, %v2852
        %v5075 = vadd.f32 %v579, %v3528
        %v5076 = vadd.f32 %v580, %v4204
        %v5077 = vadd.f32 %v581, %v4880
        %v5078 = vadd.f32 %v582, %v2855
        %v5079 = vadd.f32 %v583, %v3531
        %v5080 = vadd.f32 %v584, %v4207
        %v5081 = vadd.f32 %v585, %v4883
        %v5082 = vadd.f32 %v586, %v2857
        %v5083 = vadd.f32 %v587, %v3533
        %v5084 = vadd.f32 %v588, %v4209
        %v5085 = vadd.f32 %v589, %v4885
        %v5086 = vadd.f32 %v590, %v2860
        %v5087 = vadd.f32 %v591, %v3536
        %v5088 = vadd.f32 %v592, %v4212
        %v5089 = vadd.f32 %v593, %v4888
        %v5090 = vadd.f32 %v594, %v2862
        %v5091 = vadd.f32 %v595, %v3538
        %v5092 = vadd.f32 %v596, %v4214
        %v5093 = vadd.f32 %v597, %v4890
        %v5094 = vadd.f32 %v598, %v2865
        %v5095 = vadd.f32 %v599, %v3541
        %v5096 = vadd.f32 %v600, %v4217
        %v5097 = vadd.f32 %v601, %v4893
        %v5098 = vadd.f32 %v602, %v2867
        %v5099 = vadd.f32 %v603, %v3543
        %v5100 = vadd.f32 %v604, %v4219
        %v5101 = vadd.f32 %v605, %v4895
        %v5102 = vadd.f32 %v606, %v2870
        %v5103 = vadd.f32 %v607, %v3546
        %v5104 = vadd.f32 %v608, %v4222
        %v5105 = vadd.f32 %v609, %v4898
        %v5106 = vadd.f32 %v610, %v2872
        %v5107 = vadd.f32 %v611, %v3548
        %v5108 = vadd.f32 %v612, %v4224
        %v5109 = vadd.f32 %v613, %v4900
        %v5110 = vadd.f32 %v614, %v2875
        %v5111 = vadd.f32 %v615, %v3551
        %v5112 = vadd.f32 %v616, %v4227
        %v5113 = vadd.f32 %v617, %v4903
        %v5114 = vadd.f32 %v618, %v2877
        %v5115 = vadd.f32 %v619, %v3553
        %v5116 = vadd.f32 %v620, %v4229
        %v5117 = vadd.f32 %v621, %v4905
        %v5118 = vadd.f32 %v622, %v2880
        %v5119 = vadd.f32 %v623, %v3556
        %v5120 = vadd.f32 %v624, %v4232
        %v5121 = vadd.f32 %v625, %v4908
        %v5122 = vadd.f32 %v626, %v2882
        %v5123 = vadd.f32 %v627, %v3558
        %v5124 = vadd.f32 %v628, %v4234
        %v5125 = vadd.f32 %v629, %v4910
        %v5126 = vadd.f32 %v630, %v2885
        %v5127 = vadd.f32 %v631, %v3561
        %v5128 = vadd.f32 %v632, %v4237
        %v5129 = vadd.f32 %v633, %v4913
        %v5130 = vadd.f32 %v634, %v2887
        %v5131 = vadd.f32 %v635, %v3563
        %v5132 = vadd.f32 %v636, %v4239
        %v5133 = vadd.f32 %v637, %v4915
        %v5134 = vadd.f32 %v638, %v2890
        %v5135 = vadd.f32 %v639, %v3566
        %v5136 = vadd.f32 %v640, %v4242
        %v5137 = vadd.f32 %v641, %v4918
        %v5138 = vadd.f32 %v642, %v2892
        %v5139 = vadd.f32 %v643, %v3568
        %v5140 = vadd.f32 %v644, %v4244
        %v5141 = vadd.f32 %v645, %v4920
        %v5142 = vadd.f32 %v646, %v2895
        %v5143 = vadd.f32 %v647, %v3571
        %v5144 = vadd.f32 %v648, %v4247
        %v5145 = vadd.f32 %v649, %v4923
        %v5146 = vadd.f32 %v650, %v2897
        %v5147 = vadd.f32 %v651, %v3573
        %v5148 = vadd.f32 %v652, %v4249
        %v5149 = vadd.f32 %v653, %v4925
        %v5150 = vadd.f32 %v654, %v2900
        %v5151 = vadd.f32 %v655, %v3576
        %v5152 = vadd.f32 %v656, %v4252
        %v5153 = vadd.f32 %v657, %v4928
        %v5154 = vadd.f32 %v658, %v2902
        %v5155 = vadd.f32 %v659, %v3578
        %v5156 = vadd.f32 %v660, %v4254
        %v5157 = vadd.f32 %v661, %v4930
        %v5158 = vadd.f32 %v662, %v2905
        %v5159 = vadd.f32 %v663, %v3581
        %v5160 = vadd.f32 %v664, %v4257
        %v5161 = vadd.f32 %v665, %v4933
        %v5162 = vadd.f32 %v666, %v2907
        %v5163 = vadd.f32 %v667, %v3583
        %v5164 = vadd.f32 %v668, %v4259
        %v5165 = vadd.f32 %v669, %v4935
        %v5166 = vadd.f32 %v670, %v2910
        %v5167 = vadd.f32 %v671, %v3586
        %v5168 = vadd.f32 %v672, %v4262
        %v5169 = vadd.f32 %v673, %v4938
        %v5170 = vadd.f32 %v674, %v2912
        %v5171 = vadd.f32 %v675, %v3588
        %v5172 = vadd.f32 %v676, %v4264
        %v5173 = vadd.f32 %v677, %v4940
        %v5174 = vadd.f32 %v678, %v2915
        %v5175 = vadd.f32 %v679, %v3591
        %v5176 = vadd.f32 %v680, %v4267
        %v5177 = vadd.f32 %v681, %v4943
        %v5178 = vadd.f32 %v682, %v2917
        %v5179 = vadd.f32 %v683, %v3593
        %v5180 = vadd.f32 %v684, %v4269
        %v5181 = vadd.f32 %v685, %v4945
        %v5182 = vadd.f32 %v686, %v2920
        %v5183 = vadd.f32 %v687, %v3596
        %v5184 = vadd.f32 %v688, %v4272
        %v5185 = vadd.f32 %v689, %v4948
        %v5186 = vadd.f32 %v690, %v2922
        %v5187 = vadd.f32 %v691, %v3598
        %v5188 = vadd.f32 %v692, %v4274
        %v5189 = vadd.f32 %v693, %v4950
        %v5190 = vadd.f32 %v694, %v2925
        %v5191 = vadd.f32 %v695, %v3601
        %v5192 = vadd.f32 %v696, %v4277
        %v5193 = vadd.f32 %v697, %v4953
        %v5194 = vadd.f32 %v698, %v2927
        %v5195 = vadd.f32 %v699, %v3603
        %v5196 = vadd.f32 %v700, %v4279
        %v5197 = vadd.f32 %v701, %v4955
        %v5198 = vadd.f32 %v702, %v2930
        %v5199 = vadd.f32 %v703, %v3606
        %v5200 = vadd.f32 %v704, %v4282
        %v5201 = vadd.f32 %v705, %v4958
        %v5202 = vadd.f32 %v706, %v2932
        %v5203 = vadd.f32 %v707, %v3608
        %v5204 = vadd.f32 %v708, %v4284
        %v5205 = vadd.f32 %v709, %v4960
        %v5206 = vadd.f32 %v710, %v2935
        %v5207 = vadd.f32 %v711, %v3611
        %v5208 = vadd.f32 %v712, %v4287
        %v5209 = vadd.f32 %v713, %v4963
        %v5210 = vadd.f32 %v714, %v2937
        %v5211 = vadd.f32 %v715, %v3613
        %v5212 = vadd.f32 %v716, %v4289
        %v5213 = vadd.f32 %v717, %v4965
        %v5214 = vadd.f32 %v718, %v2940
        %v5215 = vadd.f32 %v719, %v3616
        %v5216 = vadd.f32 %v720, %v4292
        %v5217 = vadd.f32 %v721, %v4968
        %v5218 = vadd.f32 %v722, %v2942
        %v5219 = vadd.f32 %v723, %v3618
        %v5220 = vadd.f32 %v724, %v4294
        %v5221 = vadd.f32 %v725, %v4970
        %v5222 = vadd.f32 %v726, %v2945
        %v5223 = vadd.f32 %v727, %v3621
        %v5224 = vadd.f32 %v728, %v4297
        %v5225 = vadd.f32 %v729, %v4973
        %v5226 = vadd.f32 %v730, %v2947
        %v5227 = vadd.f32 %v731, %v3623
        %v5228 = vadd.f32 %v732, %v4299
        %v5229 = vadd.f32 %v733, %v4975
        %v5230 = vadd.f32 %v734, %v2950
        %v5231 = vadd.f32 %v735, %v3626
        %v5232 = vadd.f32 %v736, %v4302
        %v5233 = vadd.f32 %v737, %v4978
        %v5234 = vadd.f32 %v738, %v2952
        %v5235 = vadd.f32 %v739, %v3628
        %v5236 = vadd.f32 %v740, %v4304
        %v5237 = vadd.f32 %v741, %v4980
        %5238 = vst [vmem:[#allocation2] sm:$0xff] %v4982
        %5239 = vst [vmem:[#allocation2 + $0x8] sm:$0xff] %v4983
        %5240 = vst [vmem:[#allocation2 + $0x10] sm:$0xff] %v4984
        %5241 = vst [vmem:[#allocation2 + $0x18] sm:$0xff] %v4985
        %5242 = vst [vmem:[#allocation2 + $0x20] sm:$0xff] %v4986
        %5243 = vst [vmem:[#allocation2 + $0x28] sm:$0xff] %v4987
        %5244 = vst [vmem:[#allocation2 + $0x30] sm:$0xff] %v4988
        %5245 = vst [vmem:[#allocation2 + $0x38] sm:$0xff] %v4989
        %5246 = vst [vmem:[#allocation2 + $0x40] sm:$0xff] %v4990
        %5247 = vst [vmem:[#allocation2 + $0x48] sm:$0xff] %v4991
        %5248 = vst [vmem:[#allocation2 + $0x50] sm:$0xff] %v4992
        %5249 = vst [vmem:[#allocation2 + $0x58] sm:$0xff] %v4993
        %5250 = vst [vmem:[#allocation2 + $0x60] sm:$0xff] %v4994
        %5251 = vst [vmem:[#allocation2 + $0x68] sm:$0xff] %v4995
        %5252 = vst [vmem:[#allocation2 + $0x70] sm:$0xff] %v4996
        %5253 = vst [vmem:[#allocation2 + $0x78] sm:$0xff] %v4997
        %5254 = vst [vmem:[#allocation2 + $0x80] sm:$0xff] %v4998
        %5255 = vst [vmem:[#allocation2 + $0x88] sm:$0xff] %v4999
        %5256 = vst [vmem:[#allocation2 + $0x90] sm:$0xff] %v5000
        %5257 = vst [vmem:[#allocation2 + $0x98] sm:$0xff] %v5001
        %5258 = vst [vmem:[#allocation2 + $0xa0] sm:$0xff] %v5002
        %5259 = vst [vmem:[#allocation2 + $0xa8] sm:$0xff] %v5003
        %5260 = vst [vmem:[#allocation2 + $0xb0] sm:$0xff] %v5004
        %5261 = vst [vmem:[#allocation2 + $0xb8] sm:$0xff] %v5005
        %5262 = vst [vmem:[#allocation2 + $0xc0] sm:$0xff] %v5006
        %5263 = vst [vmem:[#allocation2 + $0xc8] sm:$0xff] %v5007
        %5264 = vst [vmem:[#allocation2 + $0xd0] sm:$0xff] %v5008
        %5265 = vst [vmem:[#allocation2 + $0xd8] sm:$0xff] %v5009
        %5266 = vst [vmem:[#allocation2 + $0xe0] sm:$0xff] %v5010
        %5267 = vst [vmem:[#allocation2 + $0xe8] sm:$0xff] %v5011
        %5268 = vst [vmem:[#allocation2 + $0xf0] sm:$0xff] %v5012
        %5269 = vst [vmem:[#allocation2 + $0xf8] sm:$0xff] %v5013
        %5270 = vst [vmem:[#allocation2 + $0x100] sm:$0xff] %v5014
        %5271 = vst [vmem:[#allocation2 + $0x108] sm:$0xff] %v5015
        %5272 = vst [vmem:[#allocation2 + $0x110] sm:$0xff] %v5016
        %5273 = vst [vmem:[#allocation2 + $0x118] sm:$0xff] %v5017
        %5274 = vst [vmem:[#allocation2 + $0x120] sm:$0xff] %v5018
        %5275 = vst [vmem:[#allocation2 + $0x128] sm:$0xff] %v5019
        %5276 = vst [vmem:[#allocation2 + $0x130] sm:$0xff] %v5020
        %5277 = vst [vmem:[#allocation2 + $0x138] sm:$0xff] %v5021
        %5278 = vst [vmem:[#allocation2 + $0x140] sm:$0xff] %v5022
        %5279 = vst [vmem:[#allocation2 + $0x148] sm:$0xff] %v5023
        %5280 = vst [vmem:[#allocation2 + $0x150] sm:$0xff] %v5024
        %5281 = vst [vmem:[#allocation2 + $0x158] sm:$0xff] %v5025
        %5282 = vst [vmem:[#allocation2 + $0x160] sm:$0xff] %v5026
        %5283 = vst [vmem:[#allocation2 + $0x168] sm:$0xff] %v5027
        %5284 = vst [vmem:[#allocation2 + $0x170] sm:$0xff] %v5028
        %5285 = vst [vmem:[#allocation2 + $0x178] sm:$0xff] %v5029
        %5286 = vst [vmem:[#allocation2 + $0x180] sm:$0xff] %v5030
        %5287 = vst [vmem:[#allocation2 + $0x188] sm:$0xff] %v5031
        %5288 = vst [vmem:[#allocation2 + $0x190] sm:$0xff] %v5032
        %5289 = vst [vmem:[#allocation2 + $0x198] sm:$0xff] %v5033
        %5290 = vst [vmem:[#allocation2 + $0x1a0] sm:$0xff] %v5034
        %5291 = vst [vmem:[#allocation2 + $0x1a8] sm:$0xff] %v5035
        %5292 = vst [vmem:[#allocation2 + $0x1b0] sm:$0xff] %v5036
        %5293 = vst [vmem:[#allocation2 + $0x1b8] sm:$0xff] %v5037
        %5294 = vst [vmem:[#allocation2 + $0x1c0] sm:$0xff] %v5038
        %5295 = vst [vmem:[#allocation2 + $0x1c8] sm:$0xff] %v5039
        %5296 = vst [vmem:[#allocation2 + $0x1d0] sm:$0xff] %v5040
        %5297 = vst [vmem:[#allocation2 + $0x1d8] sm:$0xff] %v5041
        %5298 = vst [vmem:[#allocation2 + $0x1e0] sm:$0xff] %v5042
        %5299 = vst [vmem:[#allocation2 + $0x1e8] sm:$0xff] %v5043
        %5300 = vst [vmem:[#allocation2 + $0x1f0] sm:$0xff] %v5044
        %5301 = vst [vmem:[#allocation2 + $0x1f8] sm:$0xff] %v5045
        %5302 = vst [vmem:[#allocation2 + $0x200] sm:$0xff] %v5046
        %5303 = vst [vmem:[#allocation2 + $0x208] sm:$0xff] %v5047
        %5304 = vst [vmem:[#allocation2 + $0x210] sm:$0xff] %v5048
        %5305 = vst [vmem:[#allocation2 + $0x218] sm:$0xff] %v5049
        %5306 = vst [vmem:[#allocation2 + $0x220] sm:$0xff] %v5050
        %5307 = vst [vmem:[#allocation2 + $0x228] sm:$0xff] %v5051
        %5308 = vst [vmem:[#allocation2 + $0x230] sm:$0xff] %v5052
        %5309 = vst [vmem:[#allocation2 + $0x238] sm:$0xff] %v5053
        %5310 = vst [vmem:[#allocation2 + $0x240] sm:$0xff] %v5054
        %5311 = vst [vmem:[#allocation2 + $0x248] sm:$0xff] %v5055
        %5312 = vst [vmem:[#allocation2 + $0x250] sm:$0xff] %v5056
        %5313 = vst [vmem:[#allocation2 + $0x258] sm:$0xff] %v5057
        %5314 = vst [vmem:[#allocation2 + $0x260] sm:$0xff] %v5058
        %5315 = vst [vmem:[#allocation2 + $0x268] sm:$0xff] %v5059
        %5316 = vst [vmem:[#allocation2 + $0x270] sm:$0xff] %v5060
        %5317 = vst [vmem:[#allocation2 + $0x278] sm:$0xff] %v5061
        %5318 = vst [vmem:[#allocation2 + $0x280] sm:$0xff] %v5062
        %5319 = vst [vmem:[#allocation2 + $0x288] sm:$0xff] %v5063
        %5320 = vst [vmem:[#allocation2 + $0x290] sm:$0xff] %v5064
        %5321 = vst [vmem:[#allocation2 + $0x298] sm:$0xff] %v5065
        %5322 = vst [vmem:[#allocation2 + $0x2a0] sm:$0xff] %v5066
        %5323 = vst [vmem:[#allocation2 + $0x2a8] sm:$0xff] %v5067
        %5324 = vst [vmem:[#allocation2 + $0x2b0] sm:$0xff] %v5068
        %5325 = vst [vmem:[#allocation2 + $0x2b8] sm:$0xff] %v5069
        %5326 = vst [vmem:[#allocation2 + $0x2c0] sm:$0xff] %v5070
        %5327 = vst [vmem:[#allocation2 + $0x2c8] sm:$0xff] %v5071
        %5328 = vst [vmem:[#allocation2 + $0x2d0] sm:$0xff] %v5072
        %5329 = vst [vmem:[#allocation2 + $0x2d8] sm:$0xff] %v5073
        %5330 = vst [vmem:[#allocation2 + $0x2e0] sm:$0xff] %v5074
        %5331 = vst [vmem:[#allocation2 + $0x2e8] sm:$0xff] %v5075
        %5332 = vst [vmem:[#allocation2 + $0x2f0] sm:$0xff] %v5076
        %5333 = vst [vmem:[#allocation2 + $0x2f8] sm:$0xff] %v5077
        %5334 = vst [vmem:[#allocation2 + $0x300] sm:$0xff] %v5078
        %5335 = vst [vmem:[#allocation2 + $0x308] sm:$0xff] %v5079
        %5336 = vst [vmem:[#allocation2 + $0x310] sm:$0xff] %v5080
        %5337 = vst [vmem:[#allocation2 + $0x318] sm:$0xff] %v5081
        %5338 = vst [vmem:[#allocation2 + $0x320] sm:$0xff] %v5082
        %5339 = vst [vmem:[#allocation2 + $0x328] sm:$0xff] %v5083
        %5340 = vst [vmem:[#allocation2 + $0x330] sm:$0xff] %v5084
        %5341 = vst [vmem:[#allocation2 + $0x338] sm:$0xff] %v5085
        %5342 = vst [vmem:[#allocation2 + $0x340] sm:$0xff] %v5086
        %5343 = vst [vmem:[#allocation2 + $0x348] sm:$0xff] %v5087
        %5344 = vst [vmem:[#allocation2 + $0x350] sm:$0xff] %v5088
        %5345 = vst [vmem:[#allocation2 + $0x358] sm:$0xff] %v5089
        %5346 = vst [vmem:[#allocation2 + $0x360] sm:$0xff] %v5090
        %5347 = vst [vmem:[#allocation2 + $0x368] sm:$0xff] %v5091
        %5348 = vst [vmem:[#allocation2 + $0x370] sm:$0xff] %v5092
        %5349 = vst [vmem:[#allocation2 + $0x378] sm:$0xff] %v5093
        %5350 = vst [vmem:[#allocation2 + $0x380] sm:$0xff] %v5094
        %5351 = vst [vmem:[#allocation2 + $0x388] sm:$0xff] %v5095
        %5352 = vst [vmem:[#allocation2 + $0x390] sm:$0xff] %v5096
        %5353 = vst [vmem:[#allocation2 + $0x398] sm:$0xff] %v5097
        %5354 = vst [vmem:[#allocation2 + $0x3a0] sm:$0xff] %v5098
        %5355 = vst [vmem:[#allocation2 + $0x3a8] sm:$0xff] %v5099
        %5356 = vst [vmem:[#allocation2 + $0x3b0] sm:$0xff] %v5100
        %5357 = vst [vmem:[#allocation2 + $0x3b8] sm:$0xff] %v5101
        %5358 = vst [vmem:[#allocation2 + $0x3c0] sm:$0xff] %v5102
        %5359 = vst [vmem:[#allocation2 + $0x3c8] sm:$0xff] %v5103
        %5360 = vst [vmem:[#allocation2 + $0x3d0] sm:$0xff] %v5104
        %5361 = vst [vmem:[#allocation2 + $0x3d8] sm:$0xff] %v5105
        %5362 = vst [vmem:[#allocation2 + $0x3e0] sm:$0xff] %v5106
        %5363 = vst [vmem:[#allocation2 + $0x3e8] sm:$0xff] %v5107
        %5364 = vst [vmem:[#allocation2 + $0x3f0] sm:$0xff] %v5108
        %5365 = vst [vmem:[#allocation2 + $0x3f8] sm:$0xff] %v5109
        %5366 = vst [vmem:[#allocation2 + $0x400] sm:$0xff] %v5110
        %5367 = vst [vmem:[#allocation2 + $0x408] sm:$0xff] %v5111
        %5368 = vst [vmem:[#allocation2 + $0x410] sm:$0xff] %v5112
        %5369 = vst [vmem:[#allocation2 + $0x418] sm:$0xff] %v5113
        %5370 = vst [vmem:[#allocation2 + $0x420] sm:$0xff] %v5114
        %5371 = vst [vmem:[#allocation2 + $0x428] sm:$0xff] %v5115
        %5372 = vst [vmem:[#allocation2 + $0x430] sm:$0xff] %v5116
        %5373 = vst [vmem:[#allocation2 + $0x438] sm:$0xff] %v5117
        %5374 = vst [vmem:[#allocation2 + $0x440] sm:$0xff] %v5118
        %5375 = vst [vmem:[#allocation2 + $0x448] sm:$0xff] %v5119
        %5376 = vst [vmem:[#allocation2 + $0x450] sm:$0xff] %v5120
        %5377 = vst [vmem:[#allocation2 + $0x458] sm:$0xff] %v5121
        %5378 = vst [vmem:[#allocation2 + $0x460] sm:$0xff] %v5122
        %5379 = vst [vmem:[#allocation2 + $0x468] sm:$0xff] %v5123
        %5380 = vst [vmem:[#allocation2 + $0x470] sm:$0xff] %v5124
        %5381 = vst [vmem:[#allocation2 + $0x478] sm:$0xff] %v5125
        %5382 = vst [vmem:[#allocation2 + $0x480] sm:$0xff] %v5126
        %5383 = vst [vmem:[#allocation2 + $0x488] sm:$0xff] %v5127
        %5384 = vst [vmem:[#allocation2 + $0x490] sm:$0xff] %v5128
        %5385 = vst [vmem:[#allocation2 + $0x498] sm:$0xff] %v5129
        %5386 = vst [vmem:[#allocation2 + $0x4a0] sm:$0xff] %v5130
        %5387 = vst [vmem:[#allocation2 + $0x4a8] sm:$0xff] %v5131
        %5388 = vst [vmem:[#allocation2 + $0x4b0] sm:$0xff] %v5132
        %5389 = vst [vmem:[#allocation2 + $0x4b8] sm:$0xff] %v5133
        %5390 = vst [vmem:[#allocation2 + $0x4c0] sm:$0xff] %v5134
        %5391 = vst [vmem:[#allocation2 + $0x4c8] sm:$0xff] %v5135
        %5392 = vst [vmem:[#allocation2 + $0x4d0] sm:$0xff] %v5136
        %5393 = vst [vmem:[#allocation2 + $0x4d8] sm:$0xff] %v5137
        %5394 = vst [vmem:[#allocation2 + $0x4e0] sm:$0xff] %v5138
        %5395 = vst [vmem:[#allocation2 + $0x4e8] sm:$0xff] %v5139
        %5396 = vst [vmem:[#allocation2 + $0x4f0] sm:$0xff] %v5140
        %5397 = vst [vmem:[#allocation2 + $0x4f8] sm:$0xff] %v5141
        %5398 = vst [vmem:[#allocation2 + $0x500] sm:$0xff] %v5142
        %5399 = vst [vmem:[#allocation2 + $0x508] sm:$0xff] %v5143
        %5400 = vst [vmem:[#allocation2 + $0x510] sm:$0xff] %v5144
        %5401 = vst [vmem:[#allocation2 + $0x518] sm:$0xff] %v5145
        %5402 = vst [vmem:[#allocation2 + $0x520] sm:$0xff] %v5146
        %5403 = vst [vmem:[#allocation2 + $0x528] sm:$0xff] %v5147
        %5404 = vst [vmem:[#allocation2 + $0x530] sm:$0xff] %v5148
        %5405 = vst [vmem:[#allocation2 + $0x538] sm:$0xff] %v5149
        %5406 = vst [vmem:[#allocation2 + $0x540] sm:$0xff] %v5150
        %5407 = vst [vmem:[#allocation2 + $0x548] sm:$0xff] %v5151
        %5408 = vst [vmem:[#allocation2 + $0x550] sm:$0xff] %v5152
        %5409 = vst [vmem:[#allocation2 + $0x558] sm:$0xff] %v5153
        %5410 = vst [vmem:[#allocation2 + $0x560] sm:$0xff] %v5154
        %5411 = vst [vmem:[#allocation2 + $0x568] sm:$0xff] %v5155
        %5412 = vst [vmem:[#allocation2 + $0x570] sm:$0xff] %v5156
        %5413 = vst [vmem:[#allocation2 + $0x578] sm:$0xff] %v5157
        %5414 = vst [vmem:[#allocation2 + $0x580] sm:$0xff] %v5158
        %5415 = vst [vmem:[#allocation2 + $0x588] sm:$0xff] %v5159
        %5416 = vst [vmem:[#allocation2 + $0x590] sm:$0xff] %v5160
        %5417 = vst [vmem:[#allocation2 + $0x598] sm:$0xff] %v5161
        %5418 = vst [vmem:[#allocation2 + $0x5a0] sm:$0xff] %v5162
        %5419 = vst [vmem:[#allocation2 + $0x5a8] sm:$0xff] %v5163
        %5420 = vst [vmem:[#allocation2 + $0x5b0] sm:$0xff] %v5164
        %5421 = vst [vmem:[#allocation2 + $0x5b8] sm:$0xff] %v5165
        %5422 = vst [vmem:[#allocation2 + $0x5c0] sm:$0xff] %v5166
        %5423 = vst [vmem:[#allocation2 + $0x5c8] sm:$0xff] %v5167
        %5424 = vst [vmem:[#allocation2 + $0x5d0] sm:$0xff] %v5168
        %5425 = vst [vmem:[#allocation2 + $0x5d8] sm:$0xff] %v5169
        %5426 = vst [vmem:[#allocation2 + $0x5e0] sm:$0xff] %v5170
        %5427 = vst [vmem:[#allocation2 + $0x5e8] sm:$0xff] %v5171
        %5428 = vst [vmem:[#allocation2 + $0x5f0] sm:$0xff] %v5172
        %5429 = vst [vmem:[#allocation2 + $0x5f8] sm:$0xff] %v5173
        %5430 = vst [vmem:[#allocation2 + $0x600] sm:$0xff] %v5174
        %5431 = vst [vmem:[#allocation2 + $0x608] sm:$0xff] %v5175
        %5432 = vst [vmem:[#allocation2 + $0x610] sm:$0xff] %v5176
        %5433 = vst [vmem:[#allocation2 + $0x618] sm:$0xff] %v5177
        %5434 = vst [vmem:[#allocation2 + $0x620] sm:$0xff] %v5178
        %5435 = vst [vmem:[#allocation2 + $0x628] sm:$0xff] %v5179
        %5436 = vst [vmem:[#allocation2 + $0x630] sm:$0xff] %v5180
        %5437 = vst [vmem:[#allocation2 + $0x638] sm:$0xff] %v5181
        %5438 = vst [vmem:[#allocation2 + $0x640] sm:$0xff] %v5182
        %5439 = vst [vmem:[#allocation2 + $0x648] sm:$0xff] %v5183
        %5440 = vst [vmem:[#allocation2 + $0x650] sm:$0xff] %v5184
        %5441 = vst [vmem:[#allocation2 + $0x658] sm:$0xff] %v5185
        %5442 = vst [vmem:[#allocation2 + $0x660] sm:$0xff] %v5186
        %5443 = vst [vmem:[#allocation2 + $0x668] sm:$0xff] %v5187
        %5444 = vst [vmem:[#allocation2 + $0x670] sm:$0xff] %v5188
        %5445 = vst [vmem:[#allocation2 + $0x678] sm:$0xff] %v5189
        %5446 = vst [vmem:[#allocation2 + $0x680] sm:$0xff] %v5190
        %5447 = vst [vmem:[#allocation2 + $0x688] sm:$0xff] %v5191
        %5448 = vst [vmem:[#allocation2 + $0x690] sm:$0xff] %v5192
        %5449 = vst [vmem:[#allocation2 + $0x698] sm:$0xff] %v5193
        %5450 = vst [vmem:[#allocation2 + $0x6a0] sm:$0xff] %v5194
        %5451 = vst [vmem:[#allocation2 + $0x6a8] sm:$0xff] %v5195
        %5452 = vst [vmem:[#allocation2 + $0x6b0] sm:$0xff] %v5196
        %5453 = vst [vmem:[#allocation2 + $0x6b8] sm:$0xff] %v5197
        %5454 = vst [vmem:[#allocation2 + $0x6c0] sm:$0xff] %v5198
        %5455 = vst [vmem:[#allocation2 + $0x6c8] sm:$0xff] %v5199
        %5456 = vst [vmem:[#allocation2 + $0x6d0] sm:$0xff] %v5200
        %5457 = vst [vmem:[#allocation2 + $0x6d8] sm:$0xff] %v5201
        %5458 = vst [vmem:[#allocation2 + $0x6e0] sm:$0xff] %v5202
        %5459 = vst [vmem:[#allocation2 + $0x6e8] sm:$0xff] %v5203
        %5460 = vst [vmem:[#allocation2 + $0x6f0] sm:$0xff] %v5204
        %5461 = vst [vmem:[#allocation2 + $0x6f8] sm:$0xff] %v5205
        %5462 = vst [vmem:[#allocation2 + $0x700] sm:$0xff] %v5206
        %5463 = vst [vmem:[#allocation2 + $0x708] sm:$0xff] %v5207
        %5464 = vst [vmem:[#allocation2 + $0x710] sm:$0xff] %v5208
        %5465 = vst [vmem:[#allocation2 + $0x718] sm:$0xff] %v5209
        %5466 = vst [vmem:[#allocation2 + $0x720] sm:$0xff] %v5210
        %5467 = vst [vmem:[#allocation2 + $0x728] sm:$0xff] %v5211
        %5468 = vst [vmem:[#allocation2 + $0x730] sm:$0xff] %v5212
        %5469 = vst [vmem:[#allocation2 + $0x738] sm:$0xff] %v5213
        %5470 = vst [vmem:[#allocation2 + $0x740] sm:$0xff] %v5214
        %5471 = vst [vmem:[#allocation2 + $0x748] sm:$0xff] %v5215
        %5472 = vst [vmem:[#allocation2 + $0x750] sm:$0xff] %v5216
        %5473 = vst [vmem:[#allocation2 + $0x758] sm:$0xff] %v5217
        %5474 = vst [vmem:[#allocation2 + $0x760] sm:$0xff] %v5218
        %5475 = vst [vmem:[#allocation2 + $0x768] sm:$0xff] %v5219
        %5476 = vst [vmem:[#allocation2 + $0x770] sm:$0xff] %v5220
        %5477 = vst [vmem:[#allocation2 + $0x778] sm:$0xff] %v5221
        %5478 = vst [vmem:[#allocation2 + $0x780] sm:$0xff] %v5222
        %5479 = vst [vmem:[#allocation2 + $0x788] sm:$0xff] %v5223
        %5480 = vst [vmem:[#allocation2 + $0x790] sm:$0xff] %v5224
        %5481 = vst [vmem:[#allocation2 + $0x798] sm:$0xff] %v5225
        %5482 = vst [vmem:[#allocation2 + $0x7a0] sm:$0xff] %v5226
        %5483 = vst [vmem:[#allocation2 + $0x7a8] sm:$0xff] %v5227
        %5484 = vst [vmem:[#allocation2 + $0x7b0] sm:$0xff] %v5228
        %5485 = vst [vmem:[#allocation2 + $0x7b8] sm:$0xff] %v5229
        %5486 = vst [vmem:[#allocation2 + $0x7c0] sm:$0xff] %v5230
        %5487 = vst [vmem:[#allocation2 + $0x7c8] sm:$0xff] %v5231
        %5488 = vst [vmem:[#allocation2 + $0x7d0] sm:$0xff] %v5232
        %5489 = vst [vmem:[#allocation2 + $0x7d8] sm:$0xff] %v5233
        %5490 = vst [vmem:[#allocation2 + $0x7e0] sm:$0xff] %v5234
        %5491 = vst [vmem:[#allocation2 + $0x7e8] sm:$0xff] %v5235
        %5492 = vst [vmem:[#allocation2 + $0x7f0] sm:$0xff] %v5236
        %5493 = vst [vmem:[#allocation2 + $0x7f8] sm:$0xff] %v5237
        // Predicated region
        $region41: #{tpu_custom_call.1} parent=27 // pred_check
          %p5494 = pneg %p226
        $region42: #{tpu_custom_call.1} parent=27 // pred_check_branch
          %5496 = sbr.rel (%p5494) target = $region44
        $region43: #{tpu_custom_call.1} parent=27 // pred_region
          %v5497 = vld [vmem:[#allocation2] sm:$0xff]
          %v5498 = vld [vmem:[#allocation2 + $0x8] sm:$0xff]
          %v5499 = vld [vmem:[#allocation2 + $0x10] sm:$0xff]
          %v5500 = vld [vmem:[#allocation2 + $0x18] sm:$0xff]
          %v5501 = vld [vmem:[#allocation2 + $0x20] sm:$0xff]
          %v5502 = vld [vmem:[#allocation2 + $0x28] sm:$0xff]
          %v5503 = vld [vmem:[#allocation2 + $0x30] sm:$0xff]
          %v5504 = vld [vmem:[#allocation2 + $0x38] sm:$0xff]
          %v5505 = vld [vmem:[#allocation2 + $0x40] sm:$0xff]
          %v5506 = vld [vmem:[#allocation2 + $0x48] sm:$0xff]
          %v5507 = vld [vmem:[#allocation2 + $0x50] sm:$0xff]
          %v5508 = vld [vmem:[#allocation2 + $0x58] sm:$0xff]
          %v5509 = vld [vmem:[#allocation2 + $0x60] sm:$0xff]
          %v5510 = vld [vmem:[#allocation2 + $0x68] sm:$0xff]
          %v5511 = vld [vmem:[#allocation2 + $0x70] sm:$0xff]
          %v5512 = vld [vmem:[#allocation2 + $0x78] sm:$0xff]
          %v5513 = vld [vmem:[#allocation2 + $0x80] sm:$0xff]
          %v5514 = vld [vmem:[#allocation2 + $0x88] sm:$0xff]
          %v5515 = vld [vmem:[#allocation2 + $0x90] sm:$0xff]
          %v5516 = vld [vmem:[#allocation2 + $0x98] sm:$0xff]
          %v5517 = vld [vmem:[#allocation2 + $0xa0] sm:$0xff]
          %v5518 = vld [vmem:[#allocation2 + $0xa8] sm:$0xff]
          %v5519 = vld [vmem:[#allocation2 + $0xb0] sm:$0xff]
          %v5520 = vld [vmem:[#allocation2 + $0xb8] sm:$0xff]
          %v5521 = vld [vmem:[#allocation2 + $0xc0] sm:$0xff]
          %v5522 = vld [vmem:[#allocation2 + $0xc8] sm:$0xff]
          %v5523 = vld [vmem:[#allocation2 + $0xd0] sm:$0xff]
          %v5524 = vld [vmem:[#allocation2 + $0xd8] sm:$0xff]
          %v5525 = vld [vmem:[#allocation2 + $0xe0] sm:$0xff]
          %v5526 = vld [vmem:[#allocation2 + $0xe8] sm:$0xff]
          %v5527 = vld [vmem:[#allocation2 + $0xf0] sm:$0xff]
          %v5528 = vld [vmem:[#allocation2 + $0xf8] sm:$0xff]
          %v5529 = vld [vmem:[#allocation2 + $0x100] sm:$0xff]
          %v5530 = vld [vmem:[#allocation2 + $0x108] sm:$0xff]
          %v5531 = vld [vmem:[#allocation2 + $0x110] sm:$0xff]
          %v5532 = vld [vmem:[#allocation2 + $0x118] sm:$0xff]
          %v5533 = vld [vmem:[#allocation2 + $0x120] sm:$0xff]
          %v5534 = vld [vmem:[#allocation2 + $0x128] sm:$0xff]
          %v5535 = vld [vmem:[#allocation2 + $0x130] sm:$0xff]
          %v5536 = vld [vmem:[#allocation2 + $0x138] sm:$0xff]
          %v5537 = vld [vmem:[#allocation2 + $0x140] sm:$0xff]
          %v5538 = vld [vmem:[#allocation2 + $0x148] sm:$0xff]
          %v5539 = vld [vmem:[#allocation2 + $0x150] sm:$0xff]
          %v5540 = vld [vmem:[#allocation2 + $0x158] sm:$0xff]
          %v5541 = vld [vmem:[#allocation2 + $0x160] sm:$0xff]
          %v5542 = vld [vmem:[#allocation2 + $0x168] sm:$0xff]
          %v5543 = vld [vmem:[#allocation2 + $0x170] sm:$0xff]
          %v5544 = vld [vmem:[#allocation2 + $0x178] sm:$0xff]
          %v5545 = vld [vmem:[#allocation2 + $0x180] sm:$0xff]
          %v5546 = vld [vmem:[#allocation2 + $0x188] sm:$0xff]
          %v5547 = vld [vmem:[#allocation2 + $0x190] sm:$0xff]
          %v5548 = vld [vmem:[#allocation2 + $0x198] sm:$0xff]
          %v5549 = vld [vmem:[#allocation2 + $0x1a0] sm:$0xff]
          %v5550 = vld [vmem:[#allocation2 + $0x1a8] sm:$0xff]
          %v5551 = vld [vmem:[#allocation2 + $0x1b0] sm:$0xff]
          %v5552 = vld [vmem:[#allocation2 + $0x1b8] sm:$0xff]
          %v5553 = vld [vmem:[#allocation2 + $0x1c0] sm:$0xff]
          %v5554 = vld [vmem:[#allocation2 + $0x1c8] sm:$0xff]
          %v5555 = vld [vmem:[#allocation2 + $0x1d0] sm:$0xff]
          %v5556 = vld [vmem:[#allocation2 + $0x1d8] sm:$0xff]
          %v5557 = vld [vmem:[#allocation2 + $0x1e0] sm:$0xff]
          %v5558 = vld [vmem:[#allocation2 + $0x1e8] sm:$0xff]
          %v5559 = vld [vmem:[#allocation2 + $0x1f0] sm:$0xff]
          %v5560 = vld [vmem:[#allocation2 + $0x1f8] sm:$0xff]
          %v5561 = vld [vmem:[#allocation2 + $0x200] sm:$0xff]
          %v5562 = vld [vmem:[#allocation2 + $0x208] sm:$0xff]
          %v5563 = vld [vmem:[#allocation2 + $0x210] sm:$0xff]
          %v5564 = vld [vmem:[#allocation2 + $0x218] sm:$0xff]
          %v5565 = vld [vmem:[#allocation2 + $0x220] sm:$0xff]
          %v5566 = vld [vmem:[#allocation2 + $0x228] sm:$0xff]
          %v5567 = vld [vmem:[#allocation2 + $0x230] sm:$0xff]
          %v5568 = vld [vmem:[#allocation2 + $0x238] sm:$0xff]
          %v5569 = vld [vmem:[#allocation2 + $0x240] sm:$0xff]
          %v5570 = vld [vmem:[#allocation2 + $0x248] sm:$0xff]
          %v5571 = vld [vmem:[#allocation2 + $0x250] sm:$0xff]
          %v5572 = vld [vmem:[#allocation2 + $0x258] sm:$0xff]
          %v5573 = vld [vmem:[#allocation2 + $0x260] sm:$0xff]
          %v5574 = vld [vmem:[#allocation2 + $0x268] sm:$0xff]
          %v5575 = vld [vmem:[#allocation2 + $0x270] sm:$0xff]
          %v5576 = vld [vmem:[#allocation2 + $0x278] sm:$0xff]
          %v5577 = vld [vmem:[#allocation2 + $0x280] sm:$0xff]
          %v5578 = vld [vmem:[#allocation2 + $0x288] sm:$0xff]
          %v5579 = vld [vmem:[#allocation2 + $0x290] sm:$0xff]
          %v5580 = vld [vmem:[#allocation2 + $0x298] sm:$0xff]
          %v5581 = vld [vmem:[#allocation2 + $0x2a0] sm:$0xff]
          %v5582 = vld [vmem:[#allocation2 + $0x2a8] sm:$0xff]
          %v5583 = vld [vmem:[#allocation2 + $0x2b0] sm:$0xff]
          %v5584 = vld [vmem:[#allocation2 + $0x2b8] sm:$0xff]
          %v5585 = vld [vmem:[#allocation2 + $0x2c0] sm:$0xff]
          %v5586 = vld [vmem:[#allocation2 + $0x2c8] sm:$0xff]
          %v5587 = vld [vmem:[#allocation2 + $0x2d0] sm:$0xff]
          %v5588 = vld [vmem:[#allocation2 + $0x2d8] sm:$0xff]
          %v5589 = vld [vmem:[#allocation2 + $0x2e0] sm:$0xff]
          %v5590 = vld [vmem:[#allocation2 + $0x2e8] sm:$0xff]
          %v5591 = vld [vmem:[#allocation2 + $0x2f0] sm:$0xff]
          %v5592 = vld [vmem:[#allocation2 + $0x2f8] sm:$0xff]
          %v5593 = vld [vmem:[#allocation2 + $0x300] sm:$0xff]
          %v5594 = vld [vmem:[#allocation2 + $0x308] sm:$0xff]
          %v5595 = vld [vmem:[#allocation2 + $0x310] sm:$0xff]
          %v5596 = vld [vmem:[#allocation2 + $0x318] sm:$0xff]
          %v5597 = vld [vmem:[#allocation2 + $0x320] sm:$0xff]
          %v5598 = vld [vmem:[#allocation2 + $0x328] sm:$0xff]
          %v5599 = vld [vmem:[#allocation2 + $0x330] sm:$0xff]
          %v5600 = vld [vmem:[#allocation2 + $0x338] sm:$0xff]
          %v5601 = vld [vmem:[#allocation2 + $0x340] sm:$0xff]
          %v5602 = vld [vmem:[#allocation2 + $0x348] sm:$0xff]
          %v5603 = vld [vmem:[#allocation2 + $0x350] sm:$0xff]
          %v5604 = vld [vmem:[#allocation2 + $0x358] sm:$0xff]
          %v5605 = vld [vmem:[#allocation2 + $0x360] sm:$0xff]
          %v5606 = vld [vmem:[#allocation2 + $0x368] sm:$0xff]
          %v5607 = vld [vmem:[#allocation2 + $0x370] sm:$0xff]
          %v5608 = vld [vmem:[#allocation2 + $0x378] sm:$0xff]
          %v5609 = vld [vmem:[#allocation2 + $0x380] sm:$0xff]
          %v5610 = vld [vmem:[#allocation2 + $0x388] sm:$0xff]
          %v5611 = vld [vmem:[#allocation2 + $0x390] sm:$0xff]
          %v5612 = vld [vmem:[#allocation2 + $0x398] sm:$0xff]
          %v5613 = vld [vmem:[#allocation2 + $0x3a0] sm:$0xff]
          %v5614 = vld [vmem:[#allocation2 + $0x3a8] sm:$0xff]
          %v5615 = vld [vmem:[#allocation2 + $0x3b0] sm:$0xff]
          %v5616 = vld [vmem:[#allocation2 + $0x3b8] sm:$0xff]
          %v5617 = vld [vmem:[#allocation2 + $0x3c0] sm:$0xff]
          %v5618 = vld [vmem:[#allocation2 + $0x3c8] sm:$0xff]
          %v5619 = vld [vmem:[#allocation2 + $0x3d0] sm:$0xff]
          %v5620 = vld [vmem:[#allocation2 + $0x3d8] sm:$0xff]
          %v5621 = vld [vmem:[#allocation2 + $0x3e0] sm:$0xff]
          %v5622 = vld [vmem:[#allocation2 + $0x3e8] sm:$0xff]
          %v5623 = vld [vmem:[#allocation2 + $0x3f0] sm:$0xff]
          %v5624 = vld [vmem:[#allocation2 + $0x3f8] sm:$0xff]
          %v5625 = vld [vmem:[#allocation2 + $0x400] sm:$0xff]
          %v5626 = vld [vmem:[#allocation2 + $0x408] sm:$0xff]
          %v5627 = vld [vmem:[#allocation2 + $0x410] sm:$0xff]
          %v5628 = vld [vmem:[#allocation2 + $0x418] sm:$0xff]
          %v5629 = vld [vmem:[#allocation2 + $0x420] sm:$0xff]
          %v5630 = vld [vmem:[#allocation2 + $0x428] sm:$0xff]
          %v5631 = vld [vmem:[#allocation2 + $0x430] sm:$0xff]
          %v5632 = vld [vmem:[#allocation2 + $0x438] sm:$0xff]
          %v5633 = vld [vmem:[#allocation2 + $0x440] sm:$0xff]
          %v5634 = vld [vmem:[#allocation2 + $0x448] sm:$0xff]
          %v5635 = vld [vmem:[#allocation2 + $0x450] sm:$0xff]
          %v5636 = vld [vmem:[#allocation2 + $0x458] sm:$0xff]
          %v5637 = vld [vmem:[#allocation2 + $0x460] sm:$0xff]
          %v5638 = vld [vmem:[#allocation2 + $0x468] sm:$0xff]
          %v5639 = vld [vmem:[#allocation2 + $0x470] sm:$0xff]
          %v5640 = vld [vmem:[#allocation2 + $0x478] sm:$0xff]
          %v5641 = vld [vmem:[#allocation2 + $0x480] sm:$0xff]
          %v5642 = vld [vmem:[#allocation2 + $0x488] sm:$0xff]
          %v5643 = vld [vmem:[#allocation2 + $0x490] sm:$0xff]
          %v5644 = vld [vmem:[#allocation2 + $0x498] sm:$0xff]
          %v5645 = vld [vmem:[#allocation2 + $0x4a0] sm:$0xff]
          %v5646 = vld [vmem:[#allocation2 + $0x4a8] sm:$0xff]
          %v5647 = vld [vmem:[#allocation2 + $0x4b0] sm:$0xff]
          %v5648 = vld [vmem:[#allocation2 + $0x4b8] sm:$0xff]
          %v5649 = vld [vmem:[#allocation2 + $0x4c0] sm:$0xff]
          %v5650 = vld [vmem:[#allocation2 + $0x4c8] sm:$0xff]
          %v5651 = vld [vmem:[#allocation2 + $0x4d0] sm:$0xff]
          %v5652 = vld [vmem:[#allocation2 + $0x4d8] sm:$0xff]
          %v5653 = vld [vmem:[#allocation2 + $0x4e0] sm:$0xff]
          %v5654 = vld [vmem:[#allocation2 + $0x4e8] sm:$0xff]
          %v5655 = vld [vmem:[#allocation2 + $0x4f0] sm:$0xff]
          %v5656 = vld [vmem:[#allocation2 + $0x4f8] sm:$0xff]
          %v5657 = vld [vmem:[#allocation2 + $0x500] sm:$0xff]
          %v5658 = vld [vmem:[#allocation2 + $0x508] sm:$0xff]
          %v5659 = vld [vmem:[#allocation2 + $0x510] sm:$0xff]
          %v5660 = vld [vmem:[#allocation2 + $0x518] sm:$0xff]
          %v5661 = vld [vmem:[#allocation2 + $0x520] sm:$0xff]
          %v5662 = vld [vmem:[#allocation2 + $0x528] sm:$0xff]
          %v5663 = vld [vmem:[#allocation2 + $0x530] sm:$0xff]
          %v5664 = vld [vmem:[#allocation2 + $0x538] sm:$0xff]
          %v5665 = vld [vmem:[#allocation2 + $0x540] sm:$0xff]
          %v5666 = vld [vmem:[#allocation2 + $0x548] sm:$0xff]
          %v5667 = vld [vmem:[#allocation2 + $0x550] sm:$0xff]
          %v5668 = vld [vmem:[#allocation2 + $0x558] sm:$0xff]
          %v5669 = vld [vmem:[#allocation2 + $0x560] sm:$0xff]
          %v5670 = vld [vmem:[#allocation2 + $0x568] sm:$0xff]
          %v5671 = vld [vmem:[#allocation2 + $0x570] sm:$0xff]
          %v5672 = vld [vmem:[#allocation2 + $0x578] sm:$0xff]
          %v5673 = vld [vmem:[#allocation2 + $0x580] sm:$0xff]
          %v5674 = vld [vmem:[#allocation2 + $0x588] sm:$0xff]
          %v5675 = vld [vmem:[#allocation2 + $0x590] sm:$0xff]
          %v5676 = vld [vmem:[#allocation2 + $0x598] sm:$0xff]
          %v5677 = vld [vmem:[#allocation2 + $0x5a0] sm:$0xff]
          %v5678 = vld [vmem:[#allocation2 + $0x5a8] sm:$0xff]
          %v5679 = vld [vmem:[#allocation2 + $0x5b0] sm:$0xff]
          %v5680 = vld [vmem:[#allocation2 + $0x5b8] sm:$0xff]
          %v5681 = vld [vmem:[#allocation2 + $0x5c0] sm:$0xff]
          %v5682 = vld [vmem:[#allocation2 + $0x5c8] sm:$0xff]
          %v5683 = vld [vmem:[#allocation2 + $0x5d0] sm:$0xff]
          %v5684 = vld [vmem:[#allocation2 + $0x5d8] sm:$0xff]
          %v5685 = vld [vmem:[#allocation2 + $0x5e0] sm:$0xff]
          %v5686 = vld [vmem:[#allocation2 + $0x5e8] sm:$0xff]
          %v5687 = vld [vmem:[#allocation2 + $0x5f0] sm:$0xff]
          %v5688 = vld [vmem:[#allocation2 + $0x5f8] sm:$0xff]
          %v5689 = vld [vmem:[#allocation2 + $0x600] sm:$0xff]
          %v5690 = vld [vmem:[#allocation2 + $0x608] sm:$0xff]
          %v5691 = vld [vmem:[#allocation2 + $0x610] sm:$0xff]
          %v5692 = vld [vmem:[#allocation2 + $0x618] sm:$0xff]
          %v5693 = vld [vmem:[#allocation2 + $0x620] sm:$0xff]
          %v5694 = vld [vmem:[#allocation2 + $0x628] sm:$0xff]
          %v5695 = vld [vmem:[#allocation2 + $0x630] sm:$0xff]
          %v5696 = vld [vmem:[#allocation2 + $0x638] sm:$0xff]
          %v5697 = vld [vmem:[#allocation2 + $0x640] sm:$0xff]
          %v5698 = vld [vmem:[#allocation2 + $0x648] sm:$0xff]
          %v5699 = vld [vmem:[#allocation2 + $0x650] sm:$0xff]
          %v5700 = vld [vmem:[#allocation2 + $0x658] sm:$0xff]
          %v5701 = vld [vmem:[#allocation2 + $0x660] sm:$0xff]
          %v5702 = vld [vmem:[#allocation2 + $0x668] sm:$0xff]
          %v5703 = vld [vmem:[#allocation2 + $0x670] sm:$0xff]
          %v5704 = vld [vmem:[#allocation2 + $0x678] sm:$0xff]
          %v5705 = vld [vmem:[#allocation2 + $0x680] sm:$0xff]
          %v5706 = vld [vmem:[#allocation2 + $0x688] sm:$0xff]
          %v5707 = vld [vmem:[#allocation2 + $0x690] sm:$0xff]
          %v5708 = vld [vmem:[#allocation2 + $0x698] sm:$0xff]
          %v5709 = vld [vmem:[#allocation2 + $0x6a0] sm:$0xff]
          %v5710 = vld [vmem:[#allocation2 + $0x6a8] sm:$0xff]
          %v5711 = vld [vmem:[#allocation2 + $0x6b0] sm:$0xff]
          %v5712 = vld [vmem:[#allocation2 + $0x6b8] sm:$0xff]
          %v5713 = vld [vmem:[#allocation2 + $0x6c0] sm:$0xff]
          %v5714 = vld [vmem:[#allocation2 + $0x6c8] sm:$0xff]
          %v5715 = vld [vmem:[#allocation2 + $0x6d0] sm:$0xff]
          %v5716 = vld [vmem:[#allocation2 + $0x6d8] sm:$0xff]
          %v5717 = vld [vmem:[#allocation2 + $0x6e0] sm:$0xff]
          %v5718 = vld [vmem:[#allocation2 + $0x6e8] sm:$0xff]
          %v5719 = vld [vmem:[#allocation2 + $0x6f0] sm:$0xff]
          %v5720 = vld [vmem:[#allocation2 + $0x6f8] sm:$0xff]
          %v5721 = vld [vmem:[#allocation2 + $0x700] sm:$0xff]
          %v5722 = vld [vmem:[#allocation2 + $0x708] sm:$0xff]
          %v5723 = vld [vmem:[#allocation2 + $0x710] sm:$0xff]
          %v5724 = vld [vmem:[#allocation2 + $0x718] sm:$0xff]
          %v5725 = vld [vmem:[#allocation2 + $0x720] sm:$0xff]
          %v5726 = vld [vmem:[#allocation2 + $0x728] sm:$0xff]
          %v5727 = vld [vmem:[#allocation2 + $0x730] sm:$0xff]
          %v5728 = vld [vmem:[#allocation2 + $0x738] sm:$0xff]
          %v5729 = vld [vmem:[#allocation2 + $0x740] sm:$0xff]
          %v5730 = vld [vmem:[#allocation2 + $0x748] sm:$0xff]
          %v5731 = vld [vmem:[#allocation2 + $0x750] sm:$0xff]
          %v5732 = vld [vmem:[#allocation2 + $0x758] sm:$0xff]
          %v5733 = vld [vmem:[#allocation2 + $0x760] sm:$0xff]
          %v5734 = vld [vmem:[#allocation2 + $0x768] sm:$0xff]
          %v5735 = vld [vmem:[#allocation2 + $0x770] sm:$0xff]
          %v5736 = vld [vmem:[#allocation2 + $0x778] sm:$0xff]
          %v5737 = vld [vmem:[#allocation2 + $0x780] sm:$0xff]
          %v5738 = vld [vmem:[#allocation2 + $0x788] sm:$0xff]
          %v5739 = vld [vmem:[#allocation2 + $0x790] sm:$0xff]
          %v5740 = vld [vmem:[#allocation2 + $0x798] sm:$0xff]
          %v5741 = vld [vmem:[#allocation2 + $0x7a0] sm:$0xff]
          %v5742 = vld [vmem:[#allocation2 + $0x7a8] sm:$0xff]
          %v5743 = vld [vmem:[#allocation2 + $0x7b0] sm:$0xff]
          %v5744 = vld [vmem:[#allocation2 + $0x7b8] sm:$0xff]
          %v5745 = vld [vmem:[#allocation2 + $0x7c0] sm:$0xff]
          %v5746 = vld [vmem:[#allocation2 + $0x7c8] sm:$0xff]
          %v5747 = vld [vmem:[#allocation2 + $0x7d0] sm:$0xff]
          %v5748 = vld [vmem:[#allocation2 + $0x7d8] sm:$0xff]
          %v5749 = vld [vmem:[#allocation2 + $0x7e0] sm:$0xff]
          %v5750 = vld [vmem:[#allocation2 + $0x7e8] sm:$0xff]
          %v5751 = vld [vmem:[#allocation2 + $0x7f0] sm:$0xff]
          %v5752 = vld [vmem:[#allocation2 + $0x7f8] sm:$0xff]
          %v5753 = vpack.c.bf16 %v5498, %v5497
          %v5754 = vpack.c.bf16 %v5500, %v5499
          %v5755 = vpack.c.bf16 %v5502, %v5501
          %v5756 = vpack.c.bf16 %v5504, %v5503
          %v5757 = vpack.c.bf16 %v5506, %v5505
          %v5758 = vpack.c.bf16 %v5508, %v5507
          %v5759 = vpack.c.bf16 %v5510, %v5509
          %v5760 = vpack.c.bf16 %v5512, %v5511
          %v5761 = vpack.c.bf16 %v5514, %v5513
          %v5762 = vpack.c.bf16 %v5516, %v5515
          %v5763 = vpack.c.bf16 %v5518, %v5517
          %v5764 = vpack.c.bf16 %v5520, %v5519
          %v5765 = vpack.c.bf16 %v5522, %v5521
          %v5766 = vpack.c.bf16 %v5524, %v5523
          %v5767 = vpack.c.bf16 %v5526, %v5525
          %v5768 = vpack.c.bf16 %v5528, %v5527
          %v5769 = vpack.c.bf16 %v5530, %v5529
          %v5770 = vpack.c.bf16 %v5532, %v5531
          %v5771 = vpack.c.bf16 %v5534, %v5533
          %v5772 = vpack.c.bf16 %v5536, %v5535
          %v5773 = vpack.c.bf16 %v5538, %v5537
          %v5774 = vpack.c.bf16 %v5540, %v5539
          %v5775 = vpack.c.bf16 %v5542, %v5541
          %v5776 = vpack.c.bf16 %v5544, %v5543
          %v5777 = vpack.c.bf16 %v5546, %v5545
          %v5778 = vpack.c.bf16 %v5548, %v5547
          %v5779 = vpack.c.bf16 %v5550, %v5549
          %v5780 = vpack.c.bf16 %v5552, %v5551
          %v5781 = vpack.c.bf16 %v5554, %v5553
          %v5782 = vpack.c.bf16 %v5556, %v5555
          %v5783 = vpack.c.bf16 %v5558, %v5557
          %v5784 = vpack.c.bf16 %v5560, %v5559
          %v5785 = vpack.c.bf16 %v5562, %v5561
          %v5786 = vpack.c.bf16 %v5564, %v5563
          %v5787 = vpack.c.bf16 %v5566, %v5565
          %v5788 = vpack.c.bf16 %v5568, %v5567
          %v5789 = vpack.c.bf16 %v5570, %v5569
          %v5790 = vpack.c.bf16 %v5572, %v5571
          %v5791 = vpack.c.bf16 %v5574, %v5573
          %v5792 = vpack.c.bf16 %v5576, %v5575
          %v5793 = vpack.c.bf16 %v5578, %v5577
          %v5794 = vpack.c.bf16 %v5580, %v5579
          %v5795 = vpack.c.bf16 %v5582, %v5581
          %v5796 = vpack.c.bf16 %v5584, %v5583
          %v5797 = vpack.c.bf16 %v5586, %v5585
          %v5798 = vpack.c.bf16 %v5588, %v5587
          %v5799 = vpack.c.bf16 %v5590, %v5589
          %v5800 = vpack.c.bf16 %v5592, %v5591
          %v5801 = vpack.c.bf16 %v5594, %v5593
          %v5802 = vpack.c.bf16 %v5596, %v5595
          %v5803 = vpack.c.bf16 %v5598, %v5597
          %v5804 = vpack.c.bf16 %v5600, %v5599
          %v5805 = vpack.c.bf16 %v5602, %v5601
          %v5806 = vpack.c.bf16 %v5604, %v5603
          %v5807 = vpack.c.bf16 %v5606, %v5605
          %v5808 = vpack.c.bf16 %v5608, %v5607
          %v5809 = vpack.c.bf16 %v5610, %v5609
          %v5810 = vpack.c.bf16 %v5612, %v5611
          %v5811 = vpack.c.bf16 %v5614, %v5613
          %v5812 = vpack.c.bf16 %v5616, %v5615
          %v5813 = vpack.c.bf16 %v5618, %v5617
          %v5814 = vpack.c.bf16 %v5620, %v5619
          %v5815 = vpack.c.bf16 %v5622, %v5621
          %v5816 = vpack.c.bf16 %v5624, %v5623
          %v5817 = vpack.c.bf16 %v5626, %v5625
          %v5818 = vpack.c.bf16 %v5628, %v5627
          %v5819 = vpack.c.bf16 %v5630, %v5629
          %v5820 = vpack.c.bf16 %v5632, %v5631
          %v5821 = vpack.c.bf16 %v5634, %v5633
          %v5822 = vpack.c.bf16 %v5636, %v5635
          %v5823 = vpack.c.bf16 %v5638, %v5637
          %v5824 = vpack.c.bf16 %v5640, %v5639
          %v5825 = vpack.c.bf16 %v5642, %v5641
          %v5826 = vpack.c.bf16 %v5644, %v5643
          %v5827 = vpack.c.bf16 %v5646, %v5645
          %v5828 = vpack.c.bf16 %v5648, %v5647
          %v5829 = vpack.c.bf16 %v5650, %v5649
          %v5830 = vpack.c.bf16 %v5652, %v5651
          %v5831 = vpack.c.bf16 %v5654, %v5653
          %v5832 = vpack.c.bf16 %v5656, %v5655
          %v5833 = vpack.c.bf16 %v5658, %v5657
          %v5834 = vpack.c.bf16 %v5660, %v5659
          %v5835 = vpack.c.bf16 %v5662, %v5661
          %v5836 = vpack.c.bf16 %v5664, %v5663
          %v5837 = vpack.c.bf16 %v5666, %v5665
          %v5838 = vpack.c.bf16 %v5668, %v5667
          %v5839 = vpack.c.bf16 %v5670, %v5669
          %v5840 = vpack.c.bf16 %v5672, %v5671
          %v5841 = vpack.c.bf16 %v5674, %v5673
          %v5842 = vpack.c.bf16 %v5676, %v5675
          %v5843 = vpack.c.bf16 %v5678, %v5677
          %v5844 = vpack.c.bf16 %v5680, %v5679
          %v5845 = vpack.c.bf16 %v5682, %v5681
          %v5846 = vpack.c.bf16 %v5684, %v5683
          %v5847 = vpack.c.bf16 %v5686, %v5685
          %v5848 = vpack.c.bf16 %v5688, %v5687
          %v5849 = vpack.c.bf16 %v5690, %v5689
          %v5850 = vpack.c.bf16 %v5692, %v5691
          %v5851 = vpack.c.bf16 %v5694, %v5693
          %v5852 = vpack.c.bf16 %v5696, %v5695
          %v5853 = vpack.c.bf16 %v5698, %v5697
          %v5854 = vpack.c.bf16 %v5700, %v5699
          %v5855 = vpack.c.bf16 %v5702, %v5701
          %v5856 = vpack.c.bf16 %v5704, %v5703
          %v5857 = vpack.c.bf16 %v5706, %v5705
          %v5858 = vpack.c.bf16 %v5708, %v5707
          %v5859 = vpack.c.bf16 %v5710, %v5709
          %v5860 = vpack.c.bf16 %v5712, %v5711
          %v5861 = vpack.c.bf16 %v5714, %v5713
          %v5862 = vpack.c.bf16 %v5716, %v5715
          %v5863 = vpack.c.bf16 %v5718, %v5717
          %v5864 = vpack.c.bf16 %v5720, %v5719
          %v5865 = vpack.c.bf16 %v5722, %v5721
          %v5866 = vpack.c.bf16 %v5724, %v5723
          %v5867 = vpack.c.bf16 %v5726, %v5725
          %v5868 = vpack.c.bf16 %v5728, %v5727
          %v5869 = vpack.c.bf16 %v5730, %v5729
          %v5870 = vpack.c.bf16 %v5732, %v5731
          %v5871 = vpack.c.bf16 %v5734, %v5733
          %v5872 = vpack.c.bf16 %v5736, %v5735
          %v5873 = vpack.c.bf16 %v5738, %v5737
          %v5874 = vpack.c.bf16 %v5740, %v5739
          %v5875 = vpack.c.bf16 %v5742, %v5741
          %v5876 = vpack.c.bf16 %v5744, %v5743
          %v5877 = vpack.c.bf16 %v5746, %v5745
          %v5878 = vpack.c.bf16 %v5748, %v5747
          %v5879 = vpack.c.bf16 %v5750, %v5749
          %v5880 = vpack.c.bf16 %v5752, %v5751
          %5881 = vst [vmem:[%s219] sm:$0xff] %v5753
          %5882 = vst [vmem:[%s219 + $0x8] sm:$0xff] %v5754
          %5883 = vst [vmem:[%s219 + $0x10] sm:$0xff] %v5755
          %5884 = vst [vmem:[%s219 + $0x18] sm:$0xff] %v5756
          %5885 = vst [vmem:[%s219 + $0x20] sm:$0xff] %v5757
          %5886 = vst [vmem:[%s219 + $0x28] sm:$0xff] %v5758
          %5887 = vst [vmem:[%s219 + $0x30] sm:$0xff] %v5759
          %5888 = vst [vmem:[%s219 + $0x38] sm:$0xff] %v5760
          %5889 = vst [vmem:[%s219 + $0x40] sm:$0xff] %v5761
          %5890 = vst [vmem:[%s219 + $0x48] sm:$0xff] %v5762
          %5891 = vst [vmem:[%s219 + $0x50] sm:$0xff] %v5763
          %5892 = vst [vmem:[%s219 + $0x58] sm:$0xff] %v5764
          %5893 = vst [vmem:[%s219 + $0x60] sm:$0xff] %v5765
          %5894 = vst [vmem:[%s219 + $0x68] sm:$0xff] %v5766
          %5895 = vst [vmem:[%s219 + $0x70] sm:$0xff] %v5767
          %5896 = vst [vmem:[%s219 + $0x78] sm:$0xff] %v5768
          %5897 = vst [vmem:[%s219 + $0x80] sm:$0xff] %v5769
          %5898 = vst [vmem:[%s219 + $0x88] sm:$0xff] %v5770
          %5899 = vst [vmem:[%s219 + $0x90] sm:$0xff] %v5771
          %5900 = vst [vmem:[%s219 + $0x98] sm:$0xff] %v5772
          %5901 = vst [vmem:[%s219 + $0xa0] sm:$0xff] %v5773
          %5902 = vst [vmem:[%s219 + $0xa8] sm:$0xff] %v5774
          %5903 = vst [vmem:[%s219 + $0xb0] sm:$0xff] %v5775
          %5904 = vst [vmem:[%s219 + $0xb8] sm:$0xff] %v5776
          %5905 = vst [vmem:[%s219 + $0xc0] sm:$0xff] %v5777
          %5906 = vst [vmem:[%s219 + $0xc8] sm:$0xff] %v5778
          %5907 = vst [vmem:[%s219 + $0xd0] sm:$0xff] %v5779
          %5908 = vst [vmem:[%s219 + $0xd8] sm:$0xff] %v5780
          %5909 = vst [vmem:[%s219 + $0xe0] sm:$0xff] %v5781
          %5910 = vst [vmem:[%s219 + $0xe8] sm:$0xff] %v5782
          %5911 = vst [vmem:[%s219 + $0xf0] sm:$0xff] %v5783
          %5912 = vst [vmem:[%s219 + $0xf8] sm:$0xff] %v5784
          %5913 = vst [vmem:[%s219 + $0x100] sm:$0xff] %v5785
          %5914 = vst [vmem:[%s219 + $0x108] sm:$0xff] %v5786
          %5915 = vst [vmem:[%s219 + $0x110] sm:$0xff] %v5787
          %5916 = vst [vmem:[%s219 + $0x118] sm:$0xff] %v5788
          %5917 = vst [vmem:[%s219 + $0x120] sm:$0xff] %v5789
          %5918 = vst [vmem:[%s219 + $0x128] sm:$0xff] %v5790
          %5919 = vst [vmem:[%s219 + $0x130] sm:$0xff] %v5791
          %5920 = vst [vmem:[%s219 + $0x138] sm:$0xff] %v5792
          %5921 = vst [vmem:[%s219 + $0x140] sm:$0xff] %v5793
          %5922 = vst [vmem:[%s219 + $0x148] sm:$0xff] %v5794
          %5923 = vst [vmem:[%s219 + $0x150] sm:$0xff] %v5795
          %5924 = vst [vmem:[%s219 + $0x158] sm:$0xff] %v5796
          %5925 = vst [vmem:[%s219 + $0x160] sm:$0xff] %v5797
          %5926 = vst [vmem:[%s219 + $0x168] sm:$0xff] %v5798
          %5927 = vst [vmem:[%s219 + $0x170] sm:$0xff] %v5799
          %5928 = vst [vmem:[%s219 + $0x178] sm:$0xff] %v5800
          %5929 = vst [vmem:[%s219 + $0x180] sm:$0xff] %v5801
          %5930 = vst [vmem:[%s219 + $0x188] sm:$0xff] %v5802
          %5931 = vst [vmem:[%s219 + $0x190] sm:$0xff] %v5803
          %5932 = vst [vmem:[%s219 + $0x198] sm:$0xff] %v5804
          %5933 = vst [vmem:[%s219 + $0x1a0] sm:$0xff] %v5805
          %5934 = vst [vmem:[%s219 + $0x1a8] sm:$0xff] %v5806
          %5935 = vst [vmem:[%s219 + $0x1b0] sm:$0xff] %v5807
          %5936 = vst [vmem:[%s219 + $0x1b8] sm:$0xff] %v5808
          %5937 = vst [vmem:[%s219 + $0x1c0] sm:$0xff] %v5809
          %5938 = vst [vmem:[%s219 + $0x1c8] sm:$0xff] %v5810
          %5939 = vst [vmem:[%s219 + $0x1d0] sm:$0xff] %v5811
          %5940 = vst [vmem:[%s219 + $0x1d8] sm:$0xff] %v5812
          %5941 = vst [vmem:[%s219 + $0x1e0] sm:$0xff] %v5813
          %5942 = vst [vmem:[%s219 + $0x1e8] sm:$0xff] %v5814
          %5943 = vst [vmem:[%s219 + $0x1f0] sm:$0xff] %v5815
          %5944 = vst [vmem:[%s219 + $0x1f8] sm:$0xff] %v5816
          %5945 = vst [vmem:[%s219 + $0x200] sm:$0xff] %v5817
          %5946 = vst [vmem:[%s219 + $0x208] sm:$0xff] %v5818
          %5947 = vst [vmem:[%s219 + $0x210] sm:$0xff] %v5819
          %5948 = vst [vmem:[%s219 + $0x218] sm:$0xff] %v5820
          %5949 = vst [vmem:[%s219 + $0x220] sm:$0xff] %v5821
          %5950 = vst [vmem:[%s219 + $0x228] sm:$0xff] %v5822
          %5951 = vst [vmem:[%s219 + $0x230] sm:$0xff] %v5823
          %5952 = vst [vmem:[%s219 + $0x238] sm:$0xff] %v5824
          %5953 = vst [vmem:[%s219 + $0x240] sm:$0xff] %v5825
          %5954 = vst [vmem:[%s219 + $0x248] sm:$0xff] %v5826
          %5955 = vst [vmem:[%s219 + $0x250] sm:$0xff] %v5827
          %5956 = vst [vmem:[%s219 + $0x258] sm:$0xff] %v5828
          %5957 = vst [vmem:[%s219 + $0x260] sm:$0xff] %v5829
          %5958 = vst [vmem:[%s219 + $0x268] sm:$0xff] %v5830
          %5959 = vst [vmem:[%s219 + $0x270] sm:$0xff] %v5831
          %5960 = vst [vmem:[%s219 + $0x278] sm:$0xff] %v5832
          %5961 = vst [vmem:[%s219 + $0x280] sm:$0xff] %v5833
          %5962 = vst [vmem:[%s219 + $0x288] sm:$0xff] %v5834
          %5963 = vst [vmem:[%s219 + $0x290] sm:$0xff] %v5835
          %5964 = vst [vmem:[%s219 + $0x298] sm:$0xff] %v5836
          %5965 = vst [vmem:[%s219 + $0x2a0] sm:$0xff] %v5837
          %5966 = vst [vmem:[%s219 + $0x2a8] sm:$0xff] %v5838
          %5967 = vst [vmem:[%s219 + $0x2b0] sm:$0xff] %v5839
          %5968 = vst [vmem:[%s219 + $0x2b8] sm:$0xff] %v5840
          %5969 = vst [vmem:[%s219 + $0x2c0] sm:$0xff] %v5841
          %5970 = vst [vmem:[%s219 + $0x2c8] sm:$0xff] %v5842
          %5971 = vst [vmem:[%s219 + $0x2d0] sm:$0xff] %v5843
          %5972 = vst [vmem:[%s219 + $0x2d8] sm:$0xff] %v5844
          %5973 = vst [vmem:[%s219 + $0x2e0] sm:$0xff] %v5845
          %5974 = vst [vmem:[%s219 + $0x2e8] sm:$0xff] %v5846
          %5975 = vst [vmem:[%s219 + $0x2f0] sm:$0xff] %v5847
          %5976 = vst [vmem:[%s219 + $0x2f8] sm:$0xff] %v5848
          %5977 = vst [vmem:[%s219 + $0x300] sm:$0xff] %v5849
          %5978 = vst [vmem:[%s219 + $0x308] sm:$0xff] %v5850
          %5979 = vst [vmem:[%s219 + $0x310] sm:$0xff] %v5851
          %5980 = vst [vmem:[%s219 + $0x318] sm:$0xff] %v5852
          %5981 = vst [vmem:[%s219 + $0x320] sm:$0xff] %v5853
          %5982 = vst [vmem:[%s219 + $0x328] sm:$0xff] %v5854
          %5983 = vst [vmem:[%s219 + $0x330] sm:$0xff] %v5855
          %5984 = vst [vmem:[%s219 + $0x338] sm:$0xff] %v5856
          %5985 = vst [vmem:[%s219 + $0x340] sm:$0xff] %v5857
          %5986 = vst [vmem:[%s219 + $0x348] sm:$0xff] %v5858
          %5987 = vst [vmem:[%s219 + $0x350] sm:$0xff] %v5859
          %5988 = vst [vmem:[%s219 + $0x358] sm:$0xff] %v5860
          %5989 = vst [vmem:[%s219 + $0x360] sm:$0xff] %v5861
          %5990 = vst [vmem:[%s219 + $0x368] sm:$0xff] %v5862
          %5991 = vst [vmem:[%s219 + $0x370] sm:$0xff] %v5863
          %5992 = vst [vmem:[%s219 + $0x378] sm:$0xff] %v5864
          %5993 = vst [vmem:[%s219 + $0x380] sm:$0xff] %v5865
          %5994 = vst [vmem:[%s219 + $0x388] sm:$0xff] %v5866
          %5995 = vst [vmem:[%s219 + $0x390] sm:$0xff] %v5867
          %5996 = vst [vmem:[%s219 + $0x398] sm:$0xff] %v5868
          %5997 = vst [vmem:[%s219 + $0x3a0] sm:$0xff] %v5869
          %5998 = vst [vmem:[%s219 + $0x3a8] sm:$0xff] %v5870
          %5999 = vst [vmem:[%s219 + $0x3b0] sm:$0xff] %v5871
          %6000 = vst [vmem:[%s219 + $0x3b8] sm:$0xff] %v5872
          %6001 = vst [vmem:[%s219 + $0x3c0] sm:$0xff] %v5873
          %6002 = vst [vmem:[%s219 + $0x3c8] sm:$0xff] %v5874
          %6003 = vst [vmem:[%s219 + $0x3d0] sm:$0xff] %v5875
          %6004 = vst [vmem:[%s219 + $0x3d8] sm:$0xff] %v5876
          %6005 = vst [vmem:[%s219 + $0x3e0] sm:$0xff] %v5877
          %6006 = vst [vmem:[%s219 + $0x3e8] sm:$0xff] %v5878
          %6007 = vst [vmem:[%s219 + $0x3f0] sm:$0xff] %v5879
          %6008 = vst [vmem:[%s219 + $0x3f8] sm:$0xff] %v5880
        $region44: #{tpu_custom_call.1} parent=27 // pred_fallthru
          _
        %s6009 = sand.u32 %s105, 1
        %s6010 = scalar_lea.sflag [#allocation5], %s6009
        %s6011 = sand.u32 %s105, 1
        %s6012 = smul.addr %s6011, 1024
        %s6013 = scalar_lea.vmem [#allocation8], %s6012
        // Predicated region
        $region45: #{tpu_custom_call.1} parent=27 // pred_check
          %p6014 = pneg %p115
        $region46: #{tpu_custom_call.1} parent=27 // pred_check_branch
          %6016 = sbr.rel (%p6014) target = $region48
        $region47: #{tpu_custom_call.1} parent=27 // pred_region
          %s6017 = smul.u32 64, %s25
          %s6018 = smul.u32 4, %s26
          %6020 = vsyncadd %s6010, 0
          %s6021 = smul.addr %s6017, 8
          %s6022 = sadd.s32 %s6018, %s6021
          %s6023 = smul.addr %s6022, 4
          %s6024 = scalar_lea.hbm %s2, %s6023
          %s6025 = sshll.u32 %s6013, 4
          %s6026 = int_to_ptr.vmem [resolvable:$true] %s6025
          %s6027 = sshll.u32 %s6024, 4
          %s6028 = int_to_ptr.hbm [resolvable:$true] %s6027
          %6033 = dma.vmem_to_hbm [thread:$0]  %s6026, 16384, %s6028, %s6010, 256, 512, 16
        $region48: #{tpu_custom_call.1} parent=27 // pred_fallthru
          _
      $region28: #{tpu_custom_call.1} parent=5 // pred_fallthru
        _
      %p6034 = scmp.le.s32.totalorder 2, %s15
      // Predicated region
      $region49: #{tpu_custom_call.1} parent=5 // pred_check
        %p6035 = pneg %p6034
      $region50: #{tpu_custom_call.1} parent=5 // pred_check_branch
        %6037 = sbr.rel (%p6035) target = $region52
      $region51: #{tpu_custom_call.1} parent=5 // pred_region
        %s6038 = ssub.s32 %s15, 2
        // Predicated region
        $region53: #{tpu_custom_call.1} parent=51 // pred_check
          %p6039 = pneg %p121
        $region54: #{tpu_custom_call.1} parent=51 // pred_check_branch
          %6041 = sbr.rel (%p6039) target = $region56
        $region55: #{tpu_custom_call.1} parent=51 // pred_region
          %s6042 = sand.u32 %s106, 1
          %s6043 = scalar_lea.sflag [#allocation5], %s6042
          %s6044 = sand.u32 %s106, 1
          %s6045 = smul.addr %s6044, 1024
          %s6046 = scalar_lea.vmem [#allocation8], %s6045
          %6048 = dma.done %s6043, 16384
        $region56: #{tpu_custom_call.1} parent=51 // pred_fallthru
          _
      $region52: #{tpu_custom_call.1} parent=5 // pred_fallthru
        _
    $region6: #{tpu_custom_call.1} parent=1 // loop_footer
      %s19 = sadd.s32 1, %s15
    $region7: #{tpu_custom_call.1} parent=1 // loop_footer_branch
      %14 = sbr.rel target = $region3
    $region8: #{tpu_custom_call.1} parent=1 // loop_exit
      _
    %6049 = vsyncpa [#allocation4], 1
    %s6050 = scalar_lea.sflag [#allocation4], 1
    %6051 = vsyncpa %s6050, 1
    %6052 = vsyncpa [#allocation7], 1
    %s6053 = scalar_lea.sflag [#allocation7], 1
    %6054 = vsyncpa %s6053, 1
    %6055 = vsyncpa [#allocation5], 1
    %s6056 = scalar_lea.sflag [#allocation5], 1
    %6057 = vsyncpa %s6056, 1

</llo_original>
